<compile_context>
chip_gen: v7x
topology: tpu7x:2x2x1
jax: 0.10.0
libtpu: 0.0.40
codegen_flags: <defaults>
</compile_context>

<pallas_src>
import functools

import jax
import jax.numpy as jnp
from jax.experimental import pallas as pl
from jax.experimental.pallas import tpu as pltpu

_PACK = 128  # lane-dense packing width for the per-sample output slab


def _sigmoid(z):
    # exp goes to the EUP; approx reciprocal (vrcp) keeps the divide off the VALU.
    return pl.reciprocal(1.0 + jnp.exp(-z), approx=True)


# ----------------------------------------------------------------------------
# Fused Pallas kernel: 3x Fcn encoder + fusion MLP + CE losses + penalties
# ----------------------------------------------------------------------------
def domfn_kernel(
    # activations / labels
    xt_ref, xv_ref, xa_ref, onehot_ref,
    # text encoder params
    tw1, tb1, tw2, tb2, tw3, tb3, tw4, tb4,
    # vision encoder params
    vw1, vb1, vw2, vb2, vw3, vb3, vw4, vb4,
    # audio encoder params
    aw1, ab1, aw2, ab2, aw3, ab3, aw4, ab4,
    # multi (fusion) encoder params
    mw1, mb1, mw2, mb2,
    # outputs
    packed_ref,   # (B, 128)  f32: [t_logit | v_logit | a_logit | m_logit | t_pen | v_pen | a_pen | 0...]
    loss_ref,     # (4, 128)  f32: row i broadcast of [text, vision, audio, multi] CE loss
    *, fusion):
    onehot = onehot_ref[...]
    L = onehot.shape[1]

    def dense(x_bf16, w_ref, b_ref):
        # bf16 x bf16 -> f32 accumulation on the MXU
        return jnp.dot(x_bf16, w_ref[...], preferred_element_type=jnp.float32) + b_ref[...]

    def encoder(x_ref, w1, b1, w2, b2, w3, b3, w4, b4):
        h = jnp.maximum(dense(x_ref[...], w1, b1), 0.0)
        h = jnp.maximum(dense(h.astype(jnp.bfloat16), w2, b2), 0.0)
        feat = jnp.maximum(dense(h.astype(jnp.bfloat16), w3, b3), 0.0)
        z = dense(feat.astype(jnp.bfloat16), w4, b4)
        return feat, _sigmoid(z)

    def ce_loss(logit):
        # PyTorch nn.CrossEntropyLoss applied to the sigmoid outputs:
        # mean_i( logsumexp(logit_i) - logit_i[y_i] )
        m = jnp.max(logit, axis=1, keepdims=True)
        lse = m + jnp.log(jnp.sum(jnp.exp(logit - m), axis=1, keepdims=True))
        picked = jnp.sum(logit * onehot, axis=1, keepdims=True)
        return jnp.mean(lse - picked)

    t_feat, t_logit = encoder(xt_ref, tw1, tb1, tw2, tb2, tw3, tb3, tw4, tb4)
    v_feat, v_logit = encoder(xv_ref, vw1, vb1, vw2, vb2, vw3, vb3, vw4, vb4)
    a_feat, a_logit = encoder(xa_ref, aw1, ab1, aw2, ab2, aw3, ab3, aw4, ab4)

    # Fusion MLP. For 'concat' we avoid an in-kernel lane concatenation by
    # splitting the first matmul along K (block matmul, mathematically equal).
    F = t_feat.shape[1]
    if fusion == "concat":
        h = (jnp.dot(t_feat.astype(jnp.bfloat16), mw1[0:F, :],
                     preferred_element_type=jnp.float32)
             + jnp.dot(v_feat.astype(jnp.bfloat16), mw1[F:2 * F, :],
                       preferred_element_type=jnp.float32)
             + jnp.dot(a_feat.astype(jnp.bfloat16), mw1[2 * F:3 * F, :],
                       preferred_element_type=jnp.float32)
             + mb1[...])
    elif fusion == "mean":
        mf = ((t_feat + v_feat + a_feat) * (1.0 / 3.0)).astype(jnp.bfloat16)
        h = jnp.dot(mf, mw1[...], preferred_element_type=jnp.float32) + mb1[...]
    else:  # "max"
        mf = jnp.maximum(jnp.maximum(t_feat, v_feat), a_feat).astype(jnp.bfloat16)
        h = jnp.dot(mf, mw1[...], preferred_element_type=jnp.float32) + mb1[...]
    h = jnp.maximum(h, 0.0)
    z = jnp.dot(h.astype(jnp.bfloat16), mw2[...], preferred_element_type=jnp.float32) + mb2[...]
    m_logit = _sigmoid(z)

    # Divergence penalties, computed directly from logits already in vregs.
    avg = (t_logit + v_logit + a_logit) * (1.0 / 3.0)
    t_pen = jnp.max((t_logit - avg) ** 2, axis=1, keepdims=True)
    v_pen = jnp.max((v_logit - avg) ** 2, axis=1, keepdims=True)
    a_pen = jnp.max((a_logit - avg) ** 2, axis=1, keepdims=True)

    # Pack all per-sample results into one lane-dense (B, 128) slab.
    packed_ref[...] = jnp.zeros_like(packed_ref)
    packed_ref[:, 0 * L:1 * L] = t_logit
    packed_ref[:, 1 * L:2 * L] = v_logit
    packed_ref[:, 2 * L:3 * L] = a_logit
    packed_ref[:, 3 * L:4 * L] = m_logit
    packed_ref[:, 4 * L + 0:4 * L + 1] = t_pen
    packed_ref[:, 4 * L + 1:4 * L + 2] = v_pen
    packed_ref[:, 4 * L + 2:4 * L + 3] = a_pen

    # Scalar CE losses, each broadcast across one lane-dense row of (4, 128).
    ones_row = jnp.ones((1, loss_ref.shape[1]), jnp.float32)
    loss_ref[0:1, :] = ce_loss(t_logit) * ones_row
    loss_ref[1:2, :] = ce_loss(v_logit) * ones_row
    loss_ref[2:3, :] = ce_loss(a_logit) * ones_row
    loss_ref[3:4, :] = ce_loss(m_logit) * ones_row


# ----------------------------------------------------------------------------
# pallas_call wrapper (whole model fits in VMEM at these sizes; grid=(1,))
# ----------------------------------------------------------------------------
def _full_specs(arrays):
    return [pl.BlockSpec(a.shape, lambda i: (0, 0)) for a in arrays]


def domfn_pallas(params, text_embeds, vision_embeds, audio_embeds, onehot, *, fusion):
    B = text_embeds.shape[0]
    L = onehot.shape[1]
    assert 4 * L + 3 <= _PACK, "num_labels too large for packed output slab"

    flat_params = (params["text"] + params["vision"] + params["audio"] + params["multi"])
    args = (text_embeds.astype(jnp.bfloat16),
            vision_embeds.astype(jnp.bfloat16),
            audio_embeds.astype(jnp.bfloat16),
            onehot) + flat_params

    out_shape = (jax.ShapeDtypeStruct((B, _PACK), jnp.float32),
                 jax.ShapeDtypeStruct((4, _PACK), jnp.float32))

    # TODO(synk): if B ever grows to hundreds+, add a batch grid axis
    # (grid=(cdiv(B, TB),), weights resident via index_map -> block 0) and mark
    # it "parallel" to use v7x's second TensorCore and stay under 64 MiB VMEM.
    packed, losses = pl.pallas_call(
        functools.partial(domfn_kernel, fusion=fusion),
        grid=(1,),
        in_specs=_full_specs(args),
        out_specs=tuple(pl.BlockSpec(s.shape, lambda i: (0, 0)) for s in out_shape),
        out_shape=out_shape,
        compiler_params=pltpu.CompilerParams(dimension_semantics=("arbitrary",)),
    )(*args)
    return packed, losses


# ----------------------------------------------------------------------------
# Parameter construction (deterministic, PyTorch-Linear-like uniform init)
# Weights stored in bf16 (MXU operands / half the DMA bytes); biases in f32.
# ----------------------------------------------------------------------------
def _linear_init(key, d_in, d_out):
    k_w, k_b = jax.random.split(key)
    bound = 1.0 / jnp.sqrt(jnp.float32(d_in))
    w = jax.random.uniform(k_w, (d_in, d_out), jnp.float32, -bound, bound).astype(jnp.bfloat16)
    b = jax.random.uniform(k_b, (1, d_out), jnp.float32, -bound, bound)
    return w, b


def make_fcn_params(key, input_dim, feature_dim, num_labels):
    keys = jax.random.split(key, 4)
    w1, b1 = _linear_init(keys[0], input_dim, 512)
    w2, b2 = _linear_init(keys[1], 512, 256)
    w3, b3 = _linear_init(keys[2], 256, feature_dim)
    w4, b4 = _linear_init(keys[3], feature_dim, num_labels)
    return (w1, b1, w2, b2, w3, b3, w4, b4)


def make_multi_params(key, feature_dim, num_labels, fusion="concat"):
    keys = jax.random.split(key, 2)
    in_dim = (3 if fusion == "concat" else 1) * feature_dim
    w1, b1 = _linear_init(keys[0], in_dim, 64)
    w2, b2 = _linear_init(keys[1], 64, num_labels)
    return (w1, b1, w2, b2)


# ----------------------------------------------------------------------------
# DOMFN forward (scalar glue + output unpacking in plain JAX)
# ----------------------------------------------------------------------------
@functools.partial(jax.jit, static_argnames=("fusion", "num_labels"))
def domfn_forward(params, text_embeds, vision_embeds, audio_embeds, labels, eta,
                  *, fusion="concat", num_labels=4):
    onehot = jax.nn.one_hot(labels, num_labels, dtype=jnp.float32)
    packed, losses = domfn_pallas(params, text_embeds, vision_embeds, audio_embeds,
                                  onehot, fusion=fusion)

    L = num_labels
    text_logit = packed[:, 0 * L:1 * L]
    vision_logit = packed[:, 1 * L:2 * L]
    audio_logit = packed[:, 2 * L:3 * L]
    multi_logit = packed[:, 3 * L:4 * L]
    text_penalty = packed[:, 4 * L + 0]
    vision_penalty = packed[:, 4 * L + 1]
    audio_penalty = packed[:, 4 * L + 2]

    text_celoss = losses[0, 0]
    vision_celoss = losses[1, 0]
    audio_celoss = losses[2, 0]
    multi_celoss = losses[3, 0]

    text_loss = 0.5 * text_celoss * text_celoss - eta * text_penalty
    vision_loss = 0.5 * vision_celoss * vision_celoss - eta * vision_penalty
    audio_loss = 0.5 * audio_celoss * audio_celoss - eta * audio_penalty
    multi_loss = text_celoss + vision_celoss + audio_celoss + multi_celoss

    return {
        "text_logit": text_logit,
        "vision_logit": vision_logit,
        "audio_logit": audio_logit,
        "multi_logit": multi_logit,
        "text_celoss": text_celoss,
        "vision_celoss": vision_celoss,
        "audio_celoss": audio_celoss,
        "text_penalty": text_penalty,
        "vision_penalty": vision_penalty,
        "audio_penalty": audio_penalty,
        "text_loss": text_loss,
        "vision_loss": vision_loss,
        "audio_loss": audio_loss,
        "multi_loss": multi_loss,
    }


# ----------------------------------------------------------------------------
# Demo
# ----------------------------------------------------------------------------
if __name__ == "__main__":
    B = 8
    TEXT_DIM, VISION_DIM, AUDIO_DIM = 32, 48, 24
    FEATURE_DIM, NUM_LABELS = 32, 4
    ETA = 0.1

    root = jax.random.PRNGKey(0)
    k_t, k_v, k_a, k_m, k_xt, k_xv, k_xa, k_lab = jax.random.split(root, 8)

    params = {
        "text": make_fcn_params(k_t, TEXT_DIM, FEATURE_DIM, NUM_LABELS),
        "vision": make_fcn_params(k_v, VISION_DIM, FEATURE_DIM, NUM_LABELS),
        "audio": make_fcn_params(k_a, AUDIO_DIM, FEATURE_DIM, NUM_LABELS),
        "multi": make_multi_params(k_m, FEATURE_DIM, NUM_LABELS, fusion="concat"),
    }

    text_embeds = jax.random.normal(k_xt, (B, TEXT_DIM), jnp.float32)
    vision_embeds = jax.random.normal(k_xv, (B, VISION_DIM), jnp.float32)
    audio_embeds = jax.random.normal(k_xa, (B, AUDIO_DIM), jnp.float32)
    labels = jax.random.randint(k_lab, (B,), 0, NUM_LABELS)
    eta = jnp.float32(ETA)

    out = domfn_forward(params, text_embeds, vision_embeds, audio_embeds,
                        labels, eta, fusion="concat", num_labels=NUM_LABELS)
    out = jax.block_until_ready(out)

    # basic sanity on shapes / values
    assert out["text_logit"].shape == (B, NUM_LABELS)
    assert out["multi_logit"].shape == (B, NUM_LABELS)
    assert out["text_penalty"].shape == (B,)
    assert out["text_loss"].shape == (B,)
    assert out["multi_loss"].shape == ()
    assert bool(jnp.all(jnp.isfinite(out["multi_logit"])))
    assert bool(jnp.isfinite(out["multi_loss"]))

    print("KERNEL_OK")
</pallas_src>

<mosaic_0001>
module attributes {stable_mosaic.version = 11 : i64} {
  func.func @domfn_kernel(%arg0: i32, %arg1: memref<8x32xbf16, #tpu.memory_space<vmem>>, %arg2: memref<8x48xbf16, #tpu.memory_space<vmem>>, %arg3: memref<8x24xbf16, #tpu.memory_space<vmem>>, %arg4: memref<8x4xf32, #tpu.memory_space<vmem>>, %arg5: memref<32x512xbf16, #tpu.memory_space<vmem>>, %arg6: memref<1x512xf32, #tpu.memory_space<vmem>>, %arg7: memref<512x256xbf16, #tpu.memory_space<vmem>>, %arg8: memref<1x256xf32, #tpu.memory_space<vmem>>, %arg9: memref<256x32xbf16, #tpu.memory_space<vmem>>, %arg10: memref<1x32xf32, #tpu.memory_space<vmem>>, %arg11: memref<32x4xbf16, #tpu.memory_space<vmem>>, %arg12: memref<1x4xf32, #tpu.memory_space<vmem>>, %arg13: memref<48x512xbf16, #tpu.memory_space<vmem>>, %arg14: memref<1x512xf32, #tpu.memory_space<vmem>>, %arg15: memref<512x256xbf16, #tpu.memory_space<vmem>>, %arg16: memref<1x256xf32, #tpu.memory_space<vmem>>, %arg17: memref<256x32xbf16, #tpu.memory_space<vmem>>, %arg18: memref<1x32xf32, #tpu.memory_space<vmem>>, %arg19: memref<32x4xbf16, #tpu.memory_space<vmem>>, %arg20: memref<1x4xf32, #tpu.memory_space<vmem>>, %arg21: memref<24x512xbf16, #tpu.memory_space<vmem>>, %arg22: memref<1x512xf32, #tpu.memory_space<vmem>>, %arg23: memref<512x256xbf16, #tpu.memory_space<vmem>>, %arg24: memref<1x256xf32, #tpu.memory_space<vmem>>, %arg25: memref<256x32xbf16, #tpu.memory_space<vmem>>, %arg26: memref<1x32xf32, #tpu.memory_space<vmem>>, %arg27: memref<32x4xbf16, #tpu.memory_space<vmem>>, %arg28: memref<1x4xf32, #tpu.memory_space<vmem>>, %arg29: memref<96x64xbf16, #tpu.memory_space<vmem>>, %arg30: memref<1x64xf32, #tpu.memory_space<vmem>>, %arg31: memref<64x4xbf16, #tpu.memory_space<vmem>>, %arg32: memref<1x4xf32, #tpu.memory_space<vmem>>, %arg33: memref<8x128xf32, #tpu.memory_space<vmem>>, %arg34: memref<4x128xf32, #tpu.memory_space<vmem>>) attributes {dimension_semantics = [#tpu.dimension_semantics<arbitrary>], iteration_bounds = array<i64: 1>, scalar_prefetch = 0 : i64, scratch_operands = 0 : i64, tpu.core_type = #tpu.core_type<tc>, window_params = [{pipeline_mode = #tpu.pipeline_mode<synchronous>, transform_indices = @transform_0, window_bounds = array<i64: 8, 32>}, {pipeline_mode = #tpu.pipeline_mode<synchronous>, transform_indices = @transform_1, window_bounds = array<i64: 8, 48>}, {pipeline_mode = #tpu.pipeline_mode<synchronous>, transform_indices = @transform_2, window_bounds = array<i64: 8, 24>}, {pipeline_mode = #tpu.pipeline_mode<synchronous>, transform_indices = @transform_3, window_bounds = array<i64: 8, 4>}, {pipeline_mode = #tpu.pipeline_mode<synchronous>, transform_indices = @transform_4, window_bounds = array<i64: 32, 512>}, {pipeline_mode = #tpu.pipeline_mode<synchronous>, transform_indices = @transform_5, window_bounds = array<i64: 1, 512>}, {pipeline_mode = #tpu.pipeline_mode<synchronous>, transform_indices = @transform_6, window_bounds = array<i64: 512, 256>}, {pipeline_mode = #tpu.pipeline_mode<synchronous>, transform_indices = @transform_7, window_bounds = array<i64: 1, 256>}, {pipeline_mode = #tpu.pipeline_mode<synchronous>, transform_indices = @transform_8, window_bounds = array<i64: 256, 32>}, {pipeline_mode = #tpu.pipeline_mode<synchronous>, transform_indices = @transform_9, window_bounds = array<i64: 1, 32>}, {pipeline_mode = #tpu.pipeline_mode<synchronous>, transform_indices = @transform_10, window_bounds = array<i64: 32, 4>}, {pipeline_mode = #tpu.pipeline_mode<synchronous>, transform_indices = @transform_11, window_bounds = array<i64: 1, 4>}, {pipeline_mode = #tpu.pipeline_mode<synchronous>, transform_indices = @transform_12, window_bounds = array<i64: 48, 512>}, {pipeline_mode = #tpu.pipeline_mode<synchronous>, transform_indices = @transform_13, window_bounds = array<i64: 1, 512>}, {pipeline_mode = #tpu.pipeline_mode<synchronous>, transform_indices = @transform_14, window_bounds = array<i64: 512, 256>}, {pipeline_mode = #tpu.pipeline_mode<synchronous>, transform_indices = @transform_15, window_bounds = array<i64: 1, 256>}, {pipeline_mode = #tpu.pipeline_mode<synchronous>, transform_indices = @transform_16, window_bounds = array<i64: 256, 32>}, {pipeline_mode = #tpu.pipeline_mode<synchronous>, transform_indices = @transform_17, window_bounds = array<i64: 1, 32>}, {pipeline_mode = #tpu.pipeline_mode<synchronous>, transform_indices = @transform_18, window_bounds = array<i64: 32, 4>}, {pipeline_mode = #tpu.pipeline_mode<synchronous>, transform_indices = @transform_19, window_bounds = array<i64: 1, 4>}, {pipeline_mode = #tpu.pipeline_mode<synchronous>, transform_indices = @transform_20, window_bounds = array<i64: 24, 512>}, {pipeline_mode = #tpu.pipeline_mode<synchronous>, transform_indices = @transform_21, window_bounds = array<i64: 1, 512>}, {pipeline_mode = #tpu.pipeline_mode<synchronous>, transform_indices = @transform_22, window_bounds = array<i64: 512, 256>}, {pipeline_mode = #tpu.pipeline_mode<synchronous>, transform_indices = @transform_23, window_bounds = array<i64: 1, 256>}, {pipeline_mode = #tpu.pipeline_mode<synchronous>, transform_indices = @transform_24, window_bounds = array<i64: 256, 32>}, {pipeline_mode = #tpu.pipeline_mode<synchronous>, transform_indices = @transform_25, window_bounds = array<i64: 1, 32>}, {pipeline_mode = #tpu.pipeline_mode<synchronous>, transform_indices = @transform_26, window_bounds = array<i64: 32, 4>}, {pipeline_mode = #tpu.pipeline_mode<synchronous>, transform_indices = @transform_27, window_bounds = array<i64: 1, 4>}, {pipeline_mode = #tpu.pipeline_mode<synchronous>, transform_indices = @transform_28, window_bounds = array<i64: 96, 64>}, {pipeline_mode = #tpu.pipeline_mode<synchronous>, transform_indices = @transform_29, window_bounds = array<i64: 1, 64>}, {pipeline_mode = #tpu.pipeline_mode<synchronous>, transform_indices = @transform_30, window_bounds = array<i64: 64, 4>}, {pipeline_mode = #tpu.pipeline_mode<synchronous>, transform_indices = @transform_31, window_bounds = array<i64: 1, 4>}, {pipeline_mode = #tpu.pipeline_mode<synchronous>, transform_indices = @transform_32, window_bounds = array<i64: 8, 128>}, {pipeline_mode = #tpu.pipeline_mode<synchronous>, transform_indices = @transform_33, window_bounds = array<i64: 4, 128>}]} {
    %c0 = arith.constant 0 : index
    %c0_0 = arith.constant 0 : index
    %0 = vector.load %arg4[%c0, %c0_0] : memref<8x4xf32, #tpu.memory_space<vmem>>, vector<8x4xf32>
    %c0_1 = arith.constant 0 : index
    %c0_2 = arith.constant 0 : index
    %1 = vector.load %arg1[%c0_1, %c0_2] : memref<8x32xbf16, #tpu.memory_space<vmem>>, vector<8x32xbf16>
    %c0_3 = arith.constant 0 : index
    %c0_4 = arith.constant 0 : index
    %2 = vector.load %arg5[%c0_3, %c0_4] : memref<32x512xbf16, #tpu.memory_space<vmem>>, vector<32x512xbf16>
    %cst = arith.constant dense<0.000000e+00> : vector<8x512xf32>
    %3 = tpu.matmul %1, %2, %cst {dimension_numbers = #tpu.dot_dimension_numbers<[1], [0], [0], [1], [0, 0, 1, 1], [], []>} : vector<8x32xbf16>, vector<32x512xbf16>, vector<8x512xf32> -> vector<8x512xf32>
    %c0_5 = arith.constant 0 : index
    %c0_6 = arith.constant 0 : index
    %4 = vector.load %arg6[%c0_5, %c0_6] : memref<1x512xf32, #tpu.memory_space<vmem>>, vector<1x512xf32>
    %5 = vector.broadcast %4 : vector<1x512xf32> to vector<8x512xf32>
    %6 = arith.addf %3, %5 : vector<8x512xf32>
    %cst_7 = arith.constant 0.000000e+00 : f32
    %7 = vector.broadcast %cst_7 : f32 to vector<8x512xf32>
    %8 = arith.maximumf %6, %7 : vector<8x512xf32>
    %9 = arith.truncf %8 : vector<8x512xf32> to vector<8x512xbf16>
    %c0_8 = arith.constant 0 : index
    %c0_9 = arith.constant 0 : index
    %10 = vector.load %arg7[%c0_8, %c0_9] : memref<512x256xbf16, #tpu.memory_space<vmem>>, vector<512x256xbf16>
    %cst_10 = arith.constant dense<0.000000e+00> : vector<8x256xf32>
    %11 = tpu.matmul %9, %10, %cst_10 {dimension_numbers = #tpu.dot_dimension_numbers<[1], [0], [0], [1], [0, 0, 1, 1], [], []>} : vector<8x512xbf16>, vector<512x256xbf16>, vector<8x256xf32> -> vector<8x256xf32>
    %c0_11 = arith.constant 0 : index
    %c0_12 = arith.constant 0 : index
    %12 = vector.load %arg8[%c0_11, %c0_12] : memref<1x256xf32, #tpu.memory_space<vmem>>, vector<1x256xf32>
    %13 = vector.broadcast %12 : vector<1x256xf32> to vector<8x256xf32>
    %14 = arith.addf %11, %13 : vector<8x256xf32>
    %cst_13 = arith.constant 0.000000e+00 : f32
    %15 = vector.broadcast %cst_13 : f32 to vector<8x256xf32>
    %16 = arith.maximumf %14, %15 : vector<8x256xf32>
    %17 = arith.truncf %16 : vector<8x256xf32> to vector<8x256xbf16>
    %c0_14 = arith.constant 0 : index
    %c0_15 = arith.constant 0 : index
    %18 = vector.load %arg9[%c0_14, %c0_15] : memref<256x32xbf16, #tpu.memory_space<vmem>>, vector<256x32xbf16>
    %cst_16 = arith.constant dense<0.000000e+00> : vector<8x32xf32>
    %19 = tpu.matmul %17, %18, %cst_16 {dimension_numbers = #tpu.dot_dimension_numbers<[1], [0], [0], [1], [0, 0, 1, 1], [], []>} : vector<8x256xbf16>, vector<256x32xbf16>, vector<8x32xf32> -> vector<8x32xf32>
    %c0_17 = arith.constant 0 : index
    %c0_18 = arith.constant 0 : index
    %20 = vector.load %arg10[%c0_17, %c0_18] : memref<1x32xf32, #tpu.memory_space<vmem>>, vector<1x32xf32>
    %21 = vector.broadcast %20 : vector<1x32xf32> to vector<8x32xf32>
    %22 = arith.addf %19, %21 : vector<8x32xf32>
    %cst_19 = arith.constant 0.000000e+00 : f32
    %23 = vector.broadcast %cst_19 : f32 to vector<8x32xf32>
    %24 = arith.maximumf %22, %23 : vector<8x32xf32>
    %25 = arith.truncf %24 : vector<8x32xf32> to vector<8x32xbf16>
    %c0_20 = arith.constant 0 : index
    %c0_21 = arith.constant 0 : index
    %26 = vector.load %arg11[%c0_20, %c0_21] : memref<32x4xbf16, #tpu.memory_space<vmem>>, vector<32x4xbf16>
    %cst_22 = arith.constant dense<0.000000e+00> : vector<8x4xf32>
    %27 = tpu.matmul %25, %26, %cst_22 {dimension_numbers = #tpu.dot_dimension_numbers<[1], [0], [0], [1], [0, 0, 1, 1], [], []>} : vector<8x32xbf16>, vector<32x4xbf16>, vector<8x4xf32> -> vector<8x4xf32>
    %c0_23 = arith.constant 0 : index
    %c0_24 = arith.constant 0 : index
    %28 = vector.load %arg12[%c0_23, %c0_24] : memref<1x4xf32, #tpu.memory_space<vmem>>, vector<1x4xf32>
    %29 = vector.broadcast %28 : vector<1x4xf32> to vector<8x4xf32>
    %30 = arith.addf %27, %29 : vector<8x4xf32>
    %cst_25 = arith.constant 0.000000e+00 : f32
    %31 = vector.broadcast %cst_25 : f32 to vector<8x4xf32>
    %32 = arith.subf %31, %30 : vector<8x4xf32>
    %33 = math.exp %32 : vector<8x4xf32>
    %cst_26 = arith.constant 1.000000e+00 : f32
    %34 = vector.broadcast %cst_26 : f32 to vector<8x4xf32>
    %35 = arith.addf %34, %33 : vector<8x4xf32>
    %36 = tpu.reciprocal %35 {approx = true} : vector<8x4xf32> -> vector<8x4xf32>
    %c0_27 = arith.constant 0 : index
    %c0_28 = arith.constant 0 : index
    %37 = vector.load %arg2[%c0_27, %c0_28] : memref<8x48xbf16, #tpu.memory_space<vmem>>, vector<8x48xbf16>
    %c0_29 = arith.constant 0 : index
    %c0_30 = arith.constant 0 : index
    %38 = vector.load %arg13[%c0_29, %c0_30] : memref<48x512xbf16, #tpu.memory_space<vmem>>, vector<48x512xbf16>
    %cst_31 = arith.constant dense<0.000000e+00> : vector<8x512xf32>
    %39 = tpu.matmul %37, %38, %cst_31 {dimension_numbers = #tpu.dot_dimension_numbers<[1], [0], [0], [1], [0, 0, 1, 1], [], []>} : vector<8x48xbf16>, vector<48x512xbf16>, vector<8x512xf32> -> vector<8x512xf32>
    %c0_32 = arith.constant 0 : index
    %c0_33 = arith.constant 0 : index
    %40 = vector.load %arg14[%c0_32, %c0_33] : memref<1x512xf32, #tpu.memory_space<vmem>>, vector<1x512xf32>
    %41 = vector.broadcast %40 : vector<1x512xf32> to vector<8x512xf32>
    %42 = arith.addf %39, %41 : vector<8x512xf32>
    %cst_34 = arith.constant 0.000000e+00 : f32
    %43 = vector.broadcast %cst_34 : f32 to vector<8x512xf32>
    %44 = arith.maximumf %42, %43 : vector<8x512xf32>
    %45 = arith.truncf %44 : vector<8x512xf32> to vector<8x512xbf16>
    %c0_35 = arith.constant 0 : index
    %c0_36 = arith.constant 0 : index
    %46 = vector.load %arg15[%c0_35, %c0_36] : memref<512x256xbf16, #tpu.memory_space<vmem>>, vector<512x256xbf16>
    %cst_37 = arith.constant dense<0.000000e+00> : vector<8x256xf32>
    %47 = tpu.matmul %45, %46, %cst_37 {dimension_numbers = #tpu.dot_dimension_numbers<[1], [0], [0], [1], [0, 0, 1, 1], [], []>} : vector<8x512xbf16>, vector<512x256xbf16>, vector<8x256xf32> -> vector<8x256xf32>
    %c0_38 = arith.constant 0 : index
    %c0_39 = arith.constant 0 : index
    %48 = vector.load %arg16[%c0_38, %c0_39] : memref<1x256xf32, #tpu.memory_space<vmem>>, vector<1x256xf32>
    %49 = vector.broadcast %48 : vector<1x256xf32> to vector<8x256xf32>
    %50 = arith.addf %47, %49 : vector<8x256xf32>
    %cst_40 = arith.constant 0.000000e+00 : f32
    %51 = vector.broadcast %cst_40 : f32 to vector<8x256xf32>
    %52 = arith.maximumf %50, %51 : vector<8x256xf32>
    %53 = arith.truncf %52 : vector<8x256xf32> to vector<8x256xbf16>
    %c0_41 = arith.constant 0 : index
    %c0_42 = arith.constant 0 : index
    %54 = vector.load %arg17[%c0_41, %c0_42] : memref<256x32xbf16, #tpu.memory_space<vmem>>, vector<256x32xbf16>
    %cst_43 = arith.constant dense<0.000000e+00> : vector<8x32xf32>
    %55 = tpu.matmul %53, %54, %cst_43 {dimension_numbers = #tpu.dot_dimension_numbers<[1], [0], [0], [1], [0, 0, 1, 1], [], []>} : vector<8x256xbf16>, vector<256x32xbf16>, vector<8x32xf32> -> vector<8x32xf32>
    %c0_44 = arith.constant 0 : index
    %c0_45 = arith.constant 0 : index
    %56 = vector.load %arg18[%c0_44, %c0_45] : memref<1x32xf32, #tpu.memory_space<vmem>>, vector<1x32xf32>
    %57 = vector.broadcast %56 : vector<1x32xf32> to vector<8x32xf32>
    %58 = arith.addf %55, %57 : vector<8x32xf32>
    %cst_46 = arith.constant 0.000000e+00 : f32
    %59 = vector.broadcast %cst_46 : f32 to vector<8x32xf32>
    %60 = arith.maximumf %58, %59 : vector<8x32xf32>
    %61 = arith.truncf %60 : vector<8x32xf32> to vector<8x32xbf16>
    %c0_47 = arith.constant 0 : index
    %c0_48 = arith.constant 0 : index
    %62 = vector.load %arg19[%c0_47, %c0_48] : memref<32x4xbf16, #tpu.memory_space<vmem>>, vector<32x4xbf16>
    %cst_49 = arith.constant dense<0.000000e+00> : vector<8x4xf32>
    %63 = tpu.matmul %61, %62, %cst_49 {dimension_numbers = #tpu.dot_dimension_numbers<[1], [0], [0], [1], [0, 0, 1, 1], [], []>} : vector<8x32xbf16>, vector<32x4xbf16>, vector<8x4xf32> -> vector<8x4xf32>
    %c0_50 = arith.constant 0 : index
    %c0_51 = arith.constant 0 : index
    %64 = vector.load %arg20[%c0_50, %c0_51] : memref<1x4xf32, #tpu.memory_space<vmem>>, vector<1x4xf32>
    %65 = vector.broadcast %64 : vector<1x4xf32> to vector<8x4xf32>
    %66 = arith.addf %63, %65 : vector<8x4xf32>
    %cst_52 = arith.constant 0.000000e+00 : f32
    %67 = vector.broadcast %cst_52 : f32 to vector<8x4xf32>
    %68 = arith.subf %67, %66 : vector<8x4xf32>
    %69 = math.exp %68 : vector<8x4xf32>
    %cst_53 = arith.constant 1.000000e+00 : f32
    %70 = vector.broadcast %cst_53 : f32 to vector<8x4xf32>
    %71 = arith.addf %70, %69 : vector<8x4xf32>
    %72 = tpu.reciprocal %71 {approx = true} : vector<8x4xf32> -> vector<8x4xf32>
    %c0_54 = arith.constant 0 : index
    %c0_55 = arith.constant 0 : index
    %73 = vector.load %arg3[%c0_54, %c0_55] : memref<8x24xbf16, #tpu.memory_space<vmem>>, vector<8x24xbf16>
    %c0_56 = arith.constant 0 : index
    %c0_57 = arith.constant 0 : index
    %74 = vector.load %arg21[%c0_56, %c0_57] : memref<24x512xbf16, #tpu.memory_space<vmem>>, vector<24x512xbf16>
    %cst_58 = arith.constant dense<0.000000e+00> : vector<8x512xf32>
    %75 = tpu.matmul %73, %74, %cst_58 {dimension_numbers = #tpu.dot_dimension_numbers<[1], [0], [0], [1], [0, 0, 1, 1], [], []>} : vector<8x24xbf16>, vector<24x512xbf16>, vector<8x512xf32> -> vector<8x512xf32>
    %c0_59 = arith.constant 0 : index
    %c0_60 = arith.constant 0 : index
    %76 = vector.load %arg22[%c0_59, %c0_60] : memref<1x512xf32, #tpu.memory_space<vmem>>, vector<1x512xf32>
    %77 = vector.broadcast %76 : vector<1x512xf32> to vector<8x512xf32>
    %78 = arith.addf %75, %77 : vector<8x512xf32>
    %cst_61 = arith.constant 0.000000e+00 : f32
    %79 = vector.broadcast %cst_61 : f32 to vector<8x512xf32>
    %80 = arith.maximumf %78, %79 : vector<8x512xf32>
    %81 = arith.truncf %80 : vector<8x512xf32> to vector<8x512xbf16>
    %c0_62 = arith.constant 0 : index
    %c0_63 = arith.constant 0 : index
    %82 = vector.load %arg23[%c0_62, %c0_63] : memref<512x256xbf16, #tpu.memory_space<vmem>>, vector<512x256xbf16>
    %cst_64 = arith.constant dense<0.000000e+00> : vector<8x256xf32>
    %83 = tpu.matmul %81, %82, %cst_64 {dimension_numbers = #tpu.dot_dimension_numbers<[1], [0], [0], [1], [0, 0, 1, 1], [], []>} : vector<8x512xbf16>, vector<512x256xbf16>, vector<8x256xf32> -> vector<8x256xf32>
    %c0_65 = arith.constant 0 : index
    %c0_66 = arith.constant 0 : index
    %84 = vector.load %arg24[%c0_65, %c0_66] : memref<1x256xf32, #tpu.memory_space<vmem>>, vector<1x256xf32>
    %85 = vector.broadcast %84 : vector<1x256xf32> to vector<8x256xf32>
    %86 = arith.addf %83, %85 : vector<8x256xf32>
    %cst_67 = arith.constant 0.000000e+00 : f32
    %87 = vector.broadcast %cst_67 : f32 to vector<8x256xf32>
    %88 = arith.maximumf %86, %87 : vector<8x256xf32>
    %89 = arith.truncf %88 : vector<8x256xf32> to vector<8x256xbf16>
    %c0_68 = arith.constant 0 : index
    %c0_69 = arith.constant 0 : index
    %90 = vector.load %arg25[%c0_68, %c0_69] : memref<256x32xbf16, #tpu.memory_space<vmem>>, vector<256x32xbf16>
    %cst_70 = arith.constant dense<0.000000e+00> : vector<8x32xf32>
    %91 = tpu.matmul %89, %90, %cst_70 {dimension_numbers = #tpu.dot_dimension_numbers<[1], [0], [0], [1], [0, 0, 1, 1], [], []>} : vector<8x256xbf16>, vector<256x32xbf16>, vector<8x32xf32> -> vector<8x32xf32>
    %c0_71 = arith.constant 0 : index
    %c0_72 = arith.constant 0 : index
    %92 = vector.load %arg26[%c0_71, %c0_72] : memref<1x32xf32, #tpu.memory_space<vmem>>, vector<1x32xf32>
    %93 = vector.broadcast %92 : vector<1x32xf32> to vector<8x32xf32>
    %94 = arith.addf %91, %93 : vector<8x32xf32>
    %cst_73 = arith.constant 0.000000e+00 : f32
    %95 = vector.broadcast %cst_73 : f32 to vector<8x32xf32>
    %96 = arith.maximumf %94, %95 : vector<8x32xf32>
    %97 = arith.truncf %96 : vector<8x32xf32> to vector<8x32xbf16>
    %c0_74 = arith.constant 0 : index
    %c0_75 = arith.constant 0 : index
    %98 = vector.load %arg27[%c0_74, %c0_75] : memref<32x4xbf16, #tpu.memory_space<vmem>>, vector<32x4xbf16>
    %cst_76 = arith.constant dense<0.000000e+00> : vector<8x4xf32>
    %99 = tpu.matmul %97, %98, %cst_76 {dimension_numbers = #tpu.dot_dimension_numbers<[1], [0], [0], [1], [0, 0, 1, 1], [], []>} : vector<8x32xbf16>, vector<32x4xbf16>, vector<8x4xf32> -> vector<8x4xf32>
    %c0_77 = arith.constant 0 : index
    %c0_78 = arith.constant 0 : index
    %100 = vector.load %arg28[%c0_77, %c0_78] : memref<1x4xf32, #tpu.memory_space<vmem>>, vector<1x4xf32>
    %101 = vector.broadcast %100 : vector<1x4xf32> to vector<8x4xf32>
    %102 = arith.addf %99, %101 : vector<8x4xf32>
    %cst_79 = arith.constant 0.000000e+00 : f32
    %103 = vector.broadcast %cst_79 : f32 to vector<8x4xf32>
    %104 = arith.subf %103, %102 : vector<8x4xf32>
    %105 = math.exp %104 : vector<8x4xf32>
    %cst_80 = arith.constant 1.000000e+00 : f32
    %106 = vector.broadcast %cst_80 : f32 to vector<8x4xf32>
    %107 = arith.addf %106, %105 : vector<8x4xf32>
    %108 = tpu.reciprocal %107 {approx = true} : vector<8x4xf32> -> vector<8x4xf32>
    %109 = arith.truncf %24 : vector<8x32xf32> to vector<8x32xbf16>
    %c0_81 = arith.constant 0 : index
    %c0_82 = arith.constant 0 : index
    %110 = vector.load %arg29[%c0_81, %c0_82] : memref<96x64xbf16, #tpu.memory_space<vmem>>, vector<32x64xbf16>
    %cst_83 = arith.constant dense<0.000000e+00> : vector<8x64xf32>
    %111 = tpu.matmul %109, %110, %cst_83 {dimension_numbers = #tpu.dot_dimension_numbers<[1], [0], [0], [1], [0, 0, 1, 1], [], []>} : vector<8x32xbf16>, vector<32x64xbf16>, vector<8x64xf32> -> vector<8x64xf32>
    %112 = arith.truncf %60 : vector<8x32xf32> to vector<8x32xbf16>
    %c32 = arith.constant 32 : index
    %c0_84 = arith.constant 0 : index
    %113 = vector.load %arg29[%c32, %c0_84] : memref<96x64xbf16, #tpu.memory_space<vmem>>, vector<32x64xbf16>
    %cst_85 = arith.constant dense<0.000000e+00> : vector<8x64xf32>
    %114 = tpu.matmul %112, %113, %cst_85 {dimension_numbers = #tpu.dot_dimension_numbers<[1], [0], [0], [1], [0, 0, 1, 1], [], []>} : vector<8x32xbf16>, vector<32x64xbf16>, vector<8x64xf32> -> vector<8x64xf32>
    %115 = arith.addf %111, %114 : vector<8x64xf32>
    %116 = arith.truncf %96 : vector<8x32xf32> to vector<8x32xbf16>
    %c64 = arith.constant 64 : index
    %c0_86 = arith.constant 0 : index
    %117 = vector.load %arg29[%c64, %c0_86] : memref<96x64xbf16, #tpu.memory_space<vmem>>, vector<32x64xbf16>
    %cst_87 = arith.constant dense<0.000000e+00> : vector<8x64xf32>
    %118 = tpu.matmul %116, %117, %cst_87 {dimension_numbers = #tpu.dot_dimension_numbers<[1], [0], [0], [1], [0, 0, 1, 1], [], []>} : vector<8x32xbf16>, vector<32x64xbf16>, vector<8x64xf32> -> vector<8x64xf32>
    %119 = arith.addf %115, %118 : vector<8x64xf32>
    %c0_88 = arith.constant 0 : index
    %c0_89 = arith.constant 0 : index
    %120 = vector.load %arg30[%c0_88, %c0_89] : memref<1x64xf32, #tpu.memory_space<vmem>>, vector<1x64xf32>
    %121 = vector.broadcast %120 : vector<1x64xf32> to vector<8x64xf32>
    %122 = arith.addf %119, %121 : vector<8x64xf32>
    %cst_90 = arith.constant 0.000000e+00 : f32
    %123 = vector.broadcast %cst_90 : f32 to vector<8x64xf32>
    %124 = arith.maximumf %122, %123 : vector<8x64xf32>
    %125 = arith.truncf %124 : vector<8x64xf32> to vector<8x64xbf16>
    %c0_91 = arith.constant 0 : index
    %c0_92 = arith.constant 0 : index
    %126 = vector.load %arg31[%c0_91, %c0_92] : memref<64x4xbf16, #tpu.memory_space<vmem>>, vector<64x4xbf16>
    %cst_93 = arith.constant dense<0.000000e+00> : vector<8x4xf32>
    %127 = tpu.matmul %125, %126, %cst_93 {dimension_numbers = #tpu.dot_dimension_numbers<[1], [0], [0], [1], [0, 0, 1, 1], [], []>} : vector<8x64xbf16>, vector<64x4xbf16>, vector<8x4xf32> -> vector<8x4xf32>
    %c0_94 = arith.constant 0 : index
    %c0_95 = arith.constant 0 : index
    %128 = vector.load %arg32[%c0_94, %c0_95] : memref<1x4xf32, #tpu.memory_space<vmem>>, vector<1x4xf32>
    %129 = vector.broadcast %128 : vector<1x4xf32> to vector<8x4xf32>
    %130 = arith.addf %127, %129 : vector<8x4xf32>
    %cst_96 = arith.constant 0.000000e+00 : f32
    %131 = vector.broadcast %cst_96 : f32 to vector<8x4xf32>
    %132 = arith.subf %131, %130 : vector<8x4xf32>
    %133 = math.exp %132 : vector<8x4xf32>
    %cst_97 = arith.constant 1.000000e+00 : f32
    %134 = vector.broadcast %cst_97 : f32 to vector<8x4xf32>
    %135 = arith.addf %134, %133 : vector<8x4xf32>
    %136 = tpu.reciprocal %135 {approx = true} : vector<8x4xf32> -> vector<8x4xf32>
    %137 = arith.addf %36, %72 : vector<8x4xf32>
    %138 = arith.addf %137, %108 : vector<8x4xf32>
    %cst_98 = arith.constant 0.333333343 : f32
    %139 = vector.broadcast %cst_98 : f32 to vector<8x4xf32>
    %140 = arith.mulf %138, %139 : vector<8x4xf32>
    %141 = arith.subf %36, %140 : vector<8x4xf32>
    %142 = arith.mulf %141, %141 : vector<8x4xf32>
    %cst_99 = arith.constant dense<0xFF800000> : vector<8xf32>
    %143 = vector.multi_reduction <maximumf>, %142, %cst_99 [1] : vector<8x4xf32> to vector<8xf32>
    %144 = vector.shape_cast %143 : vector<8xf32> to vector<8x1xf32>
    %145 = arith.subf %72, %140 : vector<8x4xf32>
    %146 = arith.mulf %145, %145 : vector<8x4xf32>
    %cst_100 = arith.constant dense<0xFF800000> : vector<8xf32>
    %147 = vector.multi_reduction <maximumf>, %146, %cst_100 [1] : vector<8x4xf32> to vector<8xf32>
    %148 = vector.shape_cast %147 : vector<8xf32> to vector<8x1xf32>
    %149 = arith.subf %108, %140 : vector<8x4xf32>
    %150 = arith.mulf %149, %149 : vector<8x4xf32>
    %cst_101 = arith.constant dense<0xFF800000> : vector<8xf32>
    %151 = vector.multi_reduction <maximumf>, %150, %cst_101 [1] : vector<8x4xf32> to vector<8xf32>
    %152 = vector.shape_cast %151 : vector<8xf32> to vector<8x1xf32>
    %cst_102 = arith.constant 0.000000e+00 : f32
    %153 = vector.broadcast %cst_102 : f32 to vector<8x128xf32>
    %c0_103 = arith.constant 0 : index
    %c0_104 = arith.constant 0 : index
    %154 = vector.load %arg33[%c0_103, %c0_104] : memref<8x128xf32, #tpu.memory_space<vmem>>, vector<8x128xf32>
    tpu.vector_store %arg33[%c0_103, %c0_104], %153 {strides = array<i32>} : memref<8x128xf32, #tpu.memory_space<vmem>>, vector<8x128xf32>,
    %c0_105 = arith.constant 0 : index
    %c0_106 = arith.constant 0 : index
    %155 = vector.load %arg33[%c0_105, %c0_106] : memref<8x128xf32, #tpu.memory_space<vmem>>, vector<8x4xf32>
    tpu.vector_store %arg33[%c0_105, %c0_106], %36 {strides = array<i32>} : memref<8x128xf32, #tpu.memory_space<vmem>>, vector<8x4xf32>,
    %c0_107 = arith.constant 0 : index
    %c4 = arith.constant 4 : index
    %156 = vector.load %arg33[%c0_107, %c4] : memref<8x128xf32, #tpu.memory_space<vmem>>, vector<8x4xf32>
    tpu.vector_store %arg33[%c0_107, %c4], %72 {strides = array<i32>} : memref<8x128xf32, #tpu.memory_space<vmem>>, vector<8x4xf32>,
    %c0_108 = arith.constant 0 : index
    %c8 = arith.constant 8 : index
    %157 = vector.load %arg33[%c0_108, %c8] : memref<8x128xf32, #tpu.memory_space<vmem>>, vector<8x4xf32>
    tpu.vector_store %arg33[%c0_108, %c8], %108 {strides = array<i32>} : memref<8x128xf32, #tpu.memory_space<vmem>>, vector<8x4xf32>,
    %c0_109 = arith.constant 0 : index
    %c12 = arith.constant 12 : index
    %158 = vector.load %arg33[%c0_109, %c12] : memref<8x128xf32, #tpu.memory_space<vmem>>, vector<8x4xf32>
    tpu.vector_store %arg33[%c0_109, %c12], %136 {strides = array<i32>} : memref<8x128xf32, #tpu.memory_space<vmem>>, vector<8x4xf32>,
    %c0_110 = arith.constant 0 : index
    %c16 = arith.constant 16 : index
    %159 = vector.load %arg33[%c0_110, %c16] : memref<8x128xf32, #tpu.memory_space<vmem>>, vector<8x1xf32>
    tpu.vector_store %arg33[%c0_110, %c16], %144 {strides = array<i32>} : memref<8x128xf32, #tpu.memory_space<vmem>>, vector<8x1xf32>,
    %c0_111 = arith.constant 0 : index
    %c17 = arith.constant 17 : index
    %160 = vector.load %arg33[%c0_111, %c17] : memref<8x128xf32, #tpu.memory_space<vmem>>, vector<8x1xf32>
    tpu.vector_store %arg33[%c0_111, %c17], %148 {strides = array<i32>} : memref<8x128xf32, #tpu.memory_space<vmem>>, vector<8x1xf32>,
    %c0_112 = arith.constant 0 : index
    %c18 = arith.constant 18 : index
    %161 = vector.load %arg33[%c0_112, %c18] : memref<8x128xf32, #tpu.memory_space<vmem>>, vector<8x1xf32>
    tpu.vector_store %arg33[%c0_112, %c18], %152 {strides = array<i32>} : memref<8x128xf32, #tpu.memory_space<vmem>>, vector<8x1xf32>,
    %cst_113 = arith.constant 1.000000e+00 : f32
    %162 = vector.broadcast %cst_113 : f32 to vector<1x128xf32>
    %cst_114 = arith.constant dense<0xFF800000> : vector<8xf32>
    %163 = vector.multi_reduction <maximumf>, %36, %cst_114 [1] : vector<8x4xf32> to vector<8xf32>
    %164 = vector.shape_cast %163 : vector<8xf32> to vector<8x1xf32>
    %165 = vector.broadcast %164 : vector<8x1xf32> to vector<8x4xf32>
    %166 = arith.subf %36, %165 : vector<8x4xf32>
    %167 = math.exp %166 : vector<8x4xf32>
    %cst_115 = arith.constant dense<0.000000e+00> : vector<8xf32>
    %168 = vector.multi_reduction <add>, %167, %cst_115 [1] : vector<8x4xf32> to vector<8xf32>
    %169 = vector.shape_cast %168 : vector<8xf32> to vector<8x1xf32>
    %170 = math.log %169 : vector<8x1xf32>
    %171 = arith.addf %164, %170 : vector<8x1xf32>
    %172 = arith.mulf %36, %0 : vector<8x4xf32>
    %cst_116 = arith.constant dense<0.000000e+00> : vector<8xf32>
    %173 = vector.multi_reduction <add>, %172, %cst_116 [1] : vector<8x4xf32> to vector<8xf32>
    %174 = vector.shape_cast %173 : vector<8xf32> to vector<8x1xf32>
    %175 = arith.subf %171, %174 : vector<8x1xf32>
    %176 = vector.shape_cast %175 : vector<8x1xf32> to vector<1x8x1xf32>
    %cst_117 = arith.constant dense<0.000000e+00> : vector<1xf32>
    %177 = vector.multi_reduction <add>, %176, %cst_117 [1, 2] : vector<1x8x1xf32> to vector<1xf32>
    %178 = vector.shape_cast %177 : vector<1xf32> to vector<1x1x1xf32>
    %179 = vector.extract %178[0, 0, 0] : f32 from vector<1x1x1xf32>
    %cst_118 = arith.constant 8.000000e+00 : f32
    %180 = arith.divf %179, %cst_118 : f32
    %181 = vector.broadcast %180 : f32 to vector<1x128xf32>
    %182 = arith.mulf %181, %162 : vector<1x128xf32>
    %c0_119 = arith.constant 0 : index
    %c0_120 = arith.constant 0 : index
    %183 = vector.load %arg34[%c0_119, %c0_120] : memref<4x128xf32, #tpu.memory_space<vmem>>, vector<1x128xf32>
    tpu.vector_store %arg34[%c0_119, %c0_120], %182 {strides = array<i32>} : memref<4x128xf32, #tpu.memory_space<vmem>>, vector<1x128xf32>,
    %cst_121 = arith.constant dense<0xFF800000> : vector<8xf32>
    %184 = vector.multi_reduction <maximumf>, %72, %cst_121 [1] : vector<8x4xf32> to vector<8xf32>
    %185 = vector.shape_cast %184 : vector<8xf32> to vector<8x1xf32>
    %186 = vector.broadcast %185 : vector<8x1xf32> to vector<8x4xf32>
    %187 = arith.subf %72, %186 : vector<8x4xf32>
    %188 = math.exp %187 : vector<8x4xf32>
    %cst_122 = arith.constant dense<0.000000e+00> : vector<8xf32>
    %189 = vector.multi_reduction <add>, %188, %cst_122 [1] : vector<8x4xf32> to vector<8xf32>
    %190 = vector.shape_cast %189 : vector<8xf32> to vector<8x1xf32>
    %191 = math.log %190 : vector<8x1xf32>
    %192 = arith.addf %185, %191 : vector<8x1xf32>
    %193 = arith.mulf %72, %0 : vector<8x4xf32>
    %cst_123 = arith.constant dense<0.000000e+00> : vector<8xf32>
    %194 = vector.multi_reduction <add>, %193, %cst_123 [1] : vector<8x4xf32> to vector<8xf32>
    %195 = vector.shape_cast %194 : vector<8xf32> to vector<8x1xf32>
    %196 = arith.subf %192, %195 : vector<8x1xf32>
    %197 = vector.shape_cast %196 : vector<8x1xf32> to vector<1x8x1xf32>
    %cst_124 = arith.constant dense<0.000000e+00> : vector<1xf32>
    %198 = vector.multi_reduction <add>, %197, %cst_124 [1, 2] : vector<1x8x1xf32> to vector<1xf32>
    %199 = vector.shape_cast %198 : vector<1xf32> to vector<1x1x1xf32>
    %200 = vector.extract %199[0, 0, 0] : f32 from vector<1x1x1xf32>
    %cst_125 = arith.constant 8.000000e+00 : f32
    %201 = arith.divf %200, %cst_125 : f32
    %202 = vector.broadcast %201 : f32 to vector<1x128xf32>
    %203 = arith.mulf %202, %162 : vector<1x128xf32>
    %c1 = arith.constant 1 : index
    %c0_126 = arith.constant 0 : index
    %204 = vector.load %arg34[%c1, %c0_126] : memref<4x128xf32, #tpu.memory_space<vmem>>, vector<1x128xf32>
    tpu.vector_store %arg34[%c1, %c0_126], %203 {strides = array<i32>} : memref<4x128xf32, #tpu.memory_space<vmem>>, vector<1x128xf32>,
    %cst_127 = arith.constant dense<0xFF800000> : vector<8xf32>
    %205 = vector.multi_reduction <maximumf>, %108, %cst_127 [1] : vector<8x4xf32> to vector<8xf32>
    %206 = vector.shape_cast %205 : vector<8xf32> to vector<8x1xf32>
    %207 = vector.broadcast %206 : vector<8x1xf32> to vector<8x4xf32>
    %208 = arith.subf %108, %207 : vector<8x4xf32>
    %209 = math.exp %208 : vector<8x4xf32>
    %cst_128 = arith.constant dense<0.000000e+00> : vector<8xf32>
    %210 = vector.multi_reduction <add>, %209, %cst_128 [1] : vector<8x4xf32> to vector<8xf32>
    %211 = vector.shape_cast %210 : vector<8xf32> to vector<8x1xf32>
    %212 = math.log %211 : vector<8x1xf32>
    %213 = arith.addf %206, %212 : vector<8x1xf32>
    %214 = arith.mulf %108, %0 : vector<8x4xf32>
    %cst_129 = arith.constant dense<0.000000e+00> : vector<8xf32>
    %215 = vector.multi_reduction <add>, %214, %cst_129 [1] : vector<8x4xf32> to vector<8xf32>
    %216 = vector.shape_cast %215 : vector<8xf32> to vector<8x1xf32>
    %217 = arith.subf %213, %216 : vector<8x1xf32>
    %218 = vector.shape_cast %217 : vector<8x1xf32> to vector<1x8x1xf32>
    %cst_130 = arith.constant dense<0.000000e+00> : vector<1xf32>
    %219 = vector.multi_reduction <add>, %218, %cst_130 [1, 2] : vector<1x8x1xf32> to vector<1xf32>
    %220 = vector.shape_cast %219 : vector<1xf32> to vector<1x1x1xf32>
    %221 = vector.extract %220[0, 0, 0] : f32 from vector<1x1x1xf32>
    %cst_131 = arith.constant 8.000000e+00 : f32
    %222 = arith.divf %221, %cst_131 : f32
    %223 = vector.broadcast %222 : f32 to vector<1x128xf32>
    %224 = arith.mulf %223, %162 : vector<1x128xf32>
    %c2 = arith.constant 2 : index
    %c0_132 = arith.constant 0 : index
    %225 = vector.load %arg34[%c2, %c0_132] : memref<4x128xf32, #tpu.memory_space<vmem>>, vector<1x128xf32>
    tpu.vector_store %arg34[%c2, %c0_132], %224 {strides = array<i32>} : memref<4x128xf32, #tpu.memory_space<vmem>>, vector<1x128xf32>,
    %cst_133 = arith.constant dense<0xFF800000> : vector<8xf32>
    %226 = vector.multi_reduction <maximumf>, %136, %cst_133 [1] : vector<8x4xf32> to vector<8xf32>
    %227 = vector.shape_cast %226 : vector<8xf32> to vector<8x1xf32>
    %228 = vector.broadcast %227 : vector<8x1xf32> to vector<8x4xf32>
    %229 = arith.subf %136, %228 : vector<8x4xf32>
    %230 = math.exp %229 : vector<8x4xf32>
    %cst_134 = arith.constant dense<0.000000e+00> : vector<8xf32>
    %231 = vector.multi_reduction <add>, %230, %cst_134 [1] : vector<8x4xf32> to vector<8xf32>
    %232 = vector.shape_cast %231 : vector<8xf32> to vector<8x1xf32>
    %233 = math.log %232 : vector<8x1xf32>
    %234 = arith.addf %227, %233 : vector<8x1xf32>
    %235 = arith.mulf %136, %0 : vector<8x4xf32>
    %cst_135 = arith.constant dense<0.000000e+00> : vector<8xf32>
    %236 = vector.multi_reduction <add>, %235, %cst_135 [1] : vector<8x4xf32> to vector<8xf32>
    %237 = vector.shape_cast %236 : vector<8xf32> to vector<8x1xf32>
    %238 = arith.subf %234, %237 : vector<8x1xf32>
    %239 = vector.shape_cast %238 : vector<8x1xf32> to vector<1x8x1xf32>
    %cst_136 = arith.constant dense<0.000000e+00> : vector<1xf32>
    %240 = vector.multi_reduction <add>, %239, %cst_136 [1, 2] : vector<1x8x1xf32> to vector<1xf32>
    %241 = vector.shape_cast %240 : vector<1xf32> to vector<1x1x1xf32>
    %242 = vector.extract %241[0, 0, 0] : f32 from vector<1x1x1xf32>
    %cst_137 = arith.constant 8.000000e+00 : f32
    %243 = arith.divf %242, %cst_137 : f32
    %244 = vector.broadcast %243 : f32 to vector<1x128xf32>
    %245 = arith.mulf %244, %162 : vector<1x128xf32>
    %c3 = arith.constant 3 : index
    %c0_138 = arith.constant 0 : index
    %246 = vector.load %arg34[%c3, %c0_138] : memref<4x128xf32, #tpu.memory_space<vmem>>, vector<1x128xf32>
    tpu.vector_store %arg34[%c3, %c0_138], %245 {strides = array<i32>} : memref<4x128xf32, #tpu.memory_space<vmem>>, vector<1x128xf32>,
    return
  }
  func.func @transform_0(%arg0: i32) -> (i32, i32) {
    %c0_i32 = arith.constant 0 : i32
    %c0_i32_0 = arith.constant 0 : i32
    %c0_i32_1 = arith.constant 0 : i32
    return %c0_i32, %c0_i32_0 : i32, i32
  }
  func.func @transform_1(%arg0: i32) -> (i32, i32) {
    %c0_i32 = arith.constant 0 : i32
    %c0_i32_0 = arith.constant 0 : i32
    %c0_i32_1 = arith.constant 0 : i32
    return %c0_i32, %c0_i32_0 : i32, i32
  }
  func.func @transform_2(%arg0: i32) -> (i32, i32) {
    %c0_i32 = arith.constant 0 : i32
    %c0_i32_0 = arith.constant 0 : i32
    %c0_i32_1 = arith.constant 0 : i32
    return %c0_i32, %c0_i32_0 : i32, i32
  }
  func.func @transform_3(%arg0: i32) -> (i32, i32) {
    %c0_i32 = arith.constant 0 : i32
    %c0_i32_0 = arith.constant 0 : i32
    %c0_i32_1 = arith.constant 0 : i32
    return %c0_i32, %c0_i32_0 : i32, i32
  }
  func.func @transform_4(%arg0: i32) -> (i32, i32) {
    %c0_i32 = arith.constant 0 : i32
    %c0_i32_0 = arith.constant 0 : i32
    %c0_i32_1 = arith.constant 0 : i32
    return %c0_i32, %c0_i32_0 : i32, i32
  }
  func.func @transform_5(%arg0: i32) -> (i32, i32) {
    %c0_i32 = arith.constant 0 : i32
    %c0_i32_0 = arith.constant 0 : i32
    %c0_i32_1 = arith.constant 0 : i32
    return %c0_i32, %c0_i32_0 : i32, i32
  }
  func.func @transform_6(%arg0: i32) -> (i32, i32) {
    %c0_i32 = arith.constant 0 : i32
    %c0_i32_0 = arith.constant 0 : i32
    %c0_i32_1 = arith.constant 0 : i32
    return %c0_i32, %c0_i32_0 : i32, i32
  }
  func.func @transform_7(%arg0: i32) -> (i32, i32) {
    %c0_i32 = arith.constant 0 : i32
    %c0_i32_0 = arith.constant 0 : i32
    %c0_i32_1 = arith.constant 0 : i32
    return %c0_i32, %c0_i32_0 : i32, i32
  }
  func.func @transform_8(%arg0: i32) -> (i32, i32) {
    %c0_i32 = arith.constant 0 : i32
    %c0_i32_0 = arith.constant 0 : i32
    %c0_i32_1 = arith.constant 0 : i32
    return %c0_i32, %c0_i32_0 : i32, i32
  }
  func.func @transform_9(%arg0: i32) -> (i32, i32) {
    %c0_i32 = arith.constant 0 : i32
    %c0_i32_0 = arith.constant 0 : i32
    %c0_i32_1 = arith.constant 0 : i32
    return %c0_i32, %c0_i32_0 : i32, i32
  }
  func.func @transform_10(%arg0: i32) -> (i32, i32) {
    %c0_i32 = arith.constant 0 : i32
    %c0_i32_0 = arith.constant 0 : i32
    %c0_i32_1 = arith.constant 0 : i32
    return %c0_i32, %c0_i32_0 : i32, i32
  }
  func.func @transform_11(%arg0: i32) -> (i32, i32) {
    %c0_i32 = arith.constant 0 : i32
    %c0_i32_0 = arith.constant 0 : i32
    %c0_i32_1 = arith.constant 0 : i32
    return %c0_i32, %c0_i32_0 : i32, i32
  }
  func.func @transform_12(%arg0: i32) -> (i32, i32) {
    %c0_i32 = arith.constant 0 : i32
    %c0_i32_0 = arith.constant 0 : i32
    %c0_i32_1 = arith.constant 0 : i32
    return %c0_i32, %c0_i32_0 : i32, i32
  }
  func.func @transform_13(%arg0: i32) -> (i32, i32) {
    %c0_i32 = arith.constant 0 : i32
    %c0_i32_0 = arith.constant 0 : i32
    %c0_i32_1 = arith.constant 0 : i32
    return %c0_i32, %c0_i32_0 : i32, i32
  }
  func.func @transform_14(%arg0: i32) -> (i32, i32) {
    %c0_i32 = arith.constant 0 : i32
    %c0_i32_0 = arith.constant 0 : i32
    %c0_i32_1 = arith.constant 0 : i32
    return %c0_i32, %c0_i32_0 : i32, i32
  }
  func.func @transform_15(%arg0: i32) -> (i32, i32) {
    %c0_i32 = arith.constant 0 : i32
    %c0_i32_0 = arith.constant 0 : i32
    %c0_i32_1 = arith.constant 0 : i32
    return %c0_i32, %c0_i32_0 : i32, i32
  }
  func.func @transform_16(%arg0: i32) -> (i32, i32) {
    %c0_i32 = arith.constant 0 : i32
    %c0_i32_0 = arith.constant 0 : i32
    %c0_i32_1 = arith.constant 0 : i32
    return %c0_i32, %c0_i32_0 : i32, i32
  }
  func.func @transform_17(%arg0: i32) -> (i32, i32) {
    %c0_i32 = arith.constant 0 : i32
    %c0_i32_0 = arith.constant 0 : i32
    %c0_i32_1 = arith.constant 0 : i32
    return %c0_i32, %c0_i32_0 : i32, i32
  }
  func.func @transform_18(%arg0: i32) -> (i32, i32) {
    %c0_i32 = arith.constant 0 : i32
    %c0_i32_0 = arith.constant 0 : i32
    %c0_i32_1 = arith.constant 0 : i32
    return %c0_i32, %c0_i32_0 : i32, i32
  }
  func.func @transform_19(%arg0: i32) -> (i32, i32) {
    %c0_i32 = arith.constant 0 : i32
    %c0_i32_0 = arith.constant 0 : i32
    %c0_i32_1 = arith.constant 0 : i32
    return %c0_i32, %c0_i32_0 : i32, i32
  }
  func.func @transform_20(%arg0: i32) -> (i32, i32) {
    %c0_i32 = arith.constant 0 : i32
    %c0_i32_0 = arith.constant 0 : i32
    %c0_i32_1 = arith.constant 0 : i32
    return %c0_i32, %c0_i32_0 : i32, i32
  }
  func.func @transform_21(%arg0: i32) -> (i32, i32) {
    %c0_i32 = arith.constant 0 : i32
    %c0_i32_0 = arith.constant 0 : i32
    %c0_i32_1 = arith.constant 0 : i32
    return %c0_i32, %c0_i32_0 : i32, i32
  }
  func.func @transform_22(%arg0: i32) -> (i32, i32) {
    %c0_i32 = arith.constant 0 : i32
    %c0_i32_0 = arith.constant 0 : i32
    %c0_i32_1 = arith.constant 0 : i32
    return %c0_i32, %c0_i32_0 : i32, i32
  }
  func.func @transform_23(%arg0: i32) -> (i32, i32) {
    %c0_i32 = arith.constant 0 : i32
    %c0_i32_0 = arith.constant 0 : i32
    %c0_i32_1 = arith.constant 0 : i32
    return %c0_i32, %c0_i32_0 : i32, i32
  }
  func.func @transform_24(%arg0: i32) -> (i32, i32) {
    %c0_i32 = arith.constant 0 : i32
    %c0_i32_0 = arith.constant 0 : i32
    %c0_i32_1 = arith.constant 0 : i32
    return %c0_i32, %c0_i32_0 : i32, i32
  }
  func.func @transform_25(%arg0: i32) -> (i32, i32) {
    %c0_i32 = arith.constant 0 : i32
    %c0_i32_0 = arith.constant 0 : i32
    %c0_i32_1 = arith.constant 0 : i32
    return %c0_i32, %c0_i32_0 : i32, i32
  }
  func.func @transform_26(%arg0: i32) -> (i32, i32) {
    %c0_i32 = arith.constant 0 : i32
    %c0_i32_0 = arith.constant 0 : i32
    %c0_i32_1 = arith.constant 0 : i32
    return %c0_i32, %c0_i32_0 : i32, i32
  }
  func.func @transform_27(%arg0: i32) -> (i32, i32) {
    %c0_i32 = arith.constant 0 : i32
    %c0_i32_0 = arith.constant 0 : i32
    %c0_i32_1 = arith.constant 0 : i32
    return %c0_i32, %c0_i32_0 : i32, i32
  }
  func.func @transform_28(%arg0: i32) -> (i32, i32) {
    %c0_i32 = arith.constant 0 : i32
    %c0_i32_0 = arith.constant 0 : i32
    %c0_i32_1 = arith.constant 0 : i32
    return %c0_i32, %c0_i32_0 : i32, i32
  }
  func.func @transform_29(%arg0: i32) -> (i32, i32) {
    %c0_i32 = arith.constant 0 : i32
    %c0_i32_0 = arith.constant 0 : i32
    %c0_i32_1 = arith.constant 0 : i32
    return %c0_i32, %c0_i32_0 : i32, i32
  }
  func.func @transform_30(%arg0: i32) -> (i32, i32) {
    %c0_i32 = arith.constant 0 : i32
    %c0_i32_0 = arith.constant 0 : i32
    %c0_i32_1 = arith.constant 0 : i32
    return %c0_i32, %c0_i32_0 : i32, i32
  }
  func.func @transform_31(%arg0: i32) -> (i32, i32) {
    %c0_i32 = arith.constant 0 : i32
    %c0_i32_0 = arith.constant 0 : i32
    %c0_i32_1 = arith.constant 0 : i32
    return %c0_i32, %c0_i32_0 : i32, i32
  }
  func.func @transform_32(%arg0: i32) -> (i32, i32) {
    %c0_i32 = arith.constant 0 : i32
    %c0_i32_0 = arith.constant 0 : i32
    %c0_i32_1 = arith.constant 0 : i32
    return %c0_i32, %c0_i32_0 : i32, i32
  }
  func.func @transform_33(%arg0: i32) -> (i32, i32) {
    %c0_i32 = arith.constant 0 : i32
    %c0_i32_0 = arith.constant 0 : i32
    %c0_i32_1 = arith.constant 0 : i32
    return %c0_i32, %c0_i32_0 : i32, i32
  }
}

</mosaic_0001>

<llo_original>
// kernel: domfn_forward.1
$region0: #{domfn_forward.1}
  #allocation0 [shape = 'u32[]', space=smem, size = 0x4, offset = 0x4, fixed_abs, tag = 'smem constant byte address 0x4 - core index']
  #allocation1 [shape = 'u32[144,128]{1,0:T(1,128)}', space=vmem, size = 0x12000, scoped, tag = 'internal scratch']
  %s0 = inlined_call_operand.smem [shape: u32[34], index: -1, kind: input, shape index: {}]
  %s1 = sld [smem:[%s0]]
  %s2 = scalar_lea.smem %s0, 1
  %s3 = sld [smem:[%s2]]
  %s4 = scalar_lea.smem %s0, 2
  %s5 = sld [smem:[%s4]]
  %s6 = scalar_lea.smem %s0, 3
  %s7 = sld [smem:[%s6]]
  %s8 = scalar_lea.smem %s0, 4
  %s9 = sld [smem:[%s8]]
  %s10 = scalar_lea.smem %s0, 5
  %s11 = sld [smem:[%s10]]
  %s12 = scalar_lea.smem %s0, 6
  %s13 = sld [smem:[%s12]]
  %s14 = scalar_lea.smem %s0, 7
  %s15 = sld [smem:[%s14]]
  %s16 = scalar_lea.smem %s0, 8
  %s17 = sld [smem:[%s16]]
  %s18 = scalar_lea.smem %s0, 9
  %s19 = sld [smem:[%s18]]
  %s20 = scalar_lea.smem %s0, 10
  %s21 = sld [smem:[%s20]]
  %s22 = scalar_lea.smem %s0, 11
  %s23 = sld [smem:[%s22]]
  %s24 = scalar_lea.smem %s0, 12
  %s25 = sld [smem:[%s24]]
  %s26 = scalar_lea.smem %s0, 13
  %s27 = sld [smem:[%s26]]
  %s28 = scalar_lea.smem %s0, 14
  %s29 = sld [smem:[%s28]]
  %s30 = scalar_lea.smem %s0, 15
  %s31 = sld [smem:[%s30]]
  %s32 = scalar_lea.smem %s0, 16
  %s33 = sld [smem:[%s32]]
  %s34 = scalar_lea.smem %s0, 17
  %s35 = sld [smem:[%s34]]
  %s36 = scalar_lea.smem %s0, 18
  %s37 = sld [smem:[%s36]]
  %s38 = scalar_lea.smem %s0, 19
  %s39 = sld [smem:[%s38]]
  %s40 = scalar_lea.smem %s0, 20
  %s41 = sld [smem:[%s40]]
  %s42 = scalar_lea.smem %s0, 21
  %s43 = sld [smem:[%s42]]
  %s44 = scalar_lea.smem %s0, 22
  %s45 = sld [smem:[%s44]]
  %s46 = scalar_lea.smem %s0, 23
  %s47 = sld [smem:[%s46]]
  %s48 = scalar_lea.smem %s0, 24
  %s49 = sld [smem:[%s48]]
  %s50 = scalar_lea.smem %s0, 25
  %s51 = sld [smem:[%s50]]
  %s52 = scalar_lea.smem %s0, 26
  %s53 = sld [smem:[%s52]]
  %s54 = scalar_lea.smem %s0, 27
  %s55 = sld [smem:[%s54]]
  %s56 = scalar_lea.smem %s0, 28
  %s57 = sld [smem:[%s56]]
  %s58 = scalar_lea.smem %s0, 29
  %s59 = sld [smem:[%s58]]
  %s60 = scalar_lea.smem %s0, 30
  %s61 = sld [smem:[%s60]]
  %s62 = scalar_lea.smem %s0, 31
  %s63 = sld [smem:[%s62]]
  %s64 = scalar_lea.smem %s0, 32
  %s65 = sld [smem:[%s64]]
  %s66 = scalar_lea.smem %s0, 33
  %s67 = sld [smem:[%s66]]
  %68 = xla_tuple %s65, %s67
  %s69 = sld [smem:[#allocation0]]
  $region206: #{domfn_forward.1} parent=0
    _
  %s71 = ssub.s32 1, %s69
  %s72 = scalar_select 0, %s71, %s69
  $region1: #{domfn_forward.1} parent=0
    #allocation2 [shape = 'u8[2048]{0}', space=vmem, size = 0x800, scoped, tag = 'input window, operand 5, single buffered']
    #allocation3 [shape = 's32[1]{0}', space=sflag, size = 0x4, scoped, tag = 'scoped memory for domfn_forward.1']
    #allocation4 [shape = 'u8[1024]{0}', space=vmem, size = 0x400, scoped, tag = 'input window, operand 7, single buffered']
    #allocation5 [shape = 's32[1]{0}', space=sflag, size = 0x4, scoped, tag = 'scoped memory for domfn_forward.1']
    #allocation6 [shape = 'u8[512]{0}', space=vmem, size = 0x400, scoped, tag = 'input window, operand 11, single buffered']
    #allocation7 [shape = 'u8[2048]{0}', space=vmem, size = 0x800, scoped, tag = 'input window, operand 13, single buffered']
    #allocation8 [shape = 's32[1]{0}', space=sflag, size = 0x4, scoped, tag = 'scoped memory for domfn_forward.1']
    #allocation9 [shape = 'u8[262144]{0}', space=vmem, size = 0x40000, scoped, tag = 'input window, operand 14, single buffered']
    #allocation10 [shape = 'u8[1024]{0}', space=vmem, size = 0x400, scoped, tag = 'input window, operand 15, single buffered']
    #allocation11 [shape = 's32[1]{0}', space=sflag, size = 0x4, scoped, tag = 'scoped memory for domfn_forward.1']
    #allocation12 [shape = 'u8[512]{0}', space=vmem, size = 0x400, scoped, tag = 'input window, operand 17, single buffered']
    #allocation13 [shape = 'u8[512]{0}', space=vmem, size = 0x400, scoped, tag = 'input window, operand 19, single buffered']
    #allocation14 [shape = 's32[1]{0}', space=sflag, size = 0x4, scoped, tag = 'scoped memory for domfn_forward.1']
    #allocation15 [shape = 'u8[2048]{0}', space=vmem, size = 0x800, scoped, tag = 'input window, operand 21, single buffered']
    #allocation16 [shape = 'u8[262144]{0}', space=vmem, size = 0x40000, scoped, tag = 'input window, operand 22, single buffered']
    #allocation17 [shape = 's32[1]{0}', space=sflag, size = 0x4, scoped, tag = 'scoped memory for domfn_forward.1']
    #allocation18 [shape = 'u8[1024]{0}', space=vmem, size = 0x400, scoped, tag = 'input window, operand 23, single buffered']
    #allocation19 [shape = 'u8[512]{0}', space=vmem, size = 0x400, scoped, tag = 'input window, operand 25, single buffered']
    #allocation20 [shape = 's32[1]{0}', space=sflag, size = 0x4, scoped, tag = 'scoped memory for domfn_forward.1']
    #allocation21 [shape = 'u8[512]{0}', space=vmem, size = 0x400, scoped, tag = 'input window, operand 27, single buffered']
    #allocation22 [shape = 'u8[512]{0}', space=vmem, size = 0x400, scoped, tag = 'input window, operand 29, single buffered']
    #allocation23 [shape = 's32[1]{0}', space=sflag, size = 0x4, scoped, tag = 'scoped memory for domfn_forward.1']
    #allocation24 [shape = 'u8[512]{0}', space=vmem, size = 0x400, scoped, tag = 'input window, operand 31, single buffered']
    %73 = vsyncpa [#allocation3], 0
    %74 = vsyncpa [#allocation5], 0
    %75 = vsyncpa [#allocation8], 0
    %76 = vsyncpa [#allocation11], 0
    %77 = vsyncpa [#allocation14], 0
    %78 = vsyncpa [#allocation17], 0
    %79 = vsyncpa [#allocation20], 0
    %80 = vsyncpa [#allocation23], 0
    // Predicated region
    $region2: #{domfn_forward.1} parent=1 // pred_check
      _
    $region3: #{domfn_forward.1} parent=1 // pred_check_branch
      %82 = sbr.rel (0) target = $region5
    $region4: #{domfn_forward.1} parent=1 // pred_region
      _
    $region5: #{domfn_forward.1} parent=1 // pred_fallthru
      _
    // Predicated region
    $region6: #{domfn_forward.1} parent=1 // pred_check
      _
    $region7: #{domfn_forward.1} parent=1 // pred_check_branch
      %84 = sbr.rel (0) target = $region9
    $region8: #{domfn_forward.1} parent=1 // pred_region
      _
    $region9: #{domfn_forward.1} parent=1 // pred_fallthru
      _
    // Predicated region
    $region10: #{domfn_forward.1} parent=1 // pred_check
      _
    $region11: #{domfn_forward.1} parent=1 // pred_check_branch
      %86 = sbr.rel (0) target = $region13
    $region12: #{domfn_forward.1} parent=1 // pred_region
      _
    $region13: #{domfn_forward.1} parent=1 // pred_fallthru
      _
    // Predicated region
    $region14: #{domfn_forward.1} parent=1 // pred_check
      _
    $region15: #{domfn_forward.1} parent=1 // pred_check_branch
      %88 = sbr.rel (0) target = $region17
    $region16: #{domfn_forward.1} parent=1 // pred_region
      _
    $region17: #{domfn_forward.1} parent=1 // pred_fallthru
      _
    // Predicated region
    $region18: #{domfn_forward.1} parent=1 // pred_check
      _
    $region19: #{domfn_forward.1} parent=1 // pred_check_branch
      %90 = sbr.rel (0) target = $region21
    $region20: #{domfn_forward.1} parent=1 // pred_region
      _
    $region21: #{domfn_forward.1} parent=1 // pred_fallthru
      _
    // Predicated region
    $region22: #{domfn_forward.1} parent=1 // pred_check
      _
    $region23: #{domfn_forward.1} parent=1 // pred_check_branch
      %92 = sbr.rel (0) target = $region25
    $region24: #{domfn_forward.1} parent=1 // pred_region
      %s94 = ssub.s32 64, 64
      %95 = vsyncadd [#allocation3], %s94
      %s97 = sshll.u32 [#allocation2], 4
      %s98 = int_to_ptr.vmem [resolvable:$true] %s97
      %100 = dma.hbm_to_vmem [thread:$0]  %s11, 64, %s98, [#allocation3]
    $region25: #{domfn_forward.1} parent=1 // pred_fallthru
      _
    // Predicated region
    $region26: #{domfn_forward.1} parent=1 // pred_check
      _
    $region27: #{domfn_forward.1} parent=1 // pred_check_branch
      %102 = sbr.rel (0) target = $region29
    $region28: #{domfn_forward.1} parent=1 // pred_region
      _
    $region29: #{domfn_forward.1} parent=1 // pred_fallthru
      _
    // Predicated region
    $region30: #{domfn_forward.1} parent=1 // pred_check
      _
    $region31: #{domfn_forward.1} parent=1 // pred_check_branch
      %104 = sbr.rel (0) target = $region33
    $region32: #{domfn_forward.1} parent=1 // pred_region
      %s106 = ssub.s32 32, 32
      %107 = vsyncadd [#allocation5], %s106
      %s109 = sshll.u32 [#allocation4], 4
      %s110 = int_to_ptr.vmem [resolvable:$true] %s109
      %112 = dma.hbm_to_vmem [thread:$0]  %s15, 32, %s110, [#allocation5]
    $region33: #{domfn_forward.1} parent=1 // pred_fallthru
      _
    // Predicated region
    $region34: #{domfn_forward.1} parent=1 // pred_check
      _
    $region35: #{domfn_forward.1} parent=1 // pred_check_branch
      %114 = sbr.rel (0) target = $region37
    $region36: #{domfn_forward.1} parent=1 // pred_region
      _
    $region37: #{domfn_forward.1} parent=1 // pred_fallthru
      _
    // Predicated region
    $region38: #{domfn_forward.1} parent=1 // pred_check
      _
    $region39: #{domfn_forward.1} parent=1 // pred_check_branch
      %116 = sbr.rel (0) target = $region41
    $region40: #{domfn_forward.1} parent=1 // pred_region
      _
    $region41: #{domfn_forward.1} parent=1 // pred_fallthru
      _
    // Predicated region
    $region42: #{domfn_forward.1} parent=1 // pred_check
      _
    $region43: #{domfn_forward.1} parent=1 // pred_check_branch
      %118 = sbr.rel (0) target = $region45
    $region44: #{domfn_forward.1} parent=1 // pred_region
      _
    $region45: #{domfn_forward.1} parent=1 // pred_fallthru
      _
    // Predicated region
    $region46: #{domfn_forward.1} parent=1 // pred_check
      _
    $region47: #{domfn_forward.1} parent=1 // pred_check_branch
      %120 = sbr.rel (0) target = $region49
    $region48: #{domfn_forward.1} parent=1 // pred_region
      %s122 = ssub.s32 16, 16
      %123 = vsyncadd [#allocation5], %s122
      %s125 = sshll.u32 [#allocation6], 4
      %s126 = int_to_ptr.vmem [resolvable:$true] %s125
      %128 = dma.hbm_to_vmem [thread:$0]  %s23, 16, %s126, [#allocation5]
    $region49: #{domfn_forward.1} parent=1 // pred_fallthru
      _
    // Predicated region
    $region50: #{domfn_forward.1} parent=1 // pred_check
      _
    $region51: #{domfn_forward.1} parent=1 // pred_check_branch
      %130 = sbr.rel (0) target = $region53
    $region52: #{domfn_forward.1} parent=1 // pred_region
      _
    $region53: #{domfn_forward.1} parent=1 // pred_fallthru
      _
    // Predicated region
    $region54: #{domfn_forward.1} parent=1 // pred_check
      _
    $region55: #{domfn_forward.1} parent=1 // pred_check_branch
      %132 = sbr.rel (0) target = $region57
    $region56: #{domfn_forward.1} parent=1 // pred_region
      %s134 = ssub.s32 64, 64
      %135 = vsyncadd [#allocation8], %s134
      %s137 = sshll.u32 [#allocation7], 4
      %s138 = int_to_ptr.vmem [resolvable:$true] %s137
      %140 = dma.hbm_to_vmem [thread:$0]  %s27, 64, %s138, [#allocation8]
    $region57: #{domfn_forward.1} parent=1 // pred_fallthru
      _
    // Predicated region
    $region58: #{domfn_forward.1} parent=1 // pred_check
      _
    $region59: #{domfn_forward.1} parent=1 // pred_check_branch
      %142 = sbr.rel (0) target = $region61
    $region60: #{domfn_forward.1} parent=1 // pred_region
      %s144 = ssub.s32 8192, 8192
      %145 = vsyncadd [#allocation8], %s144
      %s146 = sshll.u32 [#allocation9], 4
      %s147 = int_to_ptr.vmem [resolvable:$true] %s146
      %152 = dma.hbm_to_vmem [thread:$0]  %s29, 8192, %s147, [#allocation8], 128, 128, 8
    $region61: #{domfn_forward.1} parent=1 // pred_fallthru
      _
    // Predicated region
    $region62: #{domfn_forward.1} parent=1 // pred_check
      _
    $region63: #{domfn_forward.1} parent=1 // pred_check_branch
      %154 = sbr.rel (0) target = $region65
    $region64: #{domfn_forward.1} parent=1 // pred_region
      %s156 = ssub.s32 32, 32
      %157 = vsyncadd [#allocation11], %s156
      %s159 = sshll.u32 [#allocation10], 4
      %s160 = int_to_ptr.vmem [resolvable:$true] %s159
      %162 = dma.hbm_to_vmem [thread:$0]  %s31, 32, %s160, [#allocation11]
    $region65: #{domfn_forward.1} parent=1 // pred_fallthru
      _
    // Predicated region
    $region66: #{domfn_forward.1} parent=1 // pred_check
      _
    $region67: #{domfn_forward.1} parent=1 // pred_check_branch
      %164 = sbr.rel (0) target = $region69
    $region68: #{domfn_forward.1} parent=1 // pred_region
      _
    $region69: #{domfn_forward.1} parent=1 // pred_fallthru
      _
    // Predicated region
    $region70: #{domfn_forward.1} parent=1 // pred_check
      _
    $region71: #{domfn_forward.1} parent=1 // pred_check_branch
      %166 = sbr.rel (0) target = $region73
    $region72: #{domfn_forward.1} parent=1 // pred_region
      %s168 = ssub.s32 16, 16
      %169 = vsyncadd [#allocation11], %s168
      %s171 = sshll.u32 [#allocation12], 4
      %s172 = int_to_ptr.vmem [resolvable:$true] %s171
      %174 = dma.hbm_to_vmem [thread:$0]  %s35, 16, %s172, [#allocation11]
    $region73: #{domfn_forward.1} parent=1 // pred_fallthru
      _
    // Predicated region
    $region74: #{domfn_forward.1} parent=1 // pred_check
      _
    $region75: #{domfn_forward.1} parent=1 // pred_check_branch
      %176 = sbr.rel (0) target = $region77
    $region76: #{domfn_forward.1} parent=1 // pred_region
      _
    $region77: #{domfn_forward.1} parent=1 // pred_fallthru
      _
    // Predicated region
    $region78: #{domfn_forward.1} parent=1 // pred_check
      _
    $region79: #{domfn_forward.1} parent=1 // pred_check_branch
      %178 = sbr.rel (0) target = $region81
    $region80: #{domfn_forward.1} parent=1 // pred_region
      %s180 = ssub.s32 16, 16
      %181 = vsyncadd [#allocation14], %s180
      %s183 = sshll.u32 [#allocation13], 4
      %s184 = int_to_ptr.vmem [resolvable:$true] %s183
      %186 = dma.hbm_to_vmem [thread:$0]  %s39, 16, %s184, [#allocation14]
    $region81: #{domfn_forward.1} parent=1 // pred_fallthru
      _
    // Predicated region
    $region82: #{domfn_forward.1} parent=1 // pred_check
      _
    $region83: #{domfn_forward.1} parent=1 // pred_check_branch
      %188 = sbr.rel (0) target = $region85
    $region84: #{domfn_forward.1} parent=1 // pred_region
      _
    $region85: #{domfn_forward.1} parent=1 // pred_fallthru
      _
    // Predicated region
    $region86: #{domfn_forward.1} parent=1 // pred_check
      _
    $region87: #{domfn_forward.1} parent=1 // pred_check_branch
      %190 = sbr.rel (0) target = $region89
    $region88: #{domfn_forward.1} parent=1 // pred_region
      %s192 = ssub.s32 64, 64
      %193 = vsyncadd [#allocation14], %s192
      %s195 = sshll.u32 [#allocation15], 4
      %s196 = int_to_ptr.vmem [resolvable:$true] %s195
      %198 = dma.hbm_to_vmem [thread:$0]  %s43, 64, %s196, [#allocation14]
    $region89: #{domfn_forward.1} parent=1 // pred_fallthru
      _
    // Predicated region
    $region90: #{domfn_forward.1} parent=1 // pred_check
      _
    $region91: #{domfn_forward.1} parent=1 // pred_check_branch
      %200 = sbr.rel (0) target = $region93
    $region92: #{domfn_forward.1} parent=1 // pred_region
      %s202 = ssub.s32 8192, 8192
      %203 = vsyncadd [#allocation17], %s202
      %s204 = sshll.u32 [#allocation16], 4
      %s205 = int_to_ptr.vmem [resolvable:$true] %s204
      %210 = dma.hbm_to_vmem [thread:$0]  %s45, 8192, %s205, [#allocation17], 128, 128, 8
    $region93: #{domfn_forward.1} parent=1 // pred_fallthru
      _
    // Predicated region
    $region94: #{domfn_forward.1} parent=1 // pred_check
      _
    $region95: #{domfn_forward.1} parent=1 // pred_check_branch
      %212 = sbr.rel (0) target = $region97
    $region96: #{domfn_forward.1} parent=1 // pred_region
      %s214 = ssub.s32 32, 32
      %215 = vsyncadd [#allocation17], %s214
      %s217 = sshll.u32 [#allocation18], 4
      %s218 = int_to_ptr.vmem [resolvable:$true] %s217
      %220 = dma.hbm_to_vmem [thread:$0]  %s47, 32, %s218, [#allocation17]
    $region97: #{domfn_forward.1} parent=1 // pred_fallthru
      _
    // Predicated region
    $region98: #{domfn_forward.1} parent=1 // pred_check
      _
    $region99: #{domfn_forward.1} parent=1 // pred_check_branch
      %222 = sbr.rel (0) target = $region101
    $region100: #{domfn_forward.1} parent=1 // pred_region
      _
    $region101: #{domfn_forward.1} parent=1 // pred_fallthru
      _
    // Predicated region
    $region102: #{domfn_forward.1} parent=1 // pred_check
      _
    $region103: #{domfn_forward.1} parent=1 // pred_check_branch
      %224 = sbr.rel (0) target = $region105
    $region104: #{domfn_forward.1} parent=1 // pred_region
      %s226 = ssub.s32 16, 16
      %227 = vsyncadd [#allocation20], %s226
      %s229 = sshll.u32 [#allocation19], 4
      %s230 = int_to_ptr.vmem [resolvable:$true] %s229
      %232 = dma.hbm_to_vmem [thread:$0]  %s51, 16, %s230, [#allocation20]
    $region105: #{domfn_forward.1} parent=1 // pred_fallthru
      _
    // Predicated region
    $region106: #{domfn_forward.1} parent=1 // pred_check
      _
    $region107: #{domfn_forward.1} parent=1 // pred_check_branch
      %234 = sbr.rel (0) target = $region109
    $region108: #{domfn_forward.1} parent=1 // pred_region
      _
    $region109: #{domfn_forward.1} parent=1 // pred_fallthru
      _
    // Predicated region
    $region110: #{domfn_forward.1} parent=1 // pred_check
      _
    $region111: #{domfn_forward.1} parent=1 // pred_check_branch
      %236 = sbr.rel (0) target = $region113
    $region112: #{domfn_forward.1} parent=1 // pred_region
      %s238 = ssub.s32 16, 16
      %239 = vsyncadd [#allocation20], %s238
      %s241 = sshll.u32 [#allocation21], 4
      %s242 = int_to_ptr.vmem [resolvable:$true] %s241
      %244 = dma.hbm_to_vmem [thread:$0]  %s55, 16, %s242, [#allocation20]
    $region113: #{domfn_forward.1} parent=1 // pred_fallthru
      _
    // Predicated region
    $region114: #{domfn_forward.1} parent=1 // pred_check
      _
    $region115: #{domfn_forward.1} parent=1 // pred_check_branch
      %246 = sbr.rel (0) target = $region117
    $region116: #{domfn_forward.1} parent=1 // pred_region
      _
    $region117: #{domfn_forward.1} parent=1 // pred_fallthru
      _
    // Predicated region
    $region118: #{domfn_forward.1} parent=1 // pred_check
      _
    $region119: #{domfn_forward.1} parent=1 // pred_check_branch
      %248 = sbr.rel (0) target = $region121
    $region120: #{domfn_forward.1} parent=1 // pred_region
      %s250 = ssub.s32 16, 16
      %251 = vsyncadd [#allocation23], %s250
      %s253 = sshll.u32 [#allocation22], 4
      %s254 = int_to_ptr.vmem [resolvable:$true] %s253
      %256 = dma.hbm_to_vmem [thread:$0]  %s59, 16, %s254, [#allocation23]
    $region121: #{domfn_forward.1} parent=1 // pred_fallthru
      _
    // Predicated region
    $region122: #{domfn_forward.1} parent=1 // pred_check
      _
    $region123: #{domfn_forward.1} parent=1 // pred_check_branch
      %258 = sbr.rel (0) target = $region125
    $region124: #{domfn_forward.1} parent=1 // pred_region
      _
    $region125: #{domfn_forward.1} parent=1 // pred_fallthru
      _
    // Predicated region
    $region126: #{domfn_forward.1} parent=1 // pred_check
      _
    $region127: #{domfn_forward.1} parent=1 // pred_check_branch
      %260 = sbr.rel (0) target = $region129
    $region128: #{domfn_forward.1} parent=1 // pred_region
      %s262 = ssub.s32 16, 16
      %263 = vsyncadd [#allocation23], %s262
      %s265 = sshll.u32 [#allocation24], 4
      %s266 = int_to_ptr.vmem [resolvable:$true] %s265
      %268 = dma.hbm_to_vmem [thread:$0]  %s63, 16, %s266, [#allocation23]
    $region129: #{domfn_forward.1} parent=1 // pred_fallthru
      _
    // Predicated region
    $region130: #{domfn_forward.1} parent=1 // pred_check
      _
    $region131: #{domfn_forward.1} parent=1 // pred_check_branch
      %270 = sbr.rel (0) target = $region133
    $region132: #{domfn_forward.1} parent=1 // pred_region
      %271 = dma.done [#allocation3], 64
    $region133: #{domfn_forward.1} parent=1 // pred_fallthru
      _
    // Predicated region
    $region134: #{domfn_forward.1} parent=1 // pred_check
      _
    $region135: #{domfn_forward.1} parent=1 // pred_check_branch
      %273 = sbr.rel (0) target = $region137
    $region136: #{domfn_forward.1} parent=1 // pred_region
      %274 = dma.done [#allocation5], 32
    $region137: #{domfn_forward.1} parent=1 // pred_fallthru
      _
    // Predicated region
    $region138: #{domfn_forward.1} parent=1 // pred_check
      _
    $region139: #{domfn_forward.1} parent=1 // pred_check_branch
      %276 = sbr.rel (0) target = $region141
    $region140: #{domfn_forward.1} parent=1 // pred_region
      %277 = dma.done [#allocation5], 16
    $region141: #{domfn_forward.1} parent=1 // pred_fallthru
      _
    // Predicated region
    $region142: #{domfn_forward.1} parent=1 // pred_check
      _
    $region143: #{domfn_forward.1} parent=1 // pred_check_branch
      %279 = sbr.rel (0) target = $region145
    $region144: #{domfn_forward.1} parent=1 // pred_region
      %280 = dma.done [#allocation8], 64
    $region145: #{domfn_forward.1} parent=1 // pred_fallthru
      _
    // Predicated region
    $region146: #{domfn_forward.1} parent=1 // pred_check
      _
    $region147: #{domfn_forward.1} parent=1 // pred_check_branch
      %282 = sbr.rel (0) target = $region149
    $region148: #{domfn_forward.1} parent=1 // pred_region
      %283 = dma.done [#allocation8], 8192
    $region149: #{domfn_forward.1} parent=1 // pred_fallthru
      _
    // Predicated region
    $region150: #{domfn_forward.1} parent=1 // pred_check
      _
    $region151: #{domfn_forward.1} parent=1 // pred_check_branch
      %285 = sbr.rel (0) target = $region153
    $region152: #{domfn_forward.1} parent=1 // pred_region
      %286 = dma.done [#allocation11], 32
    $region153: #{domfn_forward.1} parent=1 // pred_fallthru
      _
    // Predicated region
    $region154: #{domfn_forward.1} parent=1 // pred_check
      _
    $region155: #{domfn_forward.1} parent=1 // pred_check_branch
      %288 = sbr.rel (0) target = $region157
    $region156: #{domfn_forward.1} parent=1 // pred_region
      %289 = dma.done [#allocation11], 16
    $region157: #{domfn_forward.1} parent=1 // pred_fallthru
      _
    // Predicated region
    $region158: #{domfn_forward.1} parent=1 // pred_check
      _
    $region159: #{domfn_forward.1} parent=1 // pred_check_branch
      %291 = sbr.rel (0) target = $region161
    $region160: #{domfn_forward.1} parent=1 // pred_region
      %292 = dma.done [#allocation14], 16
    $region161: #{domfn_forward.1} parent=1 // pred_fallthru
      _
    // Predicated region
    $region162: #{domfn_forward.1} parent=1 // pred_check
      _
    $region163: #{domfn_forward.1} parent=1 // pred_check_branch
      %294 = sbr.rel (0) target = $region165
    $region164: #{domfn_forward.1} parent=1 // pred_region
      %295 = dma.done [#allocation14], 64
    $region165: #{domfn_forward.1} parent=1 // pred_fallthru
      _
    // Predicated region
    $region166: #{domfn_forward.1} parent=1 // pred_check
      _
    $region167: #{domfn_forward.1} parent=1 // pred_check_branch
      %297 = sbr.rel (0) target = $region169
    $region168: #{domfn_forward.1} parent=1 // pred_region
      %298 = dma.done [#allocation17], 8192
    $region169: #{domfn_forward.1} parent=1 // pred_fallthru
      _
    // Predicated region
    $region170: #{domfn_forward.1} parent=1 // pred_check
      _
    $region171: #{domfn_forward.1} parent=1 // pred_check_branch
      %300 = sbr.rel (0) target = $region173
    $region172: #{domfn_forward.1} parent=1 // pred_region
      %301 = dma.done [#allocation17], 32
    $region173: #{domfn_forward.1} parent=1 // pred_fallthru
      _
    // Predicated region
    $region174: #{domfn_forward.1} parent=1 // pred_check
      _
    $region175: #{domfn_forward.1} parent=1 // pred_check_branch
      %303 = sbr.rel (0) target = $region177
    $region176: #{domfn_forward.1} parent=1 // pred_region
      %304 = dma.done [#allocation20], 16
    $region177: #{domfn_forward.1} parent=1 // pred_fallthru
      _
    // Predicated region
    $region178: #{domfn_forward.1} parent=1 // pred_check
      _
    $region179: #{domfn_forward.1} parent=1 // pred_check_branch
      %306 = sbr.rel (0) target = $region181
    $region180: #{domfn_forward.1} parent=1 // pred_region
      %307 = dma.done [#allocation20], 16
    $region181: #{domfn_forward.1} parent=1 // pred_fallthru
      _
    // Predicated region
    $region182: #{domfn_forward.1} parent=1 // pred_check
      _
    $region183: #{domfn_forward.1} parent=1 // pred_check_branch
      %309 = sbr.rel (0) target = $region185
    $region184: #{domfn_forward.1} parent=1 // pred_region
      %310 = dma.done [#allocation23], 16
    $region185: #{domfn_forward.1} parent=1 // pred_fallthru
      _
    // Predicated region
    $region186: #{domfn_forward.1} parent=1 // pred_check
      _
    $region187: #{domfn_forward.1} parent=1 // pred_check_branch
      %312 = sbr.rel (0) target = $region189
    $region188: #{domfn_forward.1} parent=1 // pred_region
      %313 = dma.done [#allocation23], 16
    $region189: #{domfn_forward.1} parent=1 // pred_fallthru
      _
    %v315 = vld [vmem:[%s7] sm:$0xff]
    %v316 = vld [vmem:[%s1] sm:$0xf]
    %v317 = vld [vmem:[%s9] sm:$0xff]
    %v318 = vld [vmem:[%s9 + $0x8] sm:$0xff]
    %v319 = vld [vmem:[%s9 + $0x10] sm:$0xff]
    %v320 = vld [vmem:[%s9 + $0x18] sm:$0xff]
    %v321 = vld [vmem:[%s9 + $0x20] sm:$0xff]
    %v322 = vld [vmem:[%s9 + $0x28] sm:$0xff]
    %v323 = vld [vmem:[%s9 + $0x30] sm:$0xff]
    %v324 = vld [vmem:[%s9 + $0x38] sm:$0xff]
    %v325 = vld [vmem:[#allocation2] sm:$0xf]
    %v327 = vlaneseq
    %v328 = vshrl.u32 %v327, 7
    %v329 = vsub.s32 0, %v328
    %v330 = vrot.slane %v325, %v329
    %v331 = vlaneseq
    %v332 = vshrl.u32 %v331, 7
    %v333 = vsub.s32 1, %v332
    %v334 = vrot.slane %v325, %v333
    %v335 = vlaneseq
    %v336 = vshrl.u32 %v335, 7
    %v337 = vsub.s32 2, %v336
    %v338 = vrot.slane %v325, %v337
    %v339 = vlaneseq
    %v340 = vshrl.u32 %v339, 7
    %v341 = vsub.s32 3, %v340
    %v342 = vrot.slane %v325, %v341
    %v355 = vunpack.c.l.b16 %v317
    %v356 = vunpack.c.h.b16 %v317
    %v357 = vunpack.c.l.b16 %v318
    %v358 = vunpack.c.h.b16 %v318
    %v359 = vunpack.c.l.b16 %v319
    %v360 = vunpack.c.h.b16 %v319
    %v361 = vunpack.c.l.b16 %v320
    %v362 = vunpack.c.h.b16 %v320
    %v363 = vunpack.c.l.b16 %v321
    %v364 = vunpack.c.h.b16 %v321
    %v365 = vunpack.c.l.b16 %v322
    %v366 = vunpack.c.h.b16 %v322
    %v367 = vunpack.c.l.b16 %v323
    %v368 = vunpack.c.h.b16 %v323
    %v369 = vunpack.c.l.b16 %v324
    %v370 = vunpack.c.h.b16 %v324
    %v371 = vpack.c.b16 %v359, %v355
    %v372 = vpack.c.b16 %v360, %v356
    %v373 = vpack.c.b16 %v361, %v357
    %v374 = vpack.c.b16 %v362, %v358
    %v375 = vpack.c.b16 %v367, %v363
    %v376 = vpack.c.b16 %v368, %v364
    %v377 = vpack.c.b16 %v369, %v365
    %v378 = vpack.c.b16 %v370, %v366
    %vm387 = vcmask 261120
    %v389 = vsel %vm387, %v316, 0
    %391 = vmatprep.subr.bf16.mxu0 %v372
    %392 = vmatpush1.bf16.msra.mxu0 %v371
    %393 = vmatprep.subr.bf16.mxu0 %v376
    %394 = vmatpush1.bf16.msra.mxu0 %v375
    %395 = vmatprep.subr.bf16.mxu0 0
    %396 = vmatpush1.bf16.msra.mxu0 0
    %397 = vmatprep.subr.bf16.mxu0 0
    %398 = vmatpush1.bf16.msra.mxu0 0
    %399 = vmatprep.subr.bf16.mxu0 0
    %400 = vmatpush1.bf16.msra.mxu0 0
    %401 = vmatprep.subr.bf16.mxu0 0
    %402 = vmatpush1.bf16.msra.mxu0 0
    %403 = vmatprep.subr.bf16.mxu0 0
    %404 = vmatpush1.bf16.msra.mxu0 0
    %405 = vmatprep.subr.bf16.mxu0 0
    %406 = vmatpush1.bf16.msra.mxu0 0
    %407 = vmatprep.subr.bf16.mxu0 0
    %408 = vmatpush1.bf16.msra.mxu0 0
    %409 = vmatprep.subr.bf16.mxu0 0
    %410 = vmatpush1.bf16.msra.mxu0 0
    %411 = vmatprep.subr.bf16.mxu0 0
    %412 = vmatpush1.bf16.msra.mxu0 0
    %413 = vmatprep.subr.bf16.mxu0 0
    %414 = vmatpush1.bf16.msra.mxu0 0
    %415 = vmatprep.subr.bf16.mxu0 0
    %416 = vmatpush1.bf16.msra.mxu0 0
    %417 = vmatprep.subr.bf16.mxu0 0
    %418 = vmatpush1.bf16.msra.mxu0 0
    %419 = vmatprep.subr.bf16.mxu0 0
    %420 = vmatpush1.bf16.msra.mxu0 0
    %421 = vmatprep.subr.bf16.mxu0 0
    %422 = vmatpush1.bf16.msra.mxu0 0
    %423 = vmatprep.mubr.bf16.mxu0 0
    %424 = vmatmul.mubr.bf16.gmra.mrb[0].mxu0 %v389
    %v425 = vpop.f32.mrb[0].mxu0
    %v426 = vadd.f32 %v330, %v425
    %v427 = vpop.f32.mrb[0].mxu0
    %v428 = vadd.f32 %v334, %v427
    %v429 = vpop.f32.mrb[0].mxu0
    %v430 = vpop.f32.mrb[0].mxu0
    %431 = vdwg.mxu0
    %432 = vmatprep.subr.bf16.mxu0 %v374
    %433 = vmatpush1.bf16.msra.mxu0 %v373
    %434 = vmatprep.subr.bf16.mxu0 %v378
    %435 = vmatpush1.bf16.msra.mxu0 %v377
    %436 = vmatprep.subr.bf16.mxu0 0
    %437 = vmatpush1.bf16.msra.mxu0 0
    %438 = vmatprep.subr.bf16.mxu0 0
    %439 = vmatpush1.bf16.msra.mxu0 0
    %440 = vmatprep.subr.bf16.mxu0 0
    %441 = vmatpush1.bf16.msra.mxu0 0
    %442 = vmatprep.subr.bf16.mxu0 0
    %443 = vmatpush1.bf16.msra.mxu0 0
    %444 = vmatprep.subr.bf16.mxu0 0
    %445 = vmatpush1.bf16.msra.mxu0 0
    %446 = vmatprep.subr.bf16.mxu0 0
    %447 = vmatpush1.bf16.msra.mxu0 0
    %448 = vmatprep.subr.bf16.mxu0 0
    %449 = vmatpush1.bf16.msra.mxu0 0
    %450 = vmatprep.subr.bf16.mxu0 0
    %451 = vmatpush1.bf16.msra.mxu0 0
    %452 = vmatprep.subr.bf16.mxu0 0
    %453 = vmatpush1.bf16.msra.mxu0 0
    %454 = vmatprep.subr.bf16.mxu0 0
    %455 = vmatpush1.bf16.msra.mxu0 0
    %456 = vmatprep.subr.bf16.mxu0 0
    %457 = vmatpush1.bf16.msra.mxu0 0
    %458 = vmatprep.subr.bf16.mxu0 0
    %459 = vmatpush1.bf16.msra.mxu0 0
    %460 = vmatprep.subr.bf16.mxu0 0
    %461 = vmatpush1.bf16.msra.mxu0 0
    %462 = vmatprep.subr.bf16.mxu0 0
    %463 = vmatpush1.bf16.msra.mxu0 0
    %464 = vmatprep.mubr.bf16.mxu0 0
    %465 = vmatmul.mubr.bf16.gmra.mrb[0].mxu0 %v389
    %v466 = vpop.f32.mrb[0].mxu0
    %v467 = vadd.f32 %v338, %v466
    %v468 = vpop.f32.mrb[0].mxu0
    %v469 = vadd.f32 %v342, %v468
    %v470 = vpop.f32.mrb[0].mxu0
    %v471 = vpop.f32.mrb[0].mxu0
    %472 = vdwg.mxu0
    %v473 = vmax.f32 %v426, 0.0
    %v474 = vmax.f32 %v428, 0.0
    %v475 = vmax.f32 %v467, 0.0
    %v476 = vmax.f32 %v469, 0.0
    %v477 = vpack.c.bf16 %v473, %v473
    %v478 = vpack.c.bf16 %v474, %v474
    %v479 = vpack.c.bf16 %v475, %v475
    %v480 = vpack.c.bf16 %v476, %v476
    %v481 = vld [vmem:[%s13] sm:$0xff]
    %v482 = vld [vmem:[%s13 + $0x8] sm:$0xff]
    %v483 = vld [vmem:[%s13 + $0x10] sm:$0xff]
    %v484 = vld [vmem:[%s13 + $0x18] sm:$0xff]
    %v485 = vld [vmem:[%s13 + $0x20] sm:$0xff]
    %v486 = vld [vmem:[%s13 + $0x28] sm:$0xff]
    %v487 = vld [vmem:[%s13 + $0x30] sm:$0xff]
    %v488 = vld [vmem:[%s13 + $0x38] sm:$0xff]
    %v489 = vld [vmem:[%s13 + $0x40] sm:$0xff]
    %v490 = vld [vmem:[%s13 + $0x48] sm:$0xff]
    %v491 = vld [vmem:[%s13 + $0x50] sm:$0xff]
    %v492 = vld [vmem:[%s13 + $0x58] sm:$0xff]
    %v493 = vld [vmem:[%s13 + $0x60] sm:$0xff]
    %v494 = vld [vmem:[%s13 + $0x68] sm:$0xff]
    %v495 = vld [vmem:[%s13 + $0x70] sm:$0xff]
    %v496 = vld [vmem:[%s13 + $0x78] sm:$0xff]
    %v497 = vld [vmem:[%s13 + $0x80] sm:$0xff]
    %v498 = vld [vmem:[%s13 + $0x88] sm:$0xff]
    %v499 = vld [vmem:[%s13 + $0x90] sm:$0xff]
    %v500 = vld [vmem:[%s13 + $0x98] sm:$0xff]
    %v501 = vld [vmem:[%s13 + $0xa0] sm:$0xff]
    %v502 = vld [vmem:[%s13 + $0xa8] sm:$0xff]
    %v503 = vld [vmem:[%s13 + $0xb0] sm:$0xff]
    %v504 = vld [vmem:[%s13 + $0xb8] sm:$0xff]
    %v505 = vld [vmem:[%s13 + $0xc0] sm:$0xff]
    %v506 = vld [vmem:[%s13 + $0xc8] sm:$0xff]
    %v507 = vld [vmem:[%s13 + $0xd0] sm:$0xff]
    %v508 = vld [vmem:[%s13 + $0xd8] sm:$0xff]
    %v509 = vld [vmem:[%s13 + $0xe0] sm:$0xff]
    %v510 = vld [vmem:[%s13 + $0xe8] sm:$0xff]
    %v511 = vld [vmem:[%s13 + $0xf0] sm:$0xff]
    %v512 = vld [vmem:[%s13 + $0xf8] sm:$0xff]
    %v513 = vld [vmem:[%s13 + $0x100] sm:$0xff]
    %v514 = vld [vmem:[%s13 + $0x108] sm:$0xff]
    %v515 = vld [vmem:[%s13 + $0x110] sm:$0xff]
    %v516 = vld [vmem:[%s13 + $0x118] sm:$0xff]
    %v517 = vld [vmem:[%s13 + $0x120] sm:$0xff]
    %v518 = vld [vmem:[%s13 + $0x128] sm:$0xff]
    %v519 = vld [vmem:[%s13 + $0x130] sm:$0xff]
    %v520 = vld [vmem:[%s13 + $0x138] sm:$0xff]
    %v521 = vld [vmem:[%s13 + $0x140] sm:$0xff]
    %v522 = vld [vmem:[%s13 + $0x148] sm:$0xff]
    %v523 = vld [vmem:[%s13 + $0x150] sm:$0xff]
    %v524 = vld [vmem:[%s13 + $0x158] sm:$0xff]
    %v525 = vld [vmem:[%s13 + $0x160] sm:$0xff]
    %v526 = vld [vmem:[%s13 + $0x168] sm:$0xff]
    %v527 = vld [vmem:[%s13 + $0x170] sm:$0xff]
    %v528 = vld [vmem:[%s13 + $0x178] sm:$0xff]
    %v529 = vld [vmem:[%s13 + $0x180] sm:$0xff]
    %v530 = vld [vmem:[%s13 + $0x188] sm:$0xff]
    %v531 = vld [vmem:[%s13 + $0x190] sm:$0xff]
    %v532 = vld [vmem:[%s13 + $0x198] sm:$0xff]
    %v533 = vld [vmem:[%s13 + $0x1a0] sm:$0xff]
    %v534 = vld [vmem:[%s13 + $0x1a8] sm:$0xff]
    %v535 = vld [vmem:[%s13 + $0x1b0] sm:$0xff]
    %v536 = vld [vmem:[%s13 + $0x1b8] sm:$0xff]
    %v537 = vld [vmem:[%s13 + $0x1c0] sm:$0xff]
    %v538 = vld [vmem:[%s13 + $0x1c8] sm:$0xff]
    %v539 = vld [vmem:[%s13 + $0x1d0] sm:$0xff]
    %v540 = vld [vmem:[%s13 + $0x1d8] sm:$0xff]
    %v541 = vld [vmem:[%s13 + $0x1e0] sm:$0xff]
    %v542 = vld [vmem:[%s13 + $0x1e8] sm:$0xff]
    %v543 = vld [vmem:[%s13 + $0x1f0] sm:$0xff]
    %v544 = vld [vmem:[%s13 + $0x1f8] sm:$0xff]
    %v545 = vld [vmem:[#allocation4] sm:$0x3]
    %v547 = vlaneseq
    %v548 = vshrl.u32 %v547, 7
    %v549 = vsub.s32 0, %v548
    %v550 = vrot.slane %v545, %v549
    %v551 = vlaneseq
    %v552 = vshrl.u32 %v551, 7
    %v553 = vsub.s32 1, %v552
    %v554 = vrot.slane %v545, %v553
    %v621 = vunpack.c.l.b16 %v481
    %v622 = vunpack.c.h.b16 %v481
    %v623 = vunpack.c.l.b16 %v482
    %v624 = vunpack.c.h.b16 %v482
    %v625 = vunpack.c.l.b16 %v483
    %v626 = vunpack.c.h.b16 %v483
    %v627 = vunpack.c.l.b16 %v484
    %v628 = vunpack.c.h.b16 %v484
    %v629 = vunpack.c.l.b16 %v485
    %v630 = vunpack.c.h.b16 %v485
    %v631 = vunpack.c.l.b16 %v486
    %v632 = vunpack.c.h.b16 %v486
    %v633 = vunpack.c.l.b16 %v487
    %v634 = vunpack.c.h.b16 %v487
    %v635 = vunpack.c.l.b16 %v488
    %v636 = vunpack.c.h.b16 %v488
    %v637 = vunpack.c.l.b16 %v489
    %v638 = vunpack.c.h.b16 %v489
    %v639 = vunpack.c.l.b16 %v490
    %v640 = vunpack.c.h.b16 %v490
    %v641 = vunpack.c.l.b16 %v491
    %v642 = vunpack.c.h.b16 %v491
    %v643 = vunpack.c.l.b16 %v492
    %v644 = vunpack.c.h.b16 %v492
    %v645 = vunpack.c.l.b16 %v493
    %v646 = vunpack.c.h.b16 %v493
    %v647 = vunpack.c.l.b16 %v494
    %v648 = vunpack.c.h.b16 %v494
    %v649 = vunpack.c.l.b16 %v495
    %v650 = vunpack.c.h.b16 %v495
    %v651 = vunpack.c.l.b16 %v496
    %v652 = vunpack.c.h.b16 %v496
    %v653 = vunpack.c.l.b16 %v497
    %v654 = vunpack.c.h.b16 %v497
    %v655 = vunpack.c.l.b16 %v498
    %v656 = vunpack.c.h.b16 %v498
    %v657 = vunpack.c.l.b16 %v499
    %v658 = vunpack.c.h.b16 %v499
    %v659 = vunpack.c.l.b16 %v500
    %v660 = vunpack.c.h.b16 %v500
    %v661 = vunpack.c.l.b16 %v501
    %v662 = vunpack.c.h.b16 %v501
    %v663 = vunpack.c.l.b16 %v502
    %v664 = vunpack.c.h.b16 %v502
    %v665 = vunpack.c.l.b16 %v503
    %v666 = vunpack.c.h.b16 %v503
    %v667 = vunpack.c.l.b16 %v504
    %v668 = vunpack.c.h.b16 %v504
    %v669 = vunpack.c.l.b16 %v505
    %v670 = vunpack.c.h.b16 %v505
    %v671 = vunpack.c.l.b16 %v506
    %v672 = vunpack.c.h.b16 %v506
    %v673 = vunpack.c.l.b16 %v507
    %v674 = vunpack.c.h.b16 %v507
    %v675 = vunpack.c.l.b16 %v508
    %v676 = vunpack.c.h.b16 %v508
    %v677 = vunpack.c.l.b16 %v509
    %v678 = vunpack.c.h.b16 %v509
    %v679 = vunpack.c.l.b16 %v510
    %v680 = vunpack.c.h.b16 %v510
    %v681 = vunpack.c.l.b16 %v511
    %v682 = vunpack.c.h.b16 %v511
    %v683 = vunpack.c.l.b16 %v512
    %v684 = vunpack.c.h.b16 %v512
    %v685 = vunpack.c.l.b16 %v513
    %v686 = vunpack.c.h.b16 %v513
    %v687 = vunpack.c.l.b16 %v514
    %v688 = vunpack.c.h.b16 %v514
    %v689 = vunpack.c.l.b16 %v515
    %v690 = vunpack.c.h.b16 %v515
    %v691 = vunpack.c.l.b16 %v516
    %v692 = vunpack.c.h.b16 %v516
    %v693 = vunpack.c.l.b16 %v517
    %v694 = vunpack.c.h.b16 %v517
    %v695 = vunpack.c.l.b16 %v518
    %v696 = vunpack.c.h.b16 %v518
    %v697 = vunpack.c.l.b16 %v519
    %v698 = vunpack.c.h.b16 %v519
    %v699 = vunpack.c.l.b16 %v520
    %v700 = vunpack.c.h.b16 %v520
    %v701 = vunpack.c.l.b16 %v521
    %v702 = vunpack.c.h.b16 %v521
    %v703 = vunpack.c.l.b16 %v522
    %v704 = vunpack.c.h.b16 %v522
    %v705 = vunpack.c.l.b16 %v523
    %v706 = vunpack.c.h.b16 %v523
    %v707 = vunpack.c.l.b16 %v524
    %v708 = vunpack.c.h.b16 %v524
    %v709 = vunpack.c.l.b16 %v525
    %v710 = vunpack.c.h.b16 %v525
    %v711 = vunpack.c.l.b16 %v526
    %v712 = vunpack.c.h.b16 %v526
    %v713 = vunpack.c.l.b16 %v527
    %v714 = vunpack.c.h.b16 %v527
    %v715 = vunpack.c.l.b16 %v528
    %v716 = vunpack.c.h.b16 %v528
    %v717 = vunpack.c.l.b16 %v529
    %v718 = vunpack.c.h.b16 %v529
    %v719 = vunpack.c.l.b16 %v530
    %v720 = vunpack.c.h.b16 %v530
    %v721 = vunpack.c.l.b16 %v531
    %v722 = vunpack.c.h.b16 %v531
    %v723 = vunpack.c.l.b16 %v532
    %v724 = vunpack.c.h.b16 %v532
    %v725 = vunpack.c.l.b16 %v533
    %v726 = vunpack.c.h.b16 %v533
    %v727 = vunpack.c.l.b16 %v534
    %v728 = vunpack.c.h.b16 %v534
    %v729 = vunpack.c.l.b16 %v535
    %v730 = vunpack.c.h.b16 %v535
    %v731 = vunpack.c.l.b16 %v536
    %v732 = vunpack.c.h.b16 %v536
    %v733 = vunpack.c.l.b16 %v537
    %v734 = vunpack.c.h.b16 %v537
    %v735 = vunpack.c.l.b16 %v538
    %v736 = vunpack.c.h.b16 %v538
    %v737 = vunpack.c.l.b16 %v539
    %v738 = vunpack.c.h.b16 %v539
    %v739 = vunpack.c.l.b16 %v540
    %v740 = vunpack.c.h.b16 %v540
    %v741 = vunpack.c.l.b16 %v541
    %v742 = vunpack.c.h.b16 %v541
    %v743 = vunpack.c.l.b16 %v542
    %v744 = vunpack.c.h.b16 %v542
    %v745 = vunpack.c.l.b16 %v543
    %v746 = vunpack.c.h.b16 %v543
    %v747 = vunpack.c.l.b16 %v544
    %v748 = vunpack.c.h.b16 %v544
    %v749 = vpack.c.b16 %v623, %v621
    %v750 = vpack.c.b16 %v624, %v622
    %v751 = vpack.c.b16 %v627, %v625
    %v752 = vpack.c.b16 %v628, %v626
    %v753 = vpack.c.b16 %v631, %v629
    %v754 = vpack.c.b16 %v632, %v630
    %v755 = vpack.c.b16 %v635, %v633
    %v756 = vpack.c.b16 %v636, %v634
    %v757 = vpack.c.b16 %v639, %v637
    %v758 = vpack.c.b16 %v640, %v638
    %v759 = vpack.c.b16 %v643, %v641
    %v760 = vpack.c.b16 %v644, %v642
    %v761 = vpack.c.b16 %v647, %v645
    %v762 = vpack.c.b16 %v648, %v646
    %v763 = vpack.c.b16 %v651, %v649
    %v764 = vpack.c.b16 %v652, %v650
    %v765 = vpack.c.b16 %v655, %v653
    %v766 = vpack.c.b16 %v656, %v654
    %v767 = vpack.c.b16 %v659, %v657
    %v768 = vpack.c.b16 %v660, %v658
    %v769 = vpack.c.b16 %v663, %v661
    %v770 = vpack.c.b16 %v664, %v662
    %v771 = vpack.c.b16 %v667, %v665
    %v772 = vpack.c.b16 %v668, %v666
    %v773 = vpack.c.b16 %v671, %v669
    %v774 = vpack.c.b16 %v672, %v670
    %v775 = vpack.c.b16 %v675, %v673
    %v776 = vpack.c.b16 %v676, %v674
    %v777 = vpack.c.b16 %v679, %v677
    %v778 = vpack.c.b16 %v680, %v678
    %v779 = vpack.c.b16 %v683, %v681
    %v780 = vpack.c.b16 %v684, %v682
    %v781 = vpack.c.b16 %v687, %v685
    %v782 = vpack.c.b16 %v688, %v686
    %v783 = vpack.c.b16 %v691, %v689
    %v784 = vpack.c.b16 %v692, %v690
    %v785 = vpack.c.b16 %v695, %v693
    %v786 = vpack.c.b16 %v696, %v694
    %v787 = vpack.c.b16 %v699, %v697
    %v788 = vpack.c.b16 %v700, %v698
    %v789 = vpack.c.b16 %v703, %v701
    %v790 = vpack.c.b16 %v704, %v702
    %v791 = vpack.c.b16 %v707, %v705
    %v792 = vpack.c.b16 %v708, %v706
    %v793 = vpack.c.b16 %v711, %v709
    %v794 = vpack.c.b16 %v712, %v710
    %v795 = vpack.c.b16 %v715, %v713
    %v796 = vpack.c.b16 %v716, %v714
    %v797 = vpack.c.b16 %v719, %v717
    %v798 = vpack.c.b16 %v720, %v718
    %v799 = vpack.c.b16 %v723, %v721
    %v800 = vpack.c.b16 %v724, %v722
    %v801 = vpack.c.b16 %v727, %v725
    %v802 = vpack.c.b16 %v728, %v726
    %v803 = vpack.c.b16 %v731, %v729
    %v804 = vpack.c.b16 %v732, %v730
    %v805 = vpack.c.b16 %v735, %v733
    %v806 = vpack.c.b16 %v736, %v734
    %v807 = vpack.c.b16 %v739, %v737
    %v808 = vpack.c.b16 %v740, %v738
    %v809 = vpack.c.b16 %v743, %v741
    %v810 = vpack.c.b16 %v744, %v742
    %v811 = vpack.c.b16 %v747, %v745
    %v812 = vpack.c.b16 %v748, %v746
    %877 = vmatprep.subr.bf16.mxu0 %v750
    %878 = vmatpush1.bf16.msra.mxu0 %v749
    %879 = vmatprep.subr.bf16.mxu0 %v752
    %880 = vmatpush1.bf16.msra.mxu0 %v751
    %881 = vmatprep.subr.bf16.mxu0 %v754
    %882 = vmatpush1.bf16.msra.mxu0 %v753
    %883 = vmatprep.subr.bf16.mxu0 %v756
    %884 = vmatpush1.bf16.msra.mxu0 %v755
    %885 = vmatprep.subr.bf16.mxu0 %v758
    %886 = vmatpush1.bf16.msra.mxu0 %v757
    %887 = vmatprep.subr.bf16.mxu0 %v760
    %888 = vmatpush1.bf16.msra.mxu0 %v759
    %889 = vmatprep.subr.bf16.mxu0 %v762
    %890 = vmatpush1.bf16.msra.mxu0 %v761
    %891 = vmatprep.subr.bf16.mxu0 %v764
    %892 = vmatpush1.bf16.msra.mxu0 %v763
    %893 = vmatprep.subr.bf16.mxu0 %v766
    %894 = vmatpush1.bf16.msra.mxu0 %v765
    %895 = vmatprep.subr.bf16.mxu0 %v768
    %896 = vmatpush1.bf16.msra.mxu0 %v767
    %897 = vmatprep.subr.bf16.mxu0 %v770
    %898 = vmatpush1.bf16.msra.mxu0 %v769
    %899 = vmatprep.subr.bf16.mxu0 %v772
    %900 = vmatpush1.bf16.msra.mxu0 %v771
    %901 = vmatprep.subr.bf16.mxu0 %v774
    %902 = vmatpush1.bf16.msra.mxu0 %v773
    %903 = vmatprep.subr.bf16.mxu0 %v776
    %904 = vmatpush1.bf16.msra.mxu0 %v775
    %905 = vmatprep.subr.bf16.mxu0 %v778
    %906 = vmatpush1.bf16.msra.mxu0 %v777
    %907 = vmatprep.subr.bf16.mxu0 %v780
    %908 = vmatpush1.bf16.msra.mxu0 %v779
    %909 = vmatprep.mubr.bf16.mxu0 %v478
    %910 = vmatmul.mubr.bf16.gmra.mrb[0].mxu0 %v477
    %v911 = vpop.f32.mrb[0].mxu0
    %v912 = vadd.f32 %v550, %v911
    %v913 = vpop.f32.mrb[0].mxu0
    %v914 = vadd.f32 %v554, %v913
    %v915 = vpop.f32.mrb[0].mxu0
    %v916 = vpop.f32.mrb[0].mxu0
    %917 = vdwg.mxu0
    %918 = vmatprep.subr.bf16.mxu0 %v782
    %919 = vmatpush1.bf16.msra.mxu0 %v781
    %920 = vmatprep.subr.bf16.mxu0 %v784
    %921 = vmatpush1.bf16.msra.mxu0 %v783
    %922 = vmatprep.subr.bf16.mxu0 %v786
    %923 = vmatpush1.bf16.msra.mxu0 %v785
    %924 = vmatprep.subr.bf16.mxu0 %v788
    %925 = vmatpush1.bf16.msra.mxu0 %v787
    %926 = vmatprep.subr.bf16.mxu0 %v790
    %927 = vmatpush1.bf16.msra.mxu0 %v789
    %928 = vmatprep.subr.bf16.mxu0 %v792
    %929 = vmatpush1.bf16.msra.mxu0 %v791
    %930 = vmatprep.subr.bf16.mxu0 %v794
    %931 = vmatpush1.bf16.msra.mxu0 %v793
    %932 = vmatprep.subr.bf16.mxu0 %v796
    %933 = vmatpush1.bf16.msra.mxu0 %v795
    %934 = vmatprep.subr.bf16.mxu0 %v798
    %935 = vmatpush1.bf16.msra.mxu0 %v797
    %936 = vmatprep.subr.bf16.mxu0 %v800
    %937 = vmatpush1.bf16.msra.mxu0 %v799
    %938 = vmatprep.subr.bf16.mxu0 %v802
    %939 = vmatpush1.bf16.msra.mxu0 %v801
    %940 = vmatprep.subr.bf16.mxu0 %v804
    %941 = vmatpush1.bf16.msra.mxu0 %v803
    %942 = vmatprep.subr.bf16.mxu0 %v806
    %943 = vmatpush1.bf16.msra.mxu0 %v805
    %944 = vmatprep.subr.bf16.mxu0 %v808
    %945 = vmatpush1.bf16.msra.mxu0 %v807
    %946 = vmatprep.subr.bf16.mxu0 %v810
    %947 = vmatpush1.bf16.msra.mxu0 %v809
    %948 = vmatprep.subr.bf16.mxu0 %v812
    %949 = vmatpush1.bf16.msra.mxu0 %v811
    %950 = vmatprep.mubr.bf16.mxu0 %v480
    %951 = vmatmul.mubr.bf16.gmra.mrb[0].mxu0 %v479
    %v952 = vpop.f32.mrb[0].mxu0
    %v953 = vadd.f32 %v912, %v952
    %v954 = vpop.f32.mrb[0].mxu0
    %v955 = vadd.f32 %v914, %v954
    %v956 = vpop.f32.mrb[0].mxu0
    %v957 = vpop.f32.mrb[0].mxu0
    %958 = vdwg.mxu0
    %v959 = vmax.f32 %v953, 0.0
    %v960 = vmax.f32 %v955, 0.0
    %v961 = vpack.c.bf16 %v959, %v959
    %v962 = vpack.c.bf16 %v960, %v960
    %v963 = vld [vmem:[%s17] sm:$0xf]
    %v964 = vld [vmem:[%s17 + $0x4] sm:$0xf]
    %v965 = vld [vmem:[%s17 + $0x8] sm:$0xf]
    %v966 = vld [vmem:[%s17 + $0xc] sm:$0xf]
    %v967 = vld [vmem:[%s17 + $0x10] sm:$0xf]
    %v968 = vld [vmem:[%s17 + $0x14] sm:$0xf]
    %v969 = vld [vmem:[%s17 + $0x18] sm:$0xf]
    %v970 = vld [vmem:[%s17 + $0x1c] sm:$0xf]
    %v971 = vld [vmem:[%s17 + $0x20] sm:$0xf]
    %v972 = vld [vmem:[%s17 + $0x24] sm:$0xf]
    %v973 = vld [vmem:[%s17 + $0x28] sm:$0xf]
    %v974 = vld [vmem:[%s17 + $0x2c] sm:$0xf]
    %v975 = vld [vmem:[%s17 + $0x30] sm:$0xf]
    %v976 = vld [vmem:[%s17 + $0x34] sm:$0xf]
    %v977 = vld [vmem:[%s17 + $0x38] sm:$0xf]
    %v978 = vld [vmem:[%s17 + $0x3c] sm:$0xf]
    %v979 = vld [vmem:[%s17 + $0x40] sm:$0xf]
    %v980 = vld [vmem:[%s17 + $0x44] sm:$0xf]
    %v981 = vld [vmem:[%s17 + $0x48] sm:$0xf]
    %v982 = vld [vmem:[%s17 + $0x4c] sm:$0xf]
    %v983 = vld [vmem:[%s17 + $0x50] sm:$0xf]
    %v984 = vld [vmem:[%s17 + $0x54] sm:$0xf]
    %v985 = vld [vmem:[%s17 + $0x58] sm:$0xf]
    %v986 = vld [vmem:[%s17 + $0x5c] sm:$0xf]
    %v987 = vld [vmem:[%s17 + $0x60] sm:$0xf]
    %v988 = vld [vmem:[%s17 + $0x64] sm:$0xf]
    %v989 = vld [vmem:[%s17 + $0x68] sm:$0xf]
    %v990 = vld [vmem:[%s17 + $0x6c] sm:$0xf]
    %v991 = vld [vmem:[%s17 + $0x70] sm:$0xf]
    %v992 = vld [vmem:[%s17 + $0x74] sm:$0xf]
    %v993 = vld [vmem:[%s17 + $0x78] sm:$0xf]
    %v994 = vld [vmem:[%s17 + $0x7c] sm:$0xf]
    %v995 = vld [vmem:[%s19] sm:$0x1]
    %v997 = vlaneseq
    %v998 = vshrl.u32 %v997, 7
    %v999 = vsub.s32 0, %v998
    %v1000 = vrot.slane %v995, %v999
    %v1034 = vunpack.c.l.b16 %v963
    %v1035 = vunpack.c.l.b16 %v964
    %v1036 = vunpack.c.l.b16 %v965
    %v1037 = vunpack.c.l.b16 %v966
    %v1038 = vunpack.c.l.b16 %v967
    %v1039 = vunpack.c.l.b16 %v968
    %v1040 = vunpack.c.l.b16 %v969
    %v1041 = vunpack.c.l.b16 %v970
    %v1042 = vunpack.c.l.b16 %v971
    %v1043 = vunpack.c.l.b16 %v972
    %v1044 = vunpack.c.l.b16 %v973
    %v1045 = vunpack.c.l.b16 %v974
    %v1046 = vunpack.c.l.b16 %v975
    %v1047 = vunpack.c.l.b16 %v976
    %v1048 = vunpack.c.l.b16 %v977
    %v1049 = vunpack.c.l.b16 %v978
    %v1050 = vunpack.c.l.b16 %v979
    %v1051 = vunpack.c.l.b16 %v980
    %v1052 = vunpack.c.l.b16 %v981
    %v1053 = vunpack.c.l.b16 %v982
    %v1054 = vunpack.c.l.b16 %v983
    %v1055 = vunpack.c.l.b16 %v984
    %v1056 = vunpack.c.l.b16 %v985
    %v1057 = vunpack.c.l.b16 %v986
    %v1058 = vunpack.c.l.b16 %v987
    %v1059 = vunpack.c.l.b16 %v988
    %v1060 = vunpack.c.l.b16 %v989
    %v1061 = vunpack.c.l.b16 %v990
    %v1062 = vunpack.c.l.b16 %v991
    %v1063 = vunpack.c.l.b16 %v992
    %v1064 = vunpack.c.l.b16 %v993
    %v1065 = vunpack.c.l.b16 %v994
    %v1066 = vpack.c.b16 %v1035, %v1034
    %v1067 = vpack.c.b16 %v1037, %v1036
    %v1068 = vpack.c.b16 %v1039, %v1038
    %v1069 = vpack.c.b16 %v1041, %v1040
    %v1070 = vpack.c.b16 %v1043, %v1042
    %v1071 = vpack.c.b16 %v1045, %v1044
    %v1072 = vpack.c.b16 %v1047, %v1046
    %v1073 = vpack.c.b16 %v1049, %v1048
    %v1074 = vpack.c.b16 %v1051, %v1050
    %v1075 = vpack.c.b16 %v1053, %v1052
    %v1076 = vpack.c.b16 %v1055, %v1054
    %v1077 = vpack.c.b16 %v1057, %v1056
    %v1078 = vpack.c.b16 %v1059, %v1058
    %v1079 = vpack.c.b16 %v1061, %v1060
    %v1080 = vpack.c.b16 %v1063, %v1062
    %v1081 = vpack.c.b16 %v1065, %v1064
    %1098 = vmatprep.subr.bf16.mxu0 0
    %1099 = vmatpush1.bf16.msra.mxu0 %v1066
    %1100 = vmatprep.subr.bf16.mxu0 0
    %1101 = vmatpush1.bf16.msra.mxu0 %v1067
    %1102 = vmatprep.subr.bf16.mxu0 0
    %1103 = vmatpush1.bf16.msra.mxu0 %v1068
    %1104 = vmatprep.subr.bf16.mxu0 0
    %1105 = vmatpush1.bf16.msra.mxu0 %v1069
    %1106 = vmatprep.subr.bf16.mxu0 0
    %1107 = vmatpush1.bf16.msra.mxu0 %v1070
    %1108 = vmatprep.subr.bf16.mxu0 0
    %1109 = vmatpush1.bf16.msra.mxu0 %v1071
    %1110 = vmatprep.subr.bf16.mxu0 0
    %1111 = vmatpush1.bf16.msra.mxu0 %v1072
    %1112 = vmatprep.subr.bf16.mxu0 0
    %1113 = vmatpush1.bf16.msra.mxu0 %v1073
    %1114 = vmatprep.subr.bf16.mxu0 0
    %1115 = vmatpush1.bf16.msra.mxu0 %v1074
    %1116 = vmatprep.subr.bf16.mxu0 0
    %1117 = vmatpush1.bf16.msra.mxu0 %v1075
    %1118 = vmatprep.subr.bf16.mxu0 0
    %1119 = vmatpush1.bf16.msra.mxu0 %v1076
    %1120 = vmatprep.subr.bf16.mxu0 0
    %1121 = vmatpush1.bf16.msra.mxu0 %v1077
    %1122 = vmatprep.subr.bf16.mxu0 0
    %1123 = vmatpush1.bf16.msra.mxu0 %v1078
    %1124 = vmatprep.subr.bf16.mxu0 0
    %1125 = vmatpush1.bf16.msra.mxu0 %v1079
    %1126 = vmatprep.subr.bf16.mxu0 0
    %1127 = vmatpush1.bf16.msra.mxu0 %v1080
    %1128 = vmatprep.subr.bf16.mxu0 0
    %1129 = vmatpush1.bf16.msra.mxu0 %v1081
    %1130 = vmatprep.mubr.bf16.mxu0 %v962
    %1131 = vmatmul.mubr.bf16.gmra.mrb[0].mxu0 %v961
    %v1132 = vpop.f32.mrb[0].mxu0
    %v1133 = vadd.f32 %v1000, %v1132
    %v1134 = vpop.f32.mrb[0].mxu0
    %v1135 = vpop.f32.mrb[0].mxu0
    %v1136 = vpop.f32.mrb[0].mxu0
    %1137 = vdwg.mxu0
    %v1138 = vmax.f32 %v1133, 0.0
    %v1139 = vpack.c.bf16 %v1138, %v1138
    %v1140 = vld [vmem:[%s21] sm:$0xf]
    %v1141 = vld [vmem:[%s21 + $0x4] sm:$0xf]
    %v1142 = vld [vmem:[%s21 + $0x8] sm:$0xf]
    %v1143 = vld [vmem:[%s21 + $0xc] sm:$0xf]
    %v1144 = vld [vmem:[#allocation6] sm:$0x1]
    %v1146 = vlaneseq
    %v1147 = vshrl.u32 %v1146, 7
    %v1148 = vsub.s32 0, %v1147
    %v1149 = vrot.slane %v1144, %v1148
    %v1155 = vunpack.c.l.b16 %v1140
    %v1156 = vunpack.c.l.b16 %v1141
    %v1157 = vunpack.c.l.b16 %v1142
    %v1158 = vunpack.c.l.b16 %v1143
    %v1159 = vpack.c.b16 %v1156, %v1155
    %v1160 = vpack.c.b16 %v1158, %v1157
    %v1164 = vsel %vm387, %v1139, 0
    %1166 = vmatprep.subr.bf16.mxu0 0
    %1167 = vmatpush1.bf16.msra.mxu0 %v1159
    %1168 = vmatprep.subr.bf16.mxu0 0
    %1169 = vmatpush1.bf16.msra.mxu0 %v1160
    %1170 = vmatprep.subr.bf16.mxu0 0
    %1171 = vmatpush1.bf16.msra.mxu0 0
    %1172 = vmatprep.subr.bf16.mxu0 0
    %1173 = vmatpush1.bf16.msra.mxu0 0
    %1174 = vmatprep.subr.bf16.mxu0 0
    %1175 = vmatpush1.bf16.msra.mxu0 0
    %1176 = vmatprep.subr.bf16.mxu0 0
    %1177 = vmatpush1.bf16.msra.mxu0 0
    %1178 = vmatprep.subr.bf16.mxu0 0
    %1179 = vmatpush1.bf16.msra.mxu0 0
    %1180 = vmatprep.subr.bf16.mxu0 0
    %1181 = vmatpush1.bf16.msra.mxu0 0
    %1182 = vmatprep.subr.bf16.mxu0 0
    %1183 = vmatpush1.bf16.msra.mxu0 0
    %1184 = vmatprep.subr.bf16.mxu0 0
    %1185 = vmatpush1.bf16.msra.mxu0 0
    %1186 = vmatprep.subr.bf16.mxu0 0
    %1187 = vmatpush1.bf16.msra.mxu0 0
    %1188 = vmatprep.subr.bf16.mxu0 0
    %1189 = vmatpush1.bf16.msra.mxu0 0
    %1190 = vmatprep.subr.bf16.mxu0 0
    %1191 = vmatpush1.bf16.msra.mxu0 0
    %1192 = vmatprep.subr.bf16.mxu0 0
    %1193 = vmatpush1.bf16.msra.mxu0 0
    %1194 = vmatprep.subr.bf16.mxu0 0
    %1195 = vmatpush1.bf16.msra.mxu0 0
    %1196 = vmatprep.subr.bf16.mxu0 0
    %1197 = vmatpush1.bf16.msra.mxu0 0
    %1198 = vmatprep.mubr.bf16.mxu0 0
    %1199 = vmatmul.mubr.bf16.gmra.mrb[0].mxu0 %v1164
    %v1200 = vpop.f32.mrb[0].mxu0
    %v1201 = vadd.f32 %v1149, %v1200
    %v1202 = vpop.f32.mrb[0].mxu0
    %v1203 = vpop.f32.mrb[0].mxu0
    %v1204 = vpop.f32.mrb[0].mxu0
    %1205 = vdwg.mxu0
    %v1206 = vsub.f32 0.0, %v1201
    %v1207 = vmul.f32 %v1206, 1.442695
    %v1208 = vpow.pop %v1207
    %v1209 = vadd.f32 %v1208, 1.0
    %v1210 = vrcp.pop %v1209
    %v1211 = vld [vmem:[%s3] sm:$0xf]
    %v1212 = vld [vmem:[%s25] sm:$0xff]
    %v1213 = vld [vmem:[%s25 + $0x8] sm:$0xff]
    %v1214 = vld [vmem:[%s25 + $0x10] sm:$0xff]
    %v1215 = vld [vmem:[%s25 + $0x18] sm:$0xff]
    %v1216 = vld [vmem:[%s25 + $0x20] sm:$0xff]
    %v1217 = vld [vmem:[%s25 + $0x28] sm:$0xff]
    %v1218 = vld [vmem:[%s25 + $0x30] sm:$0xff]
    %v1219 = vld [vmem:[%s25 + $0x38] sm:$0xff]
    %v1220 = vld [vmem:[%s25 + $0x40] sm:$0xff]
    %v1221 = vld [vmem:[%s25 + $0x48] sm:$0xff]
    %v1222 = vld [vmem:[%s25 + $0x50] sm:$0xff]
    %v1223 = vld [vmem:[%s25 + $0x58] sm:$0xff]
    %v1224 = vld [vmem:[#allocation7] sm:$0xf]
    %v1226 = vlaneseq
    %v1227 = vshrl.u32 %v1226, 7
    %v1228 = vsub.s32 0, %v1227
    %v1229 = vrot.slane %v1224, %v1228
    %v1230 = vlaneseq
    %v1231 = vshrl.u32 %v1230, 7
    %v1232 = vsub.s32 1, %v1231
    %v1233 = vrot.slane %v1224, %v1232
    %v1234 = vlaneseq
    %v1235 = vshrl.u32 %v1234, 7
    %v1236 = vsub.s32 2, %v1235
    %v1237 = vrot.slane %v1224, %v1236
    %v1238 = vlaneseq
    %v1239 = vshrl.u32 %v1238, 7
    %v1240 = vsub.s32 3, %v1239
    %v1241 = vrot.slane %v1224, %v1240
    %v1258 = vunpack.c.l.b16 %v1212
    %v1259 = vunpack.c.h.b16 %v1212
    %v1260 = vunpack.c.l.b16 %v1213
    %v1261 = vunpack.c.h.b16 %v1213
    %v1262 = vunpack.c.l.b16 %v1214
    %v1263 = vunpack.c.h.b16 %v1214
    %v1264 = vunpack.c.l.b16 %v1215
    %v1265 = vunpack.c.h.b16 %v1215
    %v1266 = vunpack.c.l.b16 %v1216
    %v1267 = vunpack.c.h.b16 %v1216
    %v1268 = vunpack.c.l.b16 %v1217
    %v1269 = vunpack.c.h.b16 %v1217
    %v1270 = vunpack.c.l.b16 %v1218
    %v1271 = vunpack.c.h.b16 %v1218
    %v1272 = vunpack.c.l.b16 %v1219
    %v1273 = vunpack.c.h.b16 %v1219
    %v1274 = vunpack.c.l.b16 %v1220
    %v1275 = vunpack.c.h.b16 %v1220
    %v1276 = vunpack.c.l.b16 %v1221
    %v1277 = vunpack.c.h.b16 %v1221
    %v1278 = vunpack.c.l.b16 %v1222
    %v1279 = vunpack.c.h.b16 %v1222
    %v1280 = vunpack.c.l.b16 %v1223
    %v1281 = vunpack.c.h.b16 %v1223
    %v1282 = vpack.c.b16 %v1262, %v1258
    %v1283 = vpack.c.b16 %v1263, %v1259
    %v1284 = vpack.c.b16 %v1264, %v1260
    %v1285 = vpack.c.b16 %v1265, %v1261
    %v1286 = vpack.c.b16 %v1270, %v1266
    %v1287 = vpack.c.b16 %v1271, %v1267
    %v1288 = vpack.c.b16 %v1272, %v1268
    %v1289 = vpack.c.b16 %v1273, %v1269
    %v1290 = vpack.c.b16 %v1278, %v1274
    %v1291 = vpack.c.b16 %v1279, %v1275
    %v1292 = vpack.c.b16 %v1280, %v1276
    %v1293 = vpack.c.b16 %v1281, %v1277
    %vm1306 = vcmask 392192
    %v1308 = vsel %vm1306, %v1211, 0
    %1310 = vmatprep.subr.bf16.mxu0 %v1283
    %1311 = vmatpush1.bf16.msra.mxu0 %v1282
    %1312 = vmatprep.subr.bf16.mxu0 %v1287
    %1313 = vmatpush1.bf16.msra.mxu0 %v1286
    %1314 = vmatprep.subr.bf16.mxu0 %v1291
    %1315 = vmatpush1.bf16.msra.mxu0 %v1290
    %1316 = vmatprep.subr.bf16.mxu0 0
    %1317 = vmatpush1.bf16.msra.mxu0 0
    %1318 = vmatprep.subr.bf16.mxu0 0
    %1319 = vmatpush1.bf16.msra.mxu0 0
    %1320 = vmatprep.subr.bf16.mxu0 0
    %1321 = vmatpush1.bf16.msra.mxu0 0
    %1322 = vmatprep.subr.bf16.mxu0 0
    %1323 = vmatpush1.bf16.msra.mxu0 0
    %1324 = vmatprep.subr.bf16.mxu0 0
    %1325 = vmatpush1.bf16.msra.mxu0 0
    %1326 = vmatprep.subr.bf16.mxu0 0
    %1327 = vmatpush1.bf16.msra.mxu0 0
    %1328 = vmatprep.subr.bf16.mxu0 0
    %1329 = vmatpush1.bf16.msra.mxu0 0
    %1330 = vmatprep.subr.bf16.mxu0 0
    %1331 = vmatpush1.bf16.msra.mxu0 0
    %1332 = vmatprep.subr.bf16.mxu0 0
    %1333 = vmatpush1.bf16.msra.mxu0 0
    %1334 = vmatprep.subr.bf16.mxu0 0
    %1335 = vmatpush1.bf16.msra.mxu0 0
    %1336 = vmatprep.subr.bf16.mxu0 0
    %1337 = vmatpush1.bf16.msra.mxu0 0
    %1338 = vmatprep.subr.bf16.mxu0 0
    %1339 = vmatpush1.bf16.msra.mxu0 0
    %1340 = vmatprep.subr.bf16.mxu0 0
    %1341 = vmatpush1.bf16.msra.mxu0 0
    %1342 = vmatprep.mubr.bf16.mxu0 0
    %1343 = vmatmul.mubr.bf16.gmra.mrb[0].mxu0 %v1308
    %v1344 = vpop.f32.mrb[0].mxu0
    %v1345 = vadd.f32 %v1229, %v1344
    %v1346 = vpop.f32.mrb[0].mxu0
    %v1347 = vadd.f32 %v1233, %v1346
    %v1348 = vpop.f32.mrb[0].mxu0
    %v1349 = vpop.f32.mrb[0].mxu0
    %1350 = vdwg.mxu0
    %1351 = vmatprep.subr.bf16.mxu0 %v1285
    %1352 = vmatpush1.bf16.msra.mxu0 %v1284
    %1353 = vmatprep.subr.bf16.mxu0 %v1289
    %1354 = vmatpush1.bf16.msra.mxu0 %v1288
    %1355 = vmatprep.subr.bf16.mxu0 %v1293
    %1356 = vmatpush1.bf16.msra.mxu0 %v1292
    %1357 = vmatprep.subr.bf16.mxu0 0
    %1358 = vmatpush1.bf16.msra.mxu0 0
    %1359 = vmatprep.subr.bf16.mxu0 0
    %1360 = vmatpush1.bf16.msra.mxu0 0
    %1361 = vmatprep.subr.bf16.mxu0 0
    %1362 = vmatpush1.bf16.msra.mxu0 0
    %1363 = vmatprep.subr.bf16.mxu0 0
    %1364 = vmatpush1.bf16.msra.mxu0 0
    %1365 = vmatprep.subr.bf16.mxu0 0
    %1366 = vmatpush1.bf16.msra.mxu0 0
    %1367 = vmatprep.subr.bf16.mxu0 0
    %1368 = vmatpush1.bf16.msra.mxu0 0
    %1369 = vmatprep.subr.bf16.mxu0 0
    %1370 = vmatpush1.bf16.msra.mxu0 0
    %1371 = vmatprep.subr.bf16.mxu0 0
    %1372 = vmatpush1.bf16.msra.mxu0 0
    %1373 = vmatprep.subr.bf16.mxu0 0
    %1374 = vmatpush1.bf16.msra.mxu0 0
    %1375 = vmatprep.subr.bf16.mxu0 0
    %1376 = vmatpush1.bf16.msra.mxu0 0
    %1377 = vmatprep.subr.bf16.mxu0 0
    %1378 = vmatpush1.bf16.msra.mxu0 0
    %1379 = vmatprep.subr.bf16.mxu0 0
    %1380 = vmatpush1.bf16.msra.mxu0 0
    %1381 = vmatprep.subr.bf16.mxu0 0
    %1382 = vmatpush1.bf16.msra.mxu0 0
    %1383 = vmatprep.mubr.bf16.mxu0 0
    %1384 = vmatmul.mubr.bf16.gmra.mrb[0].mxu0 %v1308
    %v1385 = vpop.f32.mrb[0].mxu0
    %v1386 = vadd.f32 %v1237, %v1385
    %v1387 = vpop.f32.mrb[0].mxu0
    %v1388 = vadd.f32 %v1241, %v1387
    %v1389 = vpop.f32.mrb[0].mxu0
    %v1390 = vpop.f32.mrb[0].mxu0
    %1391 = vdwg.mxu0
    %v1392 = vmax.f32 %v1345, 0.0
    %v1393 = vmax.f32 %v1347, 0.0
    %v1394 = vmax.f32 %v1386, 0.0
    %v1395 = vmax.f32 %v1388, 0.0
    %v1396 = vpack.c.bf16 %v1392, %v1392
    %v1397 = vpack.c.bf16 %v1393, %v1393
    %v1398 = vpack.c.bf16 %v1394, %v1394
    %v1399 = vpack.c.bf16 %v1395, %v1395
    %v1400 = vld [vmem:[#allocation9] sm:$0xff]
    %v1401 = vld [vmem:[#allocation9 + $0x8] sm:$0xff]
    %v1402 = vld [vmem:[#allocation9 + $0x10] sm:$0xff]
    %v1403 = vld [vmem:[#allocation9 + $0x18] sm:$0xff]
    %v1404 = vld [vmem:[#allocation9 + $0x20] sm:$0xff]
    %v1405 = vld [vmem:[#allocation9 + $0x28] sm:$0xff]
    %v1406 = vld [vmem:[#allocation9 + $0x30] sm:$0xff]
    %v1407 = vld [vmem:[#allocation9 + $0x38] sm:$0xff]
    %v1408 = vld [vmem:[#allocation9 + $0x40] sm:$0xff]
    %v1409 = vld [vmem:[#allocation9 + $0x48] sm:$0xff]
    %v1410 = vld [vmem:[#allocation9 + $0x50] sm:$0xff]
    %v1411 = vld [vmem:[#allocation9 + $0x58] sm:$0xff]
    %v1412 = vld [vmem:[#allocation9 + $0x60] sm:$0xff]
    %v1413 = vld [vmem:[#allocation9 + $0x68] sm:$0xff]
    %v1414 = vld [vmem:[#allocation9 + $0x70] sm:$0xff]
    %v1415 = vld [vmem:[#allocation9 + $0x78] sm:$0xff]
    %v1416 = vld [vmem:[#allocation9 + $0x80] sm:$0xff]
    %v1417 = vld [vmem:[#allocation9 + $0x88] sm:$0xff]
    %v1418 = vld [vmem:[#allocation9 + $0x90] sm:$0xff]
    %v1419 = vld [vmem:[#allocation9 + $0x98] sm:$0xff]
    %v1420 = vld [vmem:[#allocation9 + $0xa0] sm:$0xff]
    %v1421 = vld [vmem:[#allocation9 + $0xa8] sm:$0xff]
    %v1422 = vld [vmem:[#allocation9 + $0xb0] sm:$0xff]
    %v1423 = vld [vmem:[#allocation9 + $0xb8] sm:$0xff]
    %v1424 = vld [vmem:[#allocation9 + $0xc0] sm:$0xff]
    %v1425 = vld [vmem:[#allocation9 + $0xc8] sm:$0xff]
    %v1426 = vld [vmem:[#allocation9 + $0xd0] sm:$0xff]
    %v1427 = vld [vmem:[#allocation9 + $0xd8] sm:$0xff]
    %v1428 = vld [vmem:[#allocation9 + $0xe0] sm:$0xff]
    %v1429 = vld [vmem:[#allocation9 + $0xe8] sm:$0xff]
    %v1430 = vld [vmem:[#allocation9 + $0xf0] sm:$0xff]
    %v1431 = vld [vmem:[#allocation9 + $0xf8] sm:$0xff]
    %v1432 = vld [vmem:[#allocation9 + $0x100] sm:$0xff]
    %v1433 = vld [vmem:[#allocation9 + $0x108] sm:$0xff]
    %v1434 = vld [vmem:[#allocation9 + $0x110] sm:$0xff]
    %v1435 = vld [vmem:[#allocation9 + $0x118] sm:$0xff]
    %v1436 = vld [vmem:[#allocation9 + $0x120] sm:$0xff]
    %v1437 = vld [vmem:[#allocation9 + $0x128] sm:$0xff]
    %v1438 = vld [vmem:[#allocation9 + $0x130] sm:$0xff]
    %v1439 = vld [vmem:[#allocation9 + $0x138] sm:$0xff]
    %v1440 = vld [vmem:[#allocation9 + $0x140] sm:$0xff]
    %v1441 = vld [vmem:[#allocation9 + $0x148] sm:$0xff]
    %v1442 = vld [vmem:[#allocation9 + $0x150] sm:$0xff]
    %v1443 = vld [vmem:[#allocation9 + $0x158] sm:$0xff]
    %v1444 = vld [vmem:[#allocation9 + $0x160] sm:$0xff]
    %v1445 = vld [vmem:[#allocation9 + $0x168] sm:$0xff]
    %v1446 = vld [vmem:[#allocation9 + $0x170] sm:$0xff]
    %v1447 = vld [vmem:[#allocation9 + $0x178] sm:$0xff]
    %v1448 = vld [vmem:[#allocation9 + $0x180] sm:$0xff]
    %v1449 = vld [vmem:[#allocation9 + $0x188] sm:$0xff]
    %v1450 = vld [vmem:[#allocation9 + $0x190] sm:$0xff]
    %v1451 = vld [vmem:[#allocation9 + $0x198] sm:$0xff]
    %v1452 = vld [vmem:[#allocation9 + $0x1a0] sm:$0xff]
    %v1453 = vld [vmem:[#allocation9 + $0x1a8] sm:$0xff]
    %v1454 = vld [vmem:[#allocation9 + $0x1b0] sm:$0xff]
    %v1455 = vld [vmem:[#allocation9 + $0x1b8] sm:$0xff]
    %v1456 = vld [vmem:[#allocation9 + $0x1c0] sm:$0xff]
    %v1457 = vld [vmem:[#allocation9 + $0x1c8] sm:$0xff]
    %v1458 = vld [vmem:[#allocation9 + $0x1d0] sm:$0xff]
    %v1459 = vld [vmem:[#allocation9 + $0x1d8] sm:$0xff]
    %v1460 = vld [vmem:[#allocation9 + $0x1e0] sm:$0xff]
    %v1461 = vld [vmem:[#allocation9 + $0x1e8] sm:$0xff]
    %v1462 = vld [vmem:[#allocation9 + $0x1f0] sm:$0xff]
    %v1463 = vld [vmem:[#allocation9 + $0x1f8] sm:$0xff]
    %v1464 = vld [vmem:[#allocation10] sm:$0x3]
    %v1466 = vlaneseq
    %v1467 = vshrl.u32 %v1466, 7
    %v1468 = vsub.s32 0, %v1467
    %v1469 = vrot.slane %v1464, %v1468
    %v1470 = vlaneseq
    %v1471 = vshrl.u32 %v1470, 7
    %v1472 = vsub.s32 1, %v1471
    %v1473 = vrot.slane %v1464, %v1472
    %v1540 = vunpack.c.l.b16 %v1400
    %v1541 = vunpack.c.h.b16 %v1400
    %v1542 = vunpack.c.l.b16 %v1401
    %v1543 = vunpack.c.h.b16 %v1401
    %v1544 = vunpack.c.l.b16 %v1402
    %v1545 = vunpack.c.h.b16 %v1402
    %v1546 = vunpack.c.l.b16 %v1403
    %v1547 = vunpack.c.h.b16 %v1403
    %v1548 = vunpack.c.l.b16 %v1404
    %v1549 = vunpack.c.h.b16 %v1404
    %v1550 = vunpack.c.l.b16 %v1405
    %v1551 = vunpack.c.h.b16 %v1405
    %v1552 = vunpack.c.l.b16 %v1406
    %v1553 = vunpack.c.h.b16 %v1406
    %v1554 = vunpack.c.l.b16 %v1407
    %v1555 = vunpack.c.h.b16 %v1407
    %v1556 = vunpack.c.l.b16 %v1408
    %v1557 = vunpack.c.h.b16 %v1408
    %v1558 = vunpack.c.l.b16 %v1409
    %v1559 = vunpack.c.h.b16 %v1409
    %v1560 = vunpack.c.l.b16 %v1410
    %v1561 = vunpack.c.h.b16 %v1410
    %v1562 = vunpack.c.l.b16 %v1411
    %v1563 = vunpack.c.h.b16 %v1411
    %v1564 = vunpack.c.l.b16 %v1412
    %v1565 = vunpack.c.h.b16 %v1412
    %v1566 = vunpack.c.l.b16 %v1413
    %v1567 = vunpack.c.h.b16 %v1413
    %v1568 = vunpack.c.l.b16 %v1414
    %v1569 = vunpack.c.h.b16 %v1414
    %v1570 = vunpack.c.l.b16 %v1415
    %v1571 = vunpack.c.h.b16 %v1415
    %v1572 = vunpack.c.l.b16 %v1416
    %v1573 = vunpack.c.h.b16 %v1416
    %v1574 = vunpack.c.l.b16 %v1417
    %v1575 = vunpack.c.h.b16 %v1417
    %v1576 = vunpack.c.l.b16 %v1418
    %v1577 = vunpack.c.h.b16 %v1418
    %v1578 = vunpack.c.l.b16 %v1419
    %v1579 = vunpack.c.h.b16 %v1419
    %v1580 = vunpack.c.l.b16 %v1420
    %v1581 = vunpack.c.h.b16 %v1420
    %v1582 = vunpack.c.l.b16 %v1421
    %v1583 = vunpack.c.h.b16 %v1421
    %v1584 = vunpack.c.l.b16 %v1422
    %v1585 = vunpack.c.h.b16 %v1422
    %v1586 = vunpack.c.l.b16 %v1423
    %v1587 = vunpack.c.h.b16 %v1423
    %v1588 = vunpack.c.l.b16 %v1424
    %v1589 = vunpack.c.h.b16 %v1424
    %v1590 = vunpack.c.l.b16 %v1425
    %v1591 = vunpack.c.h.b16 %v1425
    %v1592 = vunpack.c.l.b16 %v1426
    %v1593 = vunpack.c.h.b16 %v1426
    %v1594 = vunpack.c.l.b16 %v1427
    %v1595 = vunpack.c.h.b16 %v1427
    %v1596 = vunpack.c.l.b16 %v1428
    %v1597 = vunpack.c.h.b16 %v1428
    %v1598 = vunpack.c.l.b16 %v1429
    %v1599 = vunpack.c.h.b16 %v1429
    %v1600 = vunpack.c.l.b16 %v1430
    %v1601 = vunpack.c.h.b16 %v1430
    %v1602 = vunpack.c.l.b16 %v1431
    %v1603 = vunpack.c.h.b16 %v1431
    %v1604 = vunpack.c.l.b16 %v1432
    %v1605 = vunpack.c.h.b16 %v1432
    %v1606 = vunpack.c.l.b16 %v1433
    %v1607 = vunpack.c.h.b16 %v1433
    %v1608 = vunpack.c.l.b16 %v1434
    %v1609 = vunpack.c.h.b16 %v1434
    %v1610 = vunpack.c.l.b16 %v1435
    %v1611 = vunpack.c.h.b16 %v1435
    %v1612 = vunpack.c.l.b16 %v1436
    %v1613 = vunpack.c.h.b16 %v1436
    %v1614 = vunpack.c.l.b16 %v1437
    %v1615 = vunpack.c.h.b16 %v1437
    %v1616 = vunpack.c.l.b16 %v1438
    %v1617 = vunpack.c.h.b16 %v1438
    %v1618 = vunpack.c.l.b16 %v1439
    %v1619 = vunpack.c.h.b16 %v1439
    %v1620 = vunpack.c.l.b16 %v1440
    %v1621 = vunpack.c.h.b16 %v1440
    %v1622 = vunpack.c.l.b16 %v1441
    %v1623 = vunpack.c.h.b16 %v1441
    %v1624 = vunpack.c.l.b16 %v1442
    %v1625 = vunpack.c.h.b16 %v1442
    %v1626 = vunpack.c.l.b16 %v1443
    %v1627 = vunpack.c.h.b16 %v1443
    %v1628 = vunpack.c.l.b16 %v1444
    %v1629 = vunpack.c.h.b16 %v1444
    %v1630 = vunpack.c.l.b16 %v1445
    %v1631 = vunpack.c.h.b16 %v1445
    %v1632 = vunpack.c.l.b16 %v1446
    %v1633 = vunpack.c.h.b16 %v1446
    %v1634 = vunpack.c.l.b16 %v1447
    %v1635 = vunpack.c.h.b16 %v1447
    %v1636 = vunpack.c.l.b16 %v1448
    %v1637 = vunpack.c.h.b16 %v1448
    %v1638 = vunpack.c.l.b16 %v1449
    %v1639 = vunpack.c.h.b16 %v1449
    %v1640 = vunpack.c.l.b16 %v1450
    %v1641 = vunpack.c.h.b16 %v1450
    %v1642 = vunpack.c.l.b16 %v1451
    %v1643 = vunpack.c.h.b16 %v1451
    %v1644 = vunpack.c.l.b16 %v1452
    %v1645 = vunpack.c.h.b16 %v1452
    %v1646 = vunpack.c.l.b16 %v1453
    %v1647 = vunpack.c.h.b16 %v1453
    %v1648 = vunpack.c.l.b16 %v1454
    %v1649 = vunpack.c.h.b16 %v1454
    %v1650 = vunpack.c.l.b16 %v1455
    %v1651 = vunpack.c.h.b16 %v1455
    %v1652 = vunpack.c.l.b16 %v1456
    %v1653 = vunpack.c.h.b16 %v1456
    %v1654 = vunpack.c.l.b16 %v1457
    %v1655 = vunpack.c.h.b16 %v1457
    %v1656 = vunpack.c.l.b16 %v1458
    %v1657 = vunpack.c.h.b16 %v1458
    %v1658 = vunpack.c.l.b16 %v1459
    %v1659 = vunpack.c.h.b16 %v1459
    %v1660 = vunpack.c.l.b16 %v1460
    %v1661 = vunpack.c.h.b16 %v1460
    %v1662 = vunpack.c.l.b16 %v1461
    %v1663 = vunpack.c.h.b16 %v1461
    %v1664 = vunpack.c.l.b16 %v1462
    %v1665 = vunpack.c.h.b16 %v1462
    %v1666 = vunpack.c.l.b16 %v1463
    %v1667 = vunpack.c.h.b16 %v1463
    %v1668 = vpack.c.b16 %v1542, %v1540
    %v1669 = vpack.c.b16 %v1543, %v1541
    %v1670 = vpack.c.b16 %v1546, %v1544
    %v1671 = vpack.c.b16 %v1547, %v1545
    %v1672 = vpack.c.b16 %v1550, %v1548
    %v1673 = vpack.c.b16 %v1551, %v1549
    %v1674 = vpack.c.b16 %v1554, %v1552
    %v1675 = vpack.c.b16 %v1555, %v1553
    %v1676 = vpack.c.b16 %v1558, %v1556
    %v1677 = vpack.c.b16 %v1559, %v1557
    %v1678 = vpack.c.b16 %v1562, %v1560
    %v1679 = vpack.c.b16 %v1563, %v1561
    %v1680 = vpack.c.b16 %v1566, %v1564
    %v1681 = vpack.c.b16 %v1567, %v1565
    %v1682 = vpack.c.b16 %v1570, %v1568
    %v1683 = vpack.c.b16 %v1571, %v1569
    %v1684 = vpack.c.b16 %v1574, %v1572
    %v1685 = vpack.c.b16 %v1575, %v1573
    %v1686 = vpack.c.b16 %v1578, %v1576
    %v1687 = vpack.c.b16 %v1579, %v1577
    %v1688 = vpack.c.b16 %v1582, %v1580
    %v1689 = vpack.c.b16 %v1583, %v1581
    %v1690 = vpack.c.b16 %v1586, %v1584
    %v1691 = vpack.c.b16 %v1587, %v1585
    %v1692 = vpack.c.b16 %v1590, %v1588
    %v1693 = vpack.c.b16 %v1591, %v1589
    %v1694 = vpack.c.b16 %v1594, %v1592
    %v1695 = vpack.c.b16 %v1595, %v1593
    %v1696 = vpack.c.b16 %v1598, %v1596
    %v1697 = vpack.c.b16 %v1599, %v1597
    %v1698 = vpack.c.b16 %v1602, %v1600
    %v1699 = vpack.c.b16 %v1603, %v1601
    %v1700 = vpack.c.b16 %v1606, %v1604
    %v1701 = vpack.c.b16 %v1607, %v1605
    %v1702 = vpack.c.b16 %v1610, %v1608
    %v1703 = vpack.c.b16 %v1611, %v1609
    %v1704 = vpack.c.b16 %v1614, %v1612
    %v1705 = vpack.c.b16 %v1615, %v1613
    %v1706 = vpack.c.b16 %v1618, %v1616
    %v1707 = vpack.c.b16 %v1619, %v1617
    %v1708 = vpack.c.b16 %v1622, %v1620
    %v1709 = vpack.c.b16 %v1623, %v1621
    %v1710 = vpack.c.b16 %v1626, %v1624
    %v1711 = vpack.c.b16 %v1627, %v1625
    %v1712 = vpack.c.b16 %v1630, %v1628
    %v1713 = vpack.c.b16 %v1631, %v1629
    %v1714 = vpack.c.b16 %v1634, %v1632
    %v1715 = vpack.c.b16 %v1635, %v1633
    %v1716 = vpack.c.b16 %v1638, %v1636
    %v1717 = vpack.c.b16 %v1639, %v1637
    %v1718 = vpack.c.b16 %v1642, %v1640
    %v1719 = vpack.c.b16 %v1643, %v1641
    %v1720 = vpack.c.b16 %v1646, %v1644
    %v1721 = vpack.c.b16 %v1647, %v1645
    %v1722 = vpack.c.b16 %v1650, %v1648
    %v1723 = vpack.c.b16 %v1651, %v1649
    %v1724 = vpack.c.b16 %v1654, %v1652
    %v1725 = vpack.c.b16 %v1655, %v1653
    %v1726 = vpack.c.b16 %v1658, %v1656
    %v1727 = vpack.c.b16 %v1659, %v1657
    %v1728 = vpack.c.b16 %v1662, %v1660
    %v1729 = vpack.c.b16 %v1663, %v1661
    %v1730 = vpack.c.b16 %v1666, %v1664
    %v1731 = vpack.c.b16 %v1667, %v1665
    %1796 = vmatprep.subr.bf16.mxu0 %v1669
    %1797 = vmatpush1.bf16.msra.mxu0 %v1668
    %1798 = vmatprep.subr.bf16.mxu0 %v1671
    %1799 = vmatpush1.bf16.msra.mxu0 %v1670
    %1800 = vmatprep.subr.bf16.mxu0 %v1673
    %1801 = vmatpush1.bf16.msra.mxu0 %v1672
    %1802 = vmatprep.subr.bf16.mxu0 %v1675
    %1803 = vmatpush1.bf16.msra.mxu0 %v1674
    %1804 = vmatprep.subr.bf16.mxu0 %v1677
    %1805 = vmatpush1.bf16.msra.mxu0 %v1676
    %1806 = vmatprep.subr.bf16.mxu0 %v1679
    %1807 = vmatpush1.bf16.msra.mxu0 %v1678
    %1808 = vmatprep.subr.bf16.mxu0 %v1681
    %1809 = vmatpush1.bf16.msra.mxu0 %v1680
    %1810 = vmatprep.subr.bf16.mxu0 %v1683
    %1811 = vmatpush1.bf16.msra.mxu0 %v1682
    %1812 = vmatprep.subr.bf16.mxu0 %v1685
    %1813 = vmatpush1.bf16.msra.mxu0 %v1684
    %1814 = vmatprep.subr.bf16.mxu0 %v1687
    %1815 = vmatpush1.bf16.msra.mxu0 %v1686
    %1816 = vmatprep.subr.bf16.mxu0 %v1689
    %1817 = vmatpush1.bf16.msra.mxu0 %v1688
    %1818 = vmatprep.subr.bf16.mxu0 %v1691
    %1819 = vmatpush1.bf16.msra.mxu0 %v1690
    %1820 = vmatprep.subr.bf16.mxu0 %v1693
    %1821 = vmatpush1.bf16.msra.mxu0 %v1692
    %1822 = vmatprep.subr.bf16.mxu0 %v1695
    %1823 = vmatpush1.bf16.msra.mxu0 %v1694
    %1824 = vmatprep.subr.bf16.mxu0 %v1697
    %1825 = vmatpush1.bf16.msra.mxu0 %v1696
    %1826 = vmatprep.subr.bf16.mxu0 %v1699
    %1827 = vmatpush1.bf16.msra.mxu0 %v1698
    %1828 = vmatprep.mubr.bf16.mxu0 %v1397
    %1829 = vmatmul.mubr.bf16.gmra.mrb[0].mxu0 %v1396
    %v1830 = vpop.f32.mrb[0].mxu0
    %v1831 = vadd.f32 %v1469, %v1830
    %v1832 = vpop.f32.mrb[0].mxu0
    %v1833 = vadd.f32 %v1473, %v1832
    %v1834 = vpop.f32.mrb[0].mxu0
    %v1835 = vpop.f32.mrb[0].mxu0
    %1836 = vdwg.mxu0
    %1837 = vmatprep.subr.bf16.mxu0 %v1701
    %1838 = vmatpush1.bf16.msra.mxu0 %v1700
    %1839 = vmatprep.subr.bf16.mxu0 %v1703
    %1840 = vmatpush1.bf16.msra.mxu0 %v1702
    %1841 = vmatprep.subr.bf16.mxu0 %v1705
    %1842 = vmatpush1.bf16.msra.mxu0 %v1704
    %1843 = vmatprep.subr.bf16.mxu0 %v1707
    %1844 = vmatpush1.bf16.msra.mxu0 %v1706
    %1845 = vmatprep.subr.bf16.mxu0 %v1709
    %1846 = vmatpush1.bf16.msra.mxu0 %v1708
    %1847 = vmatprep.subr.bf16.mxu0 %v1711
    %1848 = vmatpush1.bf16.msra.mxu0 %v1710
    %1849 = vmatprep.subr.bf16.mxu0 %v1713
    %1850 = vmatpush1.bf16.msra.mxu0 %v1712
    %1851 = vmatprep.subr.bf16.mxu0 %v1715
    %1852 = vmatpush1.bf16.msra.mxu0 %v1714
    %1853 = vmatprep.subr.bf16.mxu0 %v1717
    %1854 = vmatpush1.bf16.msra.mxu0 %v1716
    %1855 = vmatprep.subr.bf16.mxu0 %v1719
    %1856 = vmatpush1.bf16.msra.mxu0 %v1718
    %1857 = vmatprep.subr.bf16.mxu0 %v1721
    %1858 = vmatpush1.bf16.msra.mxu0 %v1720
    %1859 = vmatprep.subr.bf16.mxu0 %v1723
    %1860 = vmatpush1.bf16.msra.mxu0 %v1722
    %1861 = vmatprep.subr.bf16.mxu0 %v1725
    %1862 = vmatpush1.bf16.msra.mxu0 %v1724
    %1863 = vmatprep.subr.bf16.mxu0 %v1727
    %1864 = vmatpush1.bf16.msra.mxu0 %v1726
    %1865 = vmatprep.subr.bf16.mxu0 %v1729
    %1866 = vmatpush1.bf16.msra.mxu0 %v1728
    %1867 = vmatprep.subr.bf16.mxu0 %v1731
    %1868 = vmatpush1.bf16.msra.mxu0 %v1730
    %1869 = vmatprep.mubr.bf16.mxu0 %v1399
    %1870 = vmatmul.mubr.bf16.gmra.mrb[0].mxu0 %v1398
    %v1871 = vpop.f32.mrb[0].mxu0
    %v1872 = vadd.f32 %v1831, %v1871
    %v1873 = vpop.f32.mrb[0].mxu0
    %v1874 = vadd.f32 %v1833, %v1873
    %v1875 = vpop.f32.mrb[0].mxu0
    %v1876 = vpop.f32.mrb[0].mxu0
    %1877 = vdwg.mxu0
    %v1878 = vmax.f32 %v1872, 0.0
    %v1879 = vmax.f32 %v1874, 0.0
    %v1880 = vpack.c.bf16 %v1878, %v1878
    %v1881 = vpack.c.bf16 %v1879, %v1879
    %v1882 = vld [vmem:[%s33] sm:$0xf]
    %v1883 = vld [vmem:[%s33 + $0x4] sm:$0xf]
    %v1884 = vld [vmem:[%s33 + $0x8] sm:$0xf]
    %v1885 = vld [vmem:[%s33 + $0xc] sm:$0xf]
    %v1886 = vld [vmem:[%s33 + $0x10] sm:$0xf]
    %v1887 = vld [vmem:[%s33 + $0x14] sm:$0xf]
    %v1888 = vld [vmem:[%s33 + $0x18] sm:$0xf]
    %v1889 = vld [vmem:[%s33 + $0x1c] sm:$0xf]
    %v1890 = vld [vmem:[%s33 + $0x20] sm:$0xf]
    %v1891 = vld [vmem:[%s33 + $0x24] sm:$0xf]
    %v1892 = vld [vmem:[%s33 + $0x28] sm:$0xf]
    %v1893 = vld [vmem:[%s33 + $0x2c] sm:$0xf]
    %v1894 = vld [vmem:[%s33 + $0x30] sm:$0xf]
    %v1895 = vld [vmem:[%s33 + $0x34] sm:$0xf]
    %v1896 = vld [vmem:[%s33 + $0x38] sm:$0xf]
    %v1897 = vld [vmem:[%s33 + $0x3c] sm:$0xf]
    %v1898 = vld [vmem:[%s33 + $0x40] sm:$0xf]
    %v1899 = vld [vmem:[%s33 + $0x44] sm:$0xf]
    %v1900 = vld [vmem:[%s33 + $0x48] sm:$0xf]
    %v1901 = vld [vmem:[%s33 + $0x4c] sm:$0xf]
    %v1902 = vld [vmem:[%s33 + $0x50] sm:$0xf]
    %v1903 = vld [vmem:[%s33 + $0x54] sm:$0xf]
    %v1904 = vld [vmem:[%s33 + $0x58] sm:$0xf]
    %v1905 = vld [vmem:[%s33 + $0x5c] sm:$0xf]
    %v1906 = vld [vmem:[%s33 + $0x60] sm:$0xf]
    %v1907 = vld [vmem:[%s33 + $0x64] sm:$0xf]
    %v1908 = vld [vmem:[%s33 + $0x68] sm:$0xf]
    %v1909 = vld [vmem:[%s33 + $0x6c] sm:$0xf]
    %v1910 = vld [vmem:[%s33 + $0x70] sm:$0xf]
    %v1911 = vld [vmem:[%s33 + $0x74] sm:$0xf]
    %v1912 = vld [vmem:[%s33 + $0x78] sm:$0xf]
    %v1913 = vld [vmem:[%s33 + $0x7c] sm:$0xf]
    %v1914 = vld [vmem:[#allocation12] sm:$0x1]
    %v1916 = vlaneseq
    %v1917 = vshrl.u32 %v1916, 7
    %v1918 = vsub.s32 0, %v1917
    %v1919 = vrot.slane %v1914, %v1918
    %v1953 = vunpack.c.l.b16 %v1882
    %v1954 = vunpack.c.l.b16 %v1883
    %v1955 = vunpack.c.l.b16 %v1884
    %v1956 = vunpack.c.l.b16 %v1885
    %v1957 = vunpack.c.l.b16 %v1886
    %v1958 = vunpack.c.l.b16 %v1887
    %v1959 = vunpack.c.l.b16 %v1888
    %v1960 = vunpack.c.l.b16 %v1889
    %v1961 = vunpack.c.l.b16 %v1890
    %v1962 = vunpack.c.l.b16 %v1891
    %v1963 = vunpack.c.l.b16 %v1892
    %v1964 = vunpack.c.l.b16 %v1893
    %v1965 = vunpack.c.l.b16 %v1894
    %v1966 = vunpack.c.l.b16 %v1895
    %v1967 = vunpack.c.l.b16 %v1896
    %v1968 = vunpack.c.l.b16 %v1897
    %v1969 = vunpack.c.l.b16 %v1898
    %v1970 = vunpack.c.l.b16 %v1899
    %v1971 = vunpack.c.l.b16 %v1900
    %v1972 = vunpack.c.l.b16 %v1901
    %v1973 = vunpack.c.l.b16 %v1902
    %v1974 = vunpack.c.l.b16 %v1903
    %v1975 = vunpack.c.l.b16 %v1904
    %v1976 = vunpack.c.l.b16 %v1905
    %v1977 = vunpack.c.l.b16 %v1906
    %v1978 = vunpack.c.l.b16 %v1907
    %v1979 = vunpack.c.l.b16 %v1908
    %v1980 = vunpack.c.l.b16 %v1909
    %v1981 = vunpack.c.l.b16 %v1910
    %v1982 = vunpack.c.l.b16 %v1911
    %v1983 = vunpack.c.l.b16 %v1912
    %v1984 = vunpack.c.l.b16 %v1913
    %v1985 = vpack.c.b16 %v1954, %v1953
    %v1986 = vpack.c.b16 %v1956, %v1955
    %v1987 = vpack.c.b16 %v1958, %v1957
    %v1988 = vpack.c.b16 %v1960, %v1959
    %v1989 = vpack.c.b16 %v1962, %v1961
    %v1990 = vpack.c.b16 %v1964, %v1963
    %v1991 = vpack.c.b16 %v1966, %v1965
    %v1992 = vpack.c.b16 %v1968, %v1967
    %v1993 = vpack.c.b16 %v1970, %v1969
    %v1994 = vpack.c.b16 %v1972, %v1971
    %v1995 = vpack.c.b16 %v1974, %v1973
    %v1996 = vpack.c.b16 %v1976, %v1975
    %v1997 = vpack.c.b16 %v1978, %v1977
    %v1998 = vpack.c.b16 %v1980, %v1979
    %v1999 = vpack.c.b16 %v1982, %v1981
    %v2000 = vpack.c.b16 %v1984, %v1983
    %2017 = vmatprep.subr.bf16.mxu0 0
    %2018 = vmatpush1.bf16.msra.mxu0 %v1985
    %2019 = vmatprep.subr.bf16.mxu0 0
    %2020 = vmatpush1.bf16.msra.mxu0 %v1986
    %2021 = vmatprep.subr.bf16.mxu0 0
    %2022 = vmatpush1.bf16.msra.mxu0 %v1987
    %2023 = vmatprep.subr.bf16.mxu0 0
    %2024 = vmatpush1.bf16.msra.mxu0 %v1988
    %2025 = vmatprep.subr.bf16.mxu0 0
    %2026 = vmatpush1.bf16.msra.mxu0 %v1989
    %2027 = vmatprep.subr.bf16.mxu0 0
    %2028 = vmatpush1.bf16.msra.mxu0 %v1990
    %2029 = vmatprep.subr.bf16.mxu0 0
    %2030 = vmatpush1.bf16.msra.mxu0 %v1991
    %2031 = vmatprep.subr.bf16.mxu0 0
    %2032 = vmatpush1.bf16.msra.mxu0 %v1992
    %2033 = vmatprep.subr.bf16.mxu0 0
    %2034 = vmatpush1.bf16.msra.mxu0 %v1993
    %2035 = vmatprep.subr.bf16.mxu0 0
    %2036 = vmatpush1.bf16.msra.mxu0 %v1994
    %2037 = vmatprep.subr.bf16.mxu0 0
    %2038 = vmatpush1.bf16.msra.mxu0 %v1995
    %2039 = vmatprep.subr.bf16.mxu0 0
    %2040 = vmatpush1.bf16.msra.mxu0 %v1996
    %2041 = vmatprep.subr.bf16.mxu0 0
    %2042 = vmatpush1.bf16.msra.mxu0 %v1997
    %2043 = vmatprep.subr.bf16.mxu0 0
    %2044 = vmatpush1.bf16.msra.mxu0 %v1998
    %2045 = vmatprep.subr.bf16.mxu0 0
    %2046 = vmatpush1.bf16.msra.mxu0 %v1999
    %2047 = vmatprep.subr.bf16.mxu0 0
    %2048 = vmatpush1.bf16.msra.mxu0 %v2000
    %2049 = vmatprep.mubr.bf16.mxu0 %v1881
    %2050 = vmatmul.mubr.bf16.gmra.mrb[0].mxu0 %v1880
    %v2051 = vpop.f32.mrb[0].mxu0
    %v2052 = vadd.f32 %v1919, %v2051
    %v2053 = vpop.f32.mrb[0].mxu0
    %v2054 = vpop.f32.mrb[0].mxu0
    %v2055 = vpop.f32.mrb[0].mxu0
    %2056 = vdwg.mxu0
    %v2057 = vmax.f32 %v2052, 0.0
    %v2058 = vpack.c.bf16 %v2057, %v2057
    %v2059 = vld [vmem:[%s37] sm:$0xf]
    %v2060 = vld [vmem:[%s37 + $0x4] sm:$0xf]
    %v2061 = vld [vmem:[%s37 + $0x8] sm:$0xf]
    %v2062 = vld [vmem:[%s37 + $0xc] sm:$0xf]
    %v2063 = vld [vmem:[#allocation13] sm:$0x1]
    %v2065 = vlaneseq
    %v2066 = vshrl.u32 %v2065, 7
    %v2067 = vsub.s32 0, %v2066
    %v2068 = vrot.slane %v2063, %v2067
    %v2074 = vunpack.c.l.b16 %v2059
    %v2075 = vunpack.c.l.b16 %v2060
    %v2076 = vunpack.c.l.b16 %v2061
    %v2077 = vunpack.c.l.b16 %v2062
    %v2078 = vpack.c.b16 %v2075, %v2074
    %v2079 = vpack.c.b16 %v2077, %v2076
    %v2083 = vsel %vm387, %v2058, 0
    %2085 = vmatprep.subr.bf16.mxu0 0
    %2086 = vmatpush1.bf16.msra.mxu0 %v2078
    %2087 = vmatprep.subr.bf16.mxu0 0
    %2088 = vmatpush1.bf16.msra.mxu0 %v2079
    %2089 = vmatprep.subr.bf16.mxu0 0
    %2090 = vmatpush1.bf16.msra.mxu0 0
    %2091 = vmatprep.subr.bf16.mxu0 0
    %2092 = vmatpush1.bf16.msra.mxu0 0
    %2093 = vmatprep.subr.bf16.mxu0 0
    %2094 = vmatpush1.bf16.msra.mxu0 0
    %2095 = vmatprep.subr.bf16.mxu0 0
    %2096 = vmatpush1.bf16.msra.mxu0 0
    %2097 = vmatprep.subr.bf16.mxu0 0
    %2098 = vmatpush1.bf16.msra.mxu0 0
    %2099 = vmatprep.subr.bf16.mxu0 0
    %2100 = vmatpush1.bf16.msra.mxu0 0
    %2101 = vmatprep.subr.bf16.mxu0 0
    %2102 = vmatpush1.bf16.msra.mxu0 0
    %2103 = vmatprep.subr.bf16.mxu0 0
    %2104 = vmatpush1.bf16.msra.mxu0 0
    %2105 = vmatprep.subr.bf16.mxu0 0
    %2106 = vmatpush1.bf16.msra.mxu0 0
    %2107 = vmatprep.subr.bf16.mxu0 0
    %2108 = vmatpush1.bf16.msra.mxu0 0
    %2109 = vmatprep.subr.bf16.mxu0 0
    %2110 = vmatpush1.bf16.msra.mxu0 0
    %2111 = vmatprep.subr.bf16.mxu0 0
    %2112 = vmatpush1.bf16.msra.mxu0 0
    %2113 = vmatprep.subr.bf16.mxu0 0
    %2114 = vmatpush1.bf16.msra.mxu0 0
    %2115 = vmatprep.subr.bf16.mxu0 0
    %2116 = vmatpush1.bf16.msra.mxu0 0
    %2117 = vmatprep.mubr.bf16.mxu0 0
    %2118 = vmatmul.mubr.bf16.gmra.mrb[0].mxu0 %v2083
    %v2119 = vpop.f32.mrb[0].mxu0
    %v2120 = vadd.f32 %v2068, %v2119
    %v2121 = vpop.f32.mrb[0].mxu0
    %v2122 = vpop.f32.mrb[0].mxu0
    %v2123 = vpop.f32.mrb[0].mxu0
    %2124 = vdwg.mxu0
    %v2125 = vsub.f32 0.0, %v2120
    %v2126 = vmul.f32 %v2125, 1.442695
    %v2127 = vpow.pop %v2126
    %v2128 = vadd.f32 %v2127, 1.0
    %v2129 = vrcp.pop %v2128
    %v2130 = vld [vmem:[%s5] sm:$0xf]
    %v2131 = vld [vmem:[%s41] sm:$0xff]
    %v2132 = vld [vmem:[%s41 + $0x8] sm:$0xff]
    %v2133 = vld [vmem:[%s41 + $0x10] sm:$0xff]
    %v2134 = vld [vmem:[%s41 + $0x18] sm:$0xff]
    %v2135 = vld [vmem:[%s41 + $0x20] sm:$0xff]
    %v2136 = vld [vmem:[%s41 + $0x28] sm:$0xff]
    %v2137 = vld [vmem:[#allocation15] sm:$0xf]
    %v2139 = vlaneseq
    %v2140 = vshrl.u32 %v2139, 7
    %v2141 = vsub.s32 0, %v2140
    %v2142 = vrot.slane %v2137, %v2141
    %v2143 = vlaneseq
    %v2144 = vshrl.u32 %v2143, 7
    %v2145 = vsub.s32 1, %v2144
    %v2146 = vrot.slane %v2137, %v2145
    %v2147 = vlaneseq
    %v2148 = vshrl.u32 %v2147, 7
    %v2149 = vsub.s32 2, %v2148
    %v2150 = vrot.slane %v2137, %v2149
    %v2151 = vlaneseq
    %v2152 = vshrl.u32 %v2151, 7
    %v2153 = vsub.s32 3, %v2152
    %v2154 = vrot.slane %v2137, %v2153
    %v2165 = vunpack.c.l.b16 %v2131
    %v2166 = vunpack.c.h.b16 %v2131
    %v2167 = vunpack.c.l.b16 %v2132
    %v2168 = vunpack.c.h.b16 %v2132
    %v2169 = vunpack.c.l.b16 %v2133
    %v2170 = vunpack.c.h.b16 %v2133
    %v2171 = vunpack.c.l.b16 %v2134
    %v2172 = vunpack.c.h.b16 %v2134
    %v2173 = vunpack.c.l.b16 %v2135
    %v2174 = vunpack.c.h.b16 %v2135
    %v2175 = vunpack.c.l.b16 %v2136
    %v2176 = vunpack.c.h.b16 %v2136
    %v2177 = vpack.c.b16 %v2169, %v2165
    %v2178 = vpack.c.b16 %v2170, %v2166
    %v2179 = vpack.c.b16 %v2171, %v2167
    %v2180 = vpack.c.b16 %v2172, %v2168
    %v2181 = vpack.c.b16 %v2173, %v2173
    %v2182 = vpack.c.b16 %v2174, %v2174
    %v2183 = vpack.c.b16 %v2175, %v2175
    %v2184 = vpack.c.b16 %v2176, %v2176
    %vm2189 = vcmask 195584
    %v2191 = vsel %vm2189, %v2130, 0
    %vm2193 = vcmask 1043456
    %v2195 = vsel %vm2193, %v2181, 0
    %v2198 = vsel %vm2193, %v2182, 0
    %v2201 = vsel %vm2193, %v2183, 0
    %v2204 = vsel %vm2193, %v2184, 0
    %2206 = vmatprep.subr.bf16.mxu0 %v2178
    %2207 = vmatpush1.bf16.msra.mxu0 %v2177
    %2208 = vmatprep.subr.bf16.mxu0 %v2198
    %2209 = vmatpush1.bf16.msra.mxu0 %v2195
    %2210 = vmatprep.subr.bf16.mxu0 0
    %2211 = vmatpush1.bf16.msra.mxu0 0
    %2212 = vmatprep.subr.bf16.mxu0 0
    %2213 = vmatpush1.bf16.msra.mxu0 0
    %2214 = vmatprep.subr.bf16.mxu0 0
    %2215 = vmatpush1.bf16.msra.mxu0 0
    %2216 = vmatprep.subr.bf16.mxu0 0
    %2217 = vmatpush1.bf16.msra.mxu0 0
    %2218 = vmatprep.subr.bf16.mxu0 0
    %2219 = vmatpush1.bf16.msra.mxu0 0
    %2220 = vmatprep.subr.bf16.mxu0 0
    %2221 = vmatpush1.bf16.msra.mxu0 0
    %2222 = vmatprep.subr.bf16.mxu0 0
    %2223 = vmatpush1.bf16.msra.mxu0 0
    %2224 = vmatprep.subr.bf16.mxu0 0
    %2225 = vmatpush1.bf16.msra.mxu0 0
    %2226 = vmatprep.subr.bf16.mxu0 0
    %2227 = vmatpush1.bf16.msra.mxu0 0
    %2228 = vmatprep.subr.bf16.mxu0 0
    %2229 = vmatpush1.bf16.msra.mxu0 0
    %2230 = vmatprep.subr.bf16.mxu0 0
    %2231 = vmatpush1.bf16.msra.mxu0 0
    %2232 = vmatprep.subr.bf16.mxu0 0
    %2233 = vmatpush1.bf16.msra.mxu0 0
    %2234 = vmatprep.subr.bf16.mxu0 0
    %2235 = vmatpush1.bf16.msra.mxu0 0
    %2236 = vmatprep.subr.bf16.mxu0 0
    %2237 = vmatpush1.bf16.msra.mxu0 0
    %2238 = vmatprep.mubr.bf16.mxu0 0
    %2239 = vmatmul.mubr.bf16.gmra.mrb[0].mxu0 %v2191
    %v2240 = vpop.f32.mrb[0].mxu0
    %v2241 = vadd.f32 %v2142, %v2240
    %v2242 = vpop.f32.mrb[0].mxu0
    %v2243 = vadd.f32 %v2146, %v2242
    %v2244 = vpop.f32.mrb[0].mxu0
    %v2245 = vpop.f32.mrb[0].mxu0
    %2246 = vdwg.mxu0
    %2247 = vmatprep.subr.bf16.mxu0 %v2180
    %2248 = vmatpush1.bf16.msra.mxu0 %v2179
    %2249 = vmatprep.subr.bf16.mxu0 %v2204
    %2250 = vmatpush1.bf16.msra.mxu0 %v2201
    %2251 = vmatprep.subr.bf16.mxu0 0
    %2252 = vmatpush1.bf16.msra.mxu0 0
    %2253 = vmatprep.subr.bf16.mxu0 0
    %2254 = vmatpush1.bf16.msra.mxu0 0
    %2255 = vmatprep.subr.bf16.mxu0 0
    %2256 = vmatpush1.bf16.msra.mxu0 0
    %2257 = vmatprep.subr.bf16.mxu0 0
    %2258 = vmatpush1.bf16.msra.mxu0 0
    %2259 = vmatprep.subr.bf16.mxu0 0
    %2260 = vmatpush1.bf16.msra.mxu0 0
    %2261 = vmatprep.subr.bf16.mxu0 0
    %2262 = vmatpush1.bf16.msra.mxu0 0
    %2263 = vmatprep.subr.bf16.mxu0 0
    %2264 = vmatpush1.bf16.msra.mxu0 0
    %2265 = vmatprep.subr.bf16.mxu0 0
    %2266 = vmatpush1.bf16.msra.mxu0 0
    %2267 = vmatprep.subr.bf16.mxu0 0
    %2268 = vmatpush1.bf16.msra.mxu0 0
    %2269 = vmatprep.subr.bf16.mxu0 0
    %2270 = vmatpush1.bf16.msra.mxu0 0
    %2271 = vmatprep.subr.bf16.mxu0 0
    %2272 = vmatpush1.bf16.msra.mxu0 0
    %2273 = vmatprep.subr.bf16.mxu0 0
    %2274 = vmatpush1.bf16.msra.mxu0 0
    %2275 = vmatprep.subr.bf16.mxu0 0
    %2276 = vmatpush1.bf16.msra.mxu0 0
    %2277 = vmatprep.subr.bf16.mxu0 0
    %2278 = vmatpush1.bf16.msra.mxu0 0
    %2279 = vmatprep.mubr.bf16.mxu0 0
    %2280 = vmatmul.mubr.bf16.gmra.mrb[0].mxu0 %v2191
    %v2281 = vpop.f32.mrb[0].mxu0
    %v2282 = vadd.f32 %v2150, %v2281
    %v2283 = vpop.f32.mrb[0].mxu0
    %v2284 = vadd.f32 %v2154, %v2283
    %v2285 = vpop.f32.mrb[0].mxu0
    %v2286 = vpop.f32.mrb[0].mxu0
    %2287 = vdwg.mxu0
    %v2288 = vmax.f32 %v2241, 0.0
    %v2289 = vmax.f32 %v2243, 0.0
    %v2290 = vmax.f32 %v2282, 0.0
    %v2291 = vmax.f32 %v2284, 0.0
    %v2292 = vpack.c.bf16 %v2288, %v2288
    %v2293 = vpack.c.bf16 %v2289, %v2289
    %v2294 = vpack.c.bf16 %v2290, %v2290
    %v2295 = vpack.c.bf16 %v2291, %v2291
    %v2296 = vld [vmem:[#allocation16] sm:$0xff]
    %v2297 = vld [vmem:[#allocation16 + $0x8] sm:$0xff]
    %v2298 = vld [vmem:[#allocation16 + $0x10] sm:$0xff]
    %v2299 = vld [vmem:[#allocation16 + $0x18] sm:$0xff]
    %v2300 = vld [vmem:[#allocation16 + $0x20] sm:$0xff]
    %v2301 = vld [vmem:[#allocation16 + $0x28] sm:$0xff]
    %v2302 = vld [vmem:[#allocation16 + $0x30] sm:$0xff]
    %v2303 = vld [vmem:[#allocation16 + $0x38] sm:$0xff]
    %v2304 = vld [vmem:[#allocation16 + $0x40] sm:$0xff]
    %v2305 = vld [vmem:[#allocation16 + $0x48] sm:$0xff]
    %v2306 = vld [vmem:[#allocation16 + $0x50] sm:$0xff]
    %v2307 = vld [vmem:[#allocation16 + $0x58] sm:$0xff]
    %v2308 = vld [vmem:[#allocation16 + $0x60] sm:$0xff]
    %v2309 = vld [vmem:[#allocation16 + $0x68] sm:$0xff]
    %v2310 = vld [vmem:[#allocation16 + $0x70] sm:$0xff]
    %v2311 = vld [vmem:[#allocation16 + $0x78] sm:$0xff]
    %v2312 = vld [vmem:[#allocation16 + $0x80] sm:$0xff]
    %v2313 = vld [vmem:[#allocation16 + $0x88] sm:$0xff]
    %v2314 = vld [vmem:[#allocation16 + $0x90] sm:$0xff]
    %v2315 = vld [vmem:[#allocation16 + $0x98] sm:$0xff]
    %v2316 = vld [vmem:[#allocation16 + $0xa0] sm:$0xff]
    %v2317 = vld [vmem:[#allocation16 + $0xa8] sm:$0xff]
    %v2318 = vld [vmem:[#allocation16 + $0xb0] sm:$0xff]
    %v2319 = vld [vmem:[#allocation16 + $0xb8] sm:$0xff]
    %v2320 = vld [vmem:[#allocation16 + $0xc0] sm:$0xff]
    %v2321 = vld [vmem:[#allocation16 + $0xc8] sm:$0xff]
    %v2322 = vld [vmem:[#allocation16 + $0xd0] sm:$0xff]
    %v2323 = vld [vmem:[#allocation16 + $0xd8] sm:$0xff]
    %v2324 = vld [vmem:[#allocation16 + $0xe0] sm:$0xff]
    %v2325 = vld [vmem:[#allocation16 + $0xe8] sm:$0xff]
    %v2326 = vld [vmem:[#allocation16 + $0xf0] sm:$0xff]
    %v2327 = vld [vmem:[#allocation16 + $0xf8] sm:$0xff]
    %v2328 = vld [vmem:[#allocation16 + $0x100] sm:$0xff]
    %v2329 = vld [vmem:[#allocation16 + $0x108] sm:$0xff]
    %v2330 = vld [vmem:[#allocation16 + $0x110] sm:$0xff]
    %v2331 = vld [vmem:[#allocation16 + $0x118] sm:$0xff]
    %v2332 = vld [vmem:[#allocation16 + $0x120] sm:$0xff]
    %v2333 = vld [vmem:[#allocation16 + $0x128] sm:$0xff]
    %v2334 = vld [vmem:[#allocation16 + $0x130] sm:$0xff]
    %v2335 = vld [vmem:[#allocation16 + $0x138] sm:$0xff]
    %v2336 = vld [vmem:[#allocation16 + $0x140] sm:$0xff]
    %v2337 = vld [vmem:[#allocation16 + $0x148] sm:$0xff]
    %v2338 = vld [vmem:[#allocation16 + $0x150] sm:$0xff]
    %v2339 = vld [vmem:[#allocation16 + $0x158] sm:$0xff]
    %v2340 = vld [vmem:[#allocation16 + $0x160] sm:$0xff]
    %v2341 = vld [vmem:[#allocation16 + $0x168] sm:$0xff]
    %v2342 = vld [vmem:[#allocation16 + $0x170] sm:$0xff]
    %v2343 = vld [vmem:[#allocation16 + $0x178] sm:$0xff]
    %v2344 = vld [vmem:[#allocation16 + $0x180] sm:$0xff]
    %v2345 = vld [vmem:[#allocation16 + $0x188] sm:$0xff]
    %v2346 = vld [vmem:[#allocation16 + $0x190] sm:$0xff]
    %v2347 = vld [vmem:[#allocation16 + $0x198] sm:$0xff]
    %v2348 = vld [vmem:[#allocation16 + $0x1a0] sm:$0xff]
    %v2349 = vld [vmem:[#allocation16 + $0x1a8] sm:$0xff]
    %v2350 = vld [vmem:[#allocation16 + $0x1b0] sm:$0xff]
    %v2351 = vld [vmem:[#allocation16 + $0x1b8] sm:$0xff]
    %v2352 = vld [vmem:[#allocation16 + $0x1c0] sm:$0xff]
    %v2353 = vld [vmem:[#allocation16 + $0x1c8] sm:$0xff]
    %v2354 = vld [vmem:[#allocation16 + $0x1d0] sm:$0xff]
    %v2355 = vld [vmem:[#allocation16 + $0x1d8] sm:$0xff]
    %v2356 = vld [vmem:[#allocation16 + $0x1e0] sm:$0xff]
    %v2357 = vld [vmem:[#allocation16 + $0x1e8] sm:$0xff]
    %v2358 = vld [vmem:[#allocation16 + $0x1f0] sm:$0xff]
    %v2359 = vld [vmem:[#allocation16 + $0x1f8] sm:$0xff]
    %v2360 = vld [vmem:[#allocation18] sm:$0x3]
    %v2362 = vlaneseq
    %v2363 = vshrl.u32 %v2362, 7
    %v2364 = vsub.s32 0, %v2363
    %v2365 = vrot.slane %v2360, %v2364
    %v2366 = vlaneseq
    %v2367 = vshrl.u32 %v2366, 7
    %v2368 = vsub.s32 1, %v2367
    %v2369 = vrot.slane %v2360, %v2368
    %v2436 = vunpack.c.l.b16 %v2296
    %v2437 = vunpack.c.h.b16 %v2296
    %v2438 = vunpack.c.l.b16 %v2297
    %v2439 = vunpack.c.h.b16 %v2297
    %v2440 = vunpack.c.l.b16 %v2298
    %v2441 = vunpack.c.h.b16 %v2298
    %v2442 = vunpack.c.l.b16 %v2299
    %v2443 = vunpack.c.h.b16 %v2299
    %v2444 = vunpack.c.l.b16 %v2300
    %v2445 = vunpack.c.h.b16 %v2300
    %v2446 = vunpack.c.l.b16 %v2301
    %v2447 = vunpack.c.h.b16 %v2301
    %v2448 = vunpack.c.l.b16 %v2302
    %v2449 = vunpack.c.h.b16 %v2302
    %v2450 = vunpack.c.l.b16 %v2303
    %v2451 = vunpack.c.h.b16 %v2303
    %v2452 = vunpack.c.l.b16 %v2304
    %v2453 = vunpack.c.h.b16 %v2304
    %v2454 = vunpack.c.l.b16 %v2305
    %v2455 = vunpack.c.h.b16 %v2305
    %v2456 = vunpack.c.l.b16 %v2306
    %v2457 = vunpack.c.h.b16 %v2306
    %v2458 = vunpack.c.l.b16 %v2307
    %v2459 = vunpack.c.h.b16 %v2307
    %v2460 = vunpack.c.l.b16 %v2308
    %v2461 = vunpack.c.h.b16 %v2308
    %v2462 = vunpack.c.l.b16 %v2309
    %v2463 = vunpack.c.h.b16 %v2309
    %v2464 = vunpack.c.l.b16 %v2310
    %v2465 = vunpack.c.h.b16 %v2310
    %v2466 = vunpack.c.l.b16 %v2311
    %v2467 = vunpack.c.h.b16 %v2311
    %v2468 = vunpack.c.l.b16 %v2312
    %v2469 = vunpack.c.h.b16 %v2312
    %v2470 = vunpack.c.l.b16 %v2313
    %v2471 = vunpack.c.h.b16 %v2313
    %v2472 = vunpack.c.l.b16 %v2314
    %v2473 = vunpack.c.h.b16 %v2314
    %v2474 = vunpack.c.l.b16 %v2315
    %v2475 = vunpack.c.h.b16 %v2315
    %v2476 = vunpack.c.l.b16 %v2316
    %v2477 = vunpack.c.h.b16 %v2316
    %v2478 = vunpack.c.l.b16 %v2317
    %v2479 = vunpack.c.h.b16 %v2317
    %v2480 = vunpack.c.l.b16 %v2318
    %v2481 = vunpack.c.h.b16 %v2318
    %v2482 = vunpack.c.l.b16 %v2319
    %v2483 = vunpack.c.h.b16 %v2319
    %v2484 = vunpack.c.l.b16 %v2320
    %v2485 = vunpack.c.h.b16 %v2320
    %v2486 = vunpack.c.l.b16 %v2321
    %v2487 = vunpack.c.h.b16 %v2321
    %v2488 = vunpack.c.l.b16 %v2322
    %v2489 = vunpack.c.h.b16 %v2322
    %v2490 = vunpack.c.l.b16 %v2323
    %v2491 = vunpack.c.h.b16 %v2323
    %v2492 = vunpack.c.l.b16 %v2324
    %v2493 = vunpack.c.h.b16 %v2324
    %v2494 = vunpack.c.l.b16 %v2325
    %v2495 = vunpack.c.h.b16 %v2325
    %v2496 = vunpack.c.l.b16 %v2326
    %v2497 = vunpack.c.h.b16 %v2326
    %v2498 = vunpack.c.l.b16 %v2327
    %v2499 = vunpack.c.h.b16 %v2327
    %v2500 = vunpack.c.l.b16 %v2328
    %v2501 = vunpack.c.h.b16 %v2328
    %v2502 = vunpack.c.l.b16 %v2329
    %v2503 = vunpack.c.h.b16 %v2329
    %v2504 = vunpack.c.l.b16 %v2330
    %v2505 = vunpack.c.h.b16 %v2330
    %v2506 = vunpack.c.l.b16 %v2331
    %v2507 = vunpack.c.h.b16 %v2331
    %v2508 = vunpack.c.l.b16 %v2332
    %v2509 = vunpack.c.h.b16 %v2332
    %v2510 = vunpack.c.l.b16 %v2333
    %v2511 = vunpack.c.h.b16 %v2333
    %v2512 = vunpack.c.l.b16 %v2334
    %v2513 = vunpack.c.h.b16 %v2334
    %v2514 = vunpack.c.l.b16 %v2335
    %v2515 = vunpack.c.h.b16 %v2335
    %v2516 = vunpack.c.l.b16 %v2336
    %v2517 = vunpack.c.h.b16 %v2336
    %v2518 = vunpack.c.l.b16 %v2337
    %v2519 = vunpack.c.h.b16 %v2337
    %v2520 = vunpack.c.l.b16 %v2338
    %v2521 = vunpack.c.h.b16 %v2338
    %v2522 = vunpack.c.l.b16 %v2339
    %v2523 = vunpack.c.h.b16 %v2339
    %v2524 = vunpack.c.l.b16 %v2340
    %v2525 = vunpack.c.h.b16 %v2340
    %v2526 = vunpack.c.l.b16 %v2341
    %v2527 = vunpack.c.h.b16 %v2341
    %v2528 = vunpack.c.l.b16 %v2342
    %v2529 = vunpack.c.h.b16 %v2342
    %v2530 = vunpack.c.l.b16 %v2343
    %v2531 = vunpack.c.h.b16 %v2343
    %v2532 = vunpack.c.l.b16 %v2344
    %v2533 = vunpack.c.h.b16 %v2344
    %v2534 = vunpack.c.l.b16 %v2345
    %v2535 = vunpack.c.h.b16 %v2345
    %v2536 = vunpack.c.l.b16 %v2346
    %v2537 = vunpack.c.h.b16 %v2346
    %v2538 = vunpack.c.l.b16 %v2347
    %v2539 = vunpack.c.h.b16 %v2347
    %v2540 = vunpack.c.l.b16 %v2348
    %v2541 = vunpack.c.h.b16 %v2348
    %v2542 = vunpack.c.l.b16 %v2349
    %v2543 = vunpack.c.h.b16 %v2349
    %v2544 = vunpack.c.l.b16 %v2350
    %v2545 = vunpack.c.h.b16 %v2350
    %v2546 = vunpack.c.l.b16 %v2351
    %v2547 = vunpack.c.h.b16 %v2351
    %v2548 = vunpack.c.l.b16 %v2352
    %v2549 = vunpack.c.h.b16 %v2352
    %v2550 = vunpack.c.l.b16 %v2353
    %v2551 = vunpack.c.h.b16 %v2353
    %v2552 = vunpack.c.l.b16 %v2354
    %v2553 = vunpack.c.h.b16 %v2354
    %v2554 = vunpack.c.l.b16 %v2355
    %v2555 = vunpack.c.h.b16 %v2355
    %v2556 = vunpack.c.l.b16 %v2356
    %v2557 = vunpack.c.h.b16 %v2356
    %v2558 = vunpack.c.l.b16 %v2357
    %v2559 = vunpack.c.h.b16 %v2357
    %v2560 = vunpack.c.l.b16 %v2358
    %v2561 = vunpack.c.h.b16 %v2358
    %v2562 = vunpack.c.l.b16 %v2359
    %v2563 = vunpack.c.h.b16 %v2359
    %v2564 = vpack.c.b16 %v2438, %v2436
    %v2565 = vpack.c.b16 %v2439, %v2437
    %v2566 = vpack.c.b16 %v2442, %v2440
    %v2567 = vpack.c.b16 %v2443, %v2441
    %v2568 = vpack.c.b16 %v2446, %v2444
    %v2569 = vpack.c.b16 %v2447, %v2445
    %v2570 = vpack.c.b16 %v2450, %v2448
    %v2571 = vpack.c.b16 %v2451, %v2449
    %v2572 = vpack.c.b16 %v2454, %v2452
    %v2573 = vpack.c.b16 %v2455, %v2453
    %v2574 = vpack.c.b16 %v2458, %v2456
    %v2575 = vpack.c.b16 %v2459, %v2457
    %v2576 = vpack.c.b16 %v2462, %v2460
    %v2577 = vpack.c.b16 %v2463, %v2461
    %v2578 = vpack.c.b16 %v2466, %v2464
    %v2579 = vpack.c.b16 %v2467, %v2465
    %v2580 = vpack.c.b16 %v2470, %v2468
    %v2581 = vpack.c.b16 %v2471, %v2469
    %v2582 = vpack.c.b16 %v2474, %v2472
    %v2583 = vpack.c.b16 %v2475, %v2473
    %v2584 = vpack.c.b16 %v2478, %v2476
    %v2585 = vpack.c.b16 %v2479, %v2477
    %v2586 = vpack.c.b16 %v2482, %v2480
    %v2587 = vpack.c.b16 %v2483, %v2481
    %v2588 = vpack.c.b16 %v2486, %v2484
    %v2589 = vpack.c.b16 %v2487, %v2485
    %v2590 = vpack.c.b16 %v2490, %v2488
    %v2591 = vpack.c.b16 %v2491, %v2489
    %v2592 = vpack.c.b16 %v2494, %v2492
    %v2593 = vpack.c.b16 %v2495, %v2493
    %v2594 = vpack.c.b16 %v2498, %v2496
    %v2595 = vpack.c.b16 %v2499, %v2497
    %v2596 = vpack.c.b16 %v2502, %v2500
    %v2597 = vpack.c.b16 %v2503, %v2501
    %v2598 = vpack.c.b16 %v2506, %v2504
    %v2599 = vpack.c.b16 %v2507, %v2505
    %v2600 = vpack.c.b16 %v2510, %v2508
    %v2601 = vpack.c.b16 %v2511, %v2509
    %v2602 = vpack.c.b16 %v2514, %v2512
    %v2603 = vpack.c.b16 %v2515, %v2513
    %v2604 = vpack.c.b16 %v2518, %v2516
    %v2605 = vpack.c.b16 %v2519, %v2517
    %v2606 = vpack.c.b16 %v2522, %v2520
    %v2607 = vpack.c.b16 %v2523, %v2521
    %v2608 = vpack.c.b16 %v2526, %v2524
    %v2609 = vpack.c.b16 %v2527, %v2525
    %v2610 = vpack.c.b16 %v2530, %v2528
    %v2611 = vpack.c.b16 %v2531, %v2529
    %v2612 = vpack.c.b16 %v2534, %v2532
    %v2613 = vpack.c.b16 %v2535, %v2533
    %v2614 = vpack.c.b16 %v2538, %v2536
    %v2615 = vpack.c.b16 %v2539, %v2537
    %v2616 = vpack.c.b16 %v2542, %v2540
    %v2617 = vpack.c.b16 %v2543, %v2541
    %v2618 = vpack.c.b16 %v2546, %v2544
    %v2619 = vpack.c.b16 %v2547, %v2545
    %v2620 = vpack.c.b16 %v2550, %v2548
    %v2621 = vpack.c.b16 %v2551, %v2549
    %v2622 = vpack.c.b16 %v2554, %v2552
    %v2623 = vpack.c.b16 %v2555, %v2553
    %v2624 = vpack.c.b16 %v2558, %v2556
    %v2625 = vpack.c.b16 %v2559, %v2557
    %v2626 = vpack.c.b16 %v2562, %v2560
    %v2627 = vpack.c.b16 %v2563, %v2561
    %2692 = vmatprep.subr.bf16.mxu0 %v2565
    %2693 = vmatpush1.bf16.msra.mxu0 %v2564
    %2694 = vmatprep.subr.bf16.mxu0 %v2567
    %2695 = vmatpush1.bf16.msra.mxu0 %v2566
    %2696 = vmatprep.subr.bf16.mxu0 %v2569
    %2697 = vmatpush1.bf16.msra.mxu0 %v2568
    %2698 = vmatprep.subr.bf16.mxu0 %v2571
    %2699 = vmatpush1.bf16.msra.mxu0 %v2570
    %2700 = vmatprep.subr.bf16.mxu0 %v2573
    %2701 = vmatpush1.bf16.msra.mxu0 %v2572
    %2702 = vmatprep.subr.bf16.mxu0 %v2575
    %2703 = vmatpush1.bf16.msra.mxu0 %v2574
    %2704 = vmatprep.subr.bf16.mxu0 %v2577
    %2705 = vmatpush1.bf16.msra.mxu0 %v2576
    %2706 = vmatprep.subr.bf16.mxu0 %v2579
    %2707 = vmatpush1.bf16.msra.mxu0 %v2578
    %2708 = vmatprep.subr.bf16.mxu0 %v2581
    %2709 = vmatpush1.bf16.msra.mxu0 %v2580
    %2710 = vmatprep.subr.bf16.mxu0 %v2583
    %2711 = vmatpush1.bf16.msra.mxu0 %v2582
    %2712 = vmatprep.subr.bf16.mxu0 %v2585
    %2713 = vmatpush1.bf16.msra.mxu0 %v2584
    %2714 = vmatprep.subr.bf16.mxu0 %v2587
    %2715 = vmatpush1.bf16.msra.mxu0 %v2586
    %2716 = vmatprep.subr.bf16.mxu0 %v2589
    %2717 = vmatpush1.bf16.msra.mxu0 %v2588
    %2718 = vmatprep.subr.bf16.mxu0 %v2591
    %2719 = vmatpush1.bf16.msra.mxu0 %v2590
    %2720 = vmatprep.subr.bf16.mxu0 %v2593
    %2721 = vmatpush1.bf16.msra.mxu0 %v2592
    %2722 = vmatprep.subr.bf16.mxu0 %v2595
    %2723 = vmatpush1.bf16.msra.mxu0 %v2594
    %2724 = vmatprep.mubr.bf16.mxu0 %v2293
    %2725 = vmatmul.mubr.bf16.gmra.mrb[0].mxu0 %v2292
    %v2726 = vpop.f32.mrb[0].mxu0
    %v2727 = vadd.f32 %v2365, %v2726
    %v2728 = vpop.f32.mrb[0].mxu0
    %v2729 = vadd.f32 %v2369, %v2728
    %v2730 = vpop.f32.mrb[0].mxu0
    %v2731 = vpop.f32.mrb[0].mxu0
    %2732 = vdwg.mxu0
    %2733 = vmatprep.subr.bf16.mxu0 %v2597
    %2734 = vmatpush1.bf16.msra.mxu0 %v2596
    %2735 = vmatprep.subr.bf16.mxu0 %v2599
    %2736 = vmatpush1.bf16.msra.mxu0 %v2598
    %2737 = vmatprep.subr.bf16.mxu0 %v2601
    %2738 = vmatpush1.bf16.msra.mxu0 %v2600
    %2739 = vmatprep.subr.bf16.mxu0 %v2603
    %2740 = vmatpush1.bf16.msra.mxu0 %v2602
    %2741 = vmatprep.subr.bf16.mxu0 %v2605
    %2742 = vmatpush1.bf16.msra.mxu0 %v2604
    %2743 = vmatprep.subr.bf16.mxu0 %v2607
    %2744 = vmatpush1.bf16.msra.mxu0 %v2606
    %2745 = vmatprep.subr.bf16.mxu0 %v2609
    %2746 = vmatpush1.bf16.msra.mxu0 %v2608
    %2747 = vmatprep.subr.bf16.mxu0 %v2611
    %2748 = vmatpush1.bf16.msra.mxu0 %v2610
    %2749 = vmatprep.subr.bf16.mxu0 %v2613
    %2750 = vmatpush1.bf16.msra.mxu0 %v2612
    %2751 = vmatprep.subr.bf16.mxu0 %v2615
    %2752 = vmatpush1.bf16.msra.mxu0 %v2614
    %2753 = vmatprep.subr.bf16.mxu0 %v2617
    %2754 = vmatpush1.bf16.msra.mxu0 %v2616
    %2755 = vmatprep.subr.bf16.mxu0 %v2619
    %2756 = vmatpush1.bf16.msra.mxu0 %v2618
    %2757 = vmatprep.subr.bf16.mxu0 %v2621
    %2758 = vmatpush1.bf16.msra.mxu0 %v2620
    %2759 = vmatprep.subr.bf16.mxu0 %v2623
    %2760 = vmatpush1.bf16.msra.mxu0 %v2622
    %2761 = vmatprep.subr.bf16.mxu0 %v2625
    %2762 = vmatpush1.bf16.msra.mxu0 %v2624
    %2763 = vmatprep.subr.bf16.mxu0 %v2627
    %2764 = vmatpush1.bf16.msra.mxu0 %v2626
    %2765 = vmatprep.mubr.bf16.mxu0 %v2295
    %2766 = vmatmul.mubr.bf16.gmra.mrb[0].mxu0 %v2294
    %v2767 = vpop.f32.mrb[0].mxu0
    %v2768 = vadd.f32 %v2727, %v2767
    %v2769 = vpop.f32.mrb[0].mxu0
    %v2770 = vadd.f32 %v2729, %v2769
    %v2771 = vpop.f32.mrb[0].mxu0
    %v2772 = vpop.f32.mrb[0].mxu0
    %2773 = vdwg.mxu0
    %v2774 = vmax.f32 %v2768, 0.0
    %v2775 = vmax.f32 %v2770, 0.0
    %v2776 = vpack.c.bf16 %v2774, %v2774
    %v2777 = vpack.c.bf16 %v2775, %v2775
    %v2778 = vld [vmem:[%s49] sm:$0xf]
    %v2779 = vld [vmem:[%s49 + $0x4] sm:$0xf]
    %v2780 = vld [vmem:[%s49 + $0x8] sm:$0xf]
    %v2781 = vld [vmem:[%s49 + $0xc] sm:$0xf]
    %v2782 = vld [vmem:[%s49 + $0x10] sm:$0xf]
    %v2783 = vld [vmem:[%s49 + $0x14] sm:$0xf]
    %v2784 = vld [vmem:[%s49 + $0x18] sm:$0xf]
    %v2785 = vld [vmem:[%s49 + $0x1c] sm:$0xf]
    %v2786 = vld [vmem:[%s49 + $0x20] sm:$0xf]
    %v2787 = vld [vmem:[%s49 + $0x24] sm:$0xf]
    %v2788 = vld [vmem:[%s49 + $0x28] sm:$0xf]
    %v2789 = vld [vmem:[%s49 + $0x2c] sm:$0xf]
    %v2790 = vld [vmem:[%s49 + $0x30] sm:$0xf]
    %v2791 = vld [vmem:[%s49 + $0x34] sm:$0xf]
    %v2792 = vld [vmem:[%s49 + $0x38] sm:$0xf]
    %v2793 = vld [vmem:[%s49 + $0x3c] sm:$0xf]
    %v2794 = vld [vmem:[%s49 + $0x40] sm:$0xf]
    %v2795 = vld [vmem:[%s49 + $0x44] sm:$0xf]
    %v2796 = vld [vmem:[%s49 + $0x48] sm:$0xf]
    %v2797 = vld [vmem:[%s49 + $0x4c] sm:$0xf]
    %v2798 = vld [vmem:[%s49 + $0x50] sm:$0xf]
    %v2799 = vld [vmem:[%s49 + $0x54] sm:$0xf]
    %v2800 = vld [vmem:[%s49 + $0x58] sm:$0xf]
    %v2801 = vld [vmem:[%s49 + $0x5c] sm:$0xf]
    %v2802 = vld [vmem:[%s49 + $0x60] sm:$0xf]
    %v2803 = vld [vmem:[%s49 + $0x64] sm:$0xf]
    %v2804 = vld [vmem:[%s49 + $0x68] sm:$0xf]
    %v2805 = vld [vmem:[%s49 + $0x6c] sm:$0xf]
    %v2806 = vld [vmem:[%s49 + $0x70] sm:$0xf]
    %v2807 = vld [vmem:[%s49 + $0x74] sm:$0xf]
    %v2808 = vld [vmem:[%s49 + $0x78] sm:$0xf]
    %v2809 = vld [vmem:[%s49 + $0x7c] sm:$0xf]
    %v2810 = vld [vmem:[#allocation19] sm:$0x1]
    %v2812 = vlaneseq
    %v2813 = vshrl.u32 %v2812, 7
    %v2814 = vsub.s32 0, %v2813
    %v2815 = vrot.slane %v2810, %v2814
    %v2849 = vunpack.c.l.b16 %v2778
    %v2850 = vunpack.c.l.b16 %v2779
    %v2851 = vunpack.c.l.b16 %v2780
    %v2852 = vunpack.c.l.b16 %v2781
    %v2853 = vunpack.c.l.b16 %v2782
    %v2854 = vunpack.c.l.b16 %v2783
    %v2855 = vunpack.c.l.b16 %v2784
    %v2856 = vunpack.c.l.b16 %v2785
    %v2857 = vunpack.c.l.b16 %v2786
    %v2858 = vunpack.c.l.b16 %v2787
    %v2859 = vunpack.c.l.b16 %v2788
    %v2860 = vunpack.c.l.b16 %v2789
    %v2861 = vunpack.c.l.b16 %v2790
    %v2862 = vunpack.c.l.b16 %v2791
    %v2863 = vunpack.c.l.b16 %v2792
    %v2864 = vunpack.c.l.b16 %v2793
    %v2865 = vunpack.c.l.b16 %v2794
    %v2866 = vunpack.c.l.b16 %v2795
    %v2867 = vunpack.c.l.b16 %v2796
    %v2868 = vunpack.c.l.b16 %v2797
    %v2869 = vunpack.c.l.b16 %v2798
    %v2870 = vunpack.c.l.b16 %v2799
    %v2871 = vunpack.c.l.b16 %v2800
    %v2872 = vunpack.c.l.b16 %v2801
    %v2873 = vunpack.c.l.b16 %v2802
    %v2874 = vunpack.c.l.b16 %v2803
    %v2875 = vunpack.c.l.b16 %v2804
    %v2876 = vunpack.c.l.b16 %v2805
    %v2877 = vunpack.c.l.b16 %v2806
    %v2878 = vunpack.c.l.b16 %v2807
    %v2879 = vunpack.c.l.b16 %v2808
    %v2880 = vunpack.c.l.b16 %v2809
    %v2881 = vpack.c.b16 %v2850, %v2849
    %v2882 = vpack.c.b16 %v2852, %v2851
    %v2883 = vpack.c.b16 %v2854, %v2853
    %v2884 = vpack.c.b16 %v2856, %v2855
    %v2885 = vpack.c.b16 %v2858, %v2857
    %v2886 = vpack.c.b16 %v2860, %v2859
    %v2887 = vpack.c.b16 %v2862, %v2861
    %v2888 = vpack.c.b16 %v2864, %v2863
    %v2889 = vpack.c.b16 %v2866, %v2865
    %v2890 = vpack.c.b16 %v2868, %v2867
    %v2891 = vpack.c.b16 %v2870, %v2869
    %v2892 = vpack.c.b16 %v2872, %v2871
    %v2893 = vpack.c.b16 %v2874, %v2873
    %v2894 = vpack.c.b16 %v2876, %v2875
    %v2895 = vpack.c.b16 %v2878, %v2877
    %v2896 = vpack.c.b16 %v2880, %v2879
    %2913 = vmatprep.subr.bf16.mxu0 0
    %2914 = vmatpush1.bf16.msra.mxu0 %v2881
    %2915 = vmatprep.subr.bf16.mxu0 0
    %2916 = vmatpush1.bf16.msra.mxu0 %v2882
    %2917 = vmatprep.subr.bf16.mxu0 0
    %2918 = vmatpush1.bf16.msra.mxu0 %v2883
    %2919 = vmatprep.subr.bf16.mxu0 0
    %2920 = vmatpush1.bf16.msra.mxu0 %v2884
    %2921 = vmatprep.subr.bf16.mxu0 0
    %2922 = vmatpush1.bf16.msra.mxu0 %v2885
    %2923 = vmatprep.subr.bf16.mxu0 0
    %2924 = vmatpush1.bf16.msra.mxu0 %v2886
    %2925 = vmatprep.subr.bf16.mxu0 0
    %2926 = vmatpush1.bf16.msra.mxu0 %v2887
    %2927 = vmatprep.subr.bf16.mxu0 0
    %2928 = vmatpush1.bf16.msra.mxu0 %v2888
    %2929 = vmatprep.subr.bf16.mxu0 0
    %2930 = vmatpush1.bf16.msra.mxu0 %v2889
    %2931 = vmatprep.subr.bf16.mxu0 0
    %2932 = vmatpush1.bf16.msra.mxu0 %v2890
    %2933 = vmatprep.subr.bf16.mxu0 0
    %2934 = vmatpush1.bf16.msra.mxu0 %v2891
    %2935 = vmatprep.subr.bf16.mxu0 0
    %2936 = vmatpush1.bf16.msra.mxu0 %v2892
    %2937 = vmatprep.subr.bf16.mxu0 0
    %2938 = vmatpush1.bf16.msra.mxu0 %v2893
    %2939 = vmatprep.subr.bf16.mxu0 0
    %2940 = vmatpush1.bf16.msra.mxu0 %v2894
    %2941 = vmatprep.subr.bf16.mxu0 0
    %2942 = vmatpush1.bf16.msra.mxu0 %v2895
    %2943 = vmatprep.subr.bf16.mxu0 0
    %2944 = vmatpush1.bf16.msra.mxu0 %v2896
    %2945 = vmatprep.mubr.bf16.mxu0 %v2777
    %2946 = vmatmul.mubr.bf16.gmra.mrb[0].mxu0 %v2776
    %v2947 = vpop.f32.mrb[0].mxu0
    %v2948 = vadd.f32 %v2815, %v2947
    %v2949 = vpop.f32.mrb[0].mxu0
    %v2950 = vpop.f32.mrb[0].mxu0
    %v2951 = vpop.f32.mrb[0].mxu0
    %2952 = vdwg.mxu0
    %v2953 = vmax.f32 %v2948, 0.0
    %v2954 = vpack.c.bf16 %v2953, %v2953
    %v2955 = vld [vmem:[%s53] sm:$0xf]
    %v2956 = vld [vmem:[%s53 + $0x4] sm:$0xf]
    %v2957 = vld [vmem:[%s53 + $0x8] sm:$0xf]
    %v2958 = vld [vmem:[%s53 + $0xc] sm:$0xf]
    %v2959 = vld [vmem:[#allocation21] sm:$0x1]
    %v2961 = vlaneseq
    %v2962 = vshrl.u32 %v2961, 7
    %v2963 = vsub.s32 0, %v2962
    %v2964 = vrot.slane %v2959, %v2963
    %v2970 = vunpack.c.l.b16 %v2955
    %v2971 = vunpack.c.l.b16 %v2956
    %v2972 = vunpack.c.l.b16 %v2957
    %v2973 = vunpack.c.l.b16 %v2958
    %v2974 = vpack.c.b16 %v2971, %v2970
    %v2975 = vpack.c.b16 %v2973, %v2972
    %v2979 = vsel %vm387, %v2954, 0
    %2981 = vmatprep.subr.bf16.mxu0 0
    %2982 = vmatpush1.bf16.msra.mxu0 %v2974
    %2983 = vmatprep.subr.bf16.mxu0 0
    %2984 = vmatpush1.bf16.msra.mxu0 %v2975
    %2985 = vmatprep.subr.bf16.mxu0 0
    %2986 = vmatpush1.bf16.msra.mxu0 0
    %2987 = vmatprep.subr.bf16.mxu0 0
    %2988 = vmatpush1.bf16.msra.mxu0 0
    %2989 = vmatprep.subr.bf16.mxu0 0
    %2990 = vmatpush1.bf16.msra.mxu0 0
    %2991 = vmatprep.subr.bf16.mxu0 0
    %2992 = vmatpush1.bf16.msra.mxu0 0
    %2993 = vmatprep.subr.bf16.mxu0 0
    %2994 = vmatpush1.bf16.msra.mxu0 0
    %2995 = vmatprep.subr.bf16.mxu0 0
    %2996 = vmatpush1.bf16.msra.mxu0 0
    %2997 = vmatprep.subr.bf16.mxu0 0
    %2998 = vmatpush1.bf16.msra.mxu0 0
    %2999 = vmatprep.subr.bf16.mxu0 0
    %3000 = vmatpush1.bf16.msra.mxu0 0
    %3001 = vmatprep.subr.bf16.mxu0 0
    %3002 = vmatpush1.bf16.msra.mxu0 0
    %3003 = vmatprep.subr.bf16.mxu0 0
    %3004 = vmatpush1.bf16.msra.mxu0 0
    %3005 = vmatprep.subr.bf16.mxu0 0
    %3006 = vmatpush1.bf16.msra.mxu0 0
    %3007 = vmatprep.subr.bf16.mxu0 0
    %3008 = vmatpush1.bf16.msra.mxu0 0
    %3009 = vmatprep.subr.bf16.mxu0 0
    %3010 = vmatpush1.bf16.msra.mxu0 0
    %3011 = vmatprep.subr.bf16.mxu0 0
    %3012 = vmatpush1.bf16.msra.mxu0 0
    %3013 = vmatprep.mubr.bf16.mxu0 0
    %3014 = vmatmul.mubr.bf16.gmra.mrb[0].mxu0 %v2979
    %v3015 = vpop.f32.mrb[0].mxu0
    %v3016 = vadd.f32 %v2964, %v3015
    %v3017 = vpop.f32.mrb[0].mxu0
    %v3018 = vpop.f32.mrb[0].mxu0
    %v3019 = vpop.f32.mrb[0].mxu0
    %3020 = vdwg.mxu0
    %v3021 = vsub.f32 0.0, %v3016
    %v3022 = vmul.f32 %v3021, 1.442695
    %v3023 = vpow.pop %v3022
    %v3024 = vadd.f32 %v3023, 1.0
    %v3025 = vrcp.pop %v3024
    %v3026 = vld [vmem:[%s57] sm:$0xf]
    %v3027 = vld [vmem:[%s57 + $0x4] sm:$0xf]
    %v3028 = vld [vmem:[%s57 + $0x8] sm:$0xf]
    %v3029 = vld [vmem:[%s57 + $0xc] sm:$0xf]
    %v3030 = vld [vmem:[%s57 + $0x10] sm:$0xf]
    %v3031 = vld [vmem:[%s57 + $0x14] sm:$0xf]
    %v3032 = vld [vmem:[%s57 + $0x18] sm:$0xf]
    %v3033 = vld [vmem:[%s57 + $0x1c] sm:$0xf]
    %v3038 = vunpack.c.l.b16 %v3030
    %v3039 = vunpack.c.l.b16 %v3031
    %v3040 = vunpack.c.l.b16 %v3032
    %v3041 = vunpack.c.l.b16 %v3033
    %v3042 = vpack.c.b16 %v3039, %v3038
    %v3043 = vpack.c.b16 %v3041, %v3040
    %3046 = vmatprep.subr.bf16.mxu0 0
    %3047 = vmatpush1.bf16.msra.mxu0 %v3042
    %3048 = vmatprep.subr.bf16.mxu0 0
    %3049 = vmatpush1.bf16.msra.mxu0 %v3043
    %3050 = vmatprep.subr.bf16.mxu0 0
    %3051 = vmatpush1.bf16.msra.mxu0 0
    %3052 = vmatprep.subr.bf16.mxu0 0
    %3053 = vmatpush1.bf16.msra.mxu0 0
    %3054 = vmatprep.subr.bf16.mxu0 0
    %3055 = vmatpush1.bf16.msra.mxu0 0
    %3056 = vmatprep.subr.bf16.mxu0 0
    %3057 = vmatpush1.bf16.msra.mxu0 0
    %3058 = vmatprep.subr.bf16.mxu0 0
    %3059 = vmatpush1.bf16.msra.mxu0 0
    %3060 = vmatprep.subr.bf16.mxu0 0
    %3061 = vmatpush1.bf16.msra.mxu0 0
    %3062 = vmatprep.subr.bf16.mxu0 0
    %3063 = vmatpush1.bf16.msra.mxu0 0
    %3064 = vmatprep.subr.bf16.mxu0 0
    %3065 = vmatpush1.bf16.msra.mxu0 0
    %3066 = vmatprep.subr.bf16.mxu0 0
    %3067 = vmatpush1.bf16.msra.mxu0 0
    %3068 = vmatprep.subr.bf16.mxu0 0
    %3069 = vmatpush1.bf16.msra.mxu0 0
    %3070 = vmatprep.subr.bf16.mxu0 0
    %3071 = vmatpush1.bf16.msra.mxu0 0
    %3072 = vmatprep.subr.bf16.mxu0 0
    %3073 = vmatpush1.bf16.msra.mxu0 0
    %3074 = vmatprep.subr.bf16.mxu0 0
    %3075 = vmatpush1.bf16.msra.mxu0 0
    %3076 = vmatprep.subr.bf16.mxu0 0
    %3077 = vmatpush1.bf16.msra.mxu0 0
    %3078 = vmatprep.mubr.bf16.mxu0 0
    %3079 = vmatmul.mubr.bf16.gmra.mrb[0].mxu0 %v2083
    %v3080 = vpop.f32.mrb[0].mxu0
    %v3081 = vadd.f32 0.0, %v3080
    %v3082 = vpop.f32.mrb[0].mxu0
    %v3083 = vpop.f32.mrb[0].mxu0
    %v3084 = vpop.f32.mrb[0].mxu0
    %3085 = vdwg.mxu0
    %v3090 = vunpack.c.l.b16 %v3026
    %v3091 = vunpack.c.l.b16 %v3027
    %v3092 = vunpack.c.l.b16 %v3028
    %v3093 = vunpack.c.l.b16 %v3029
    %v3094 = vpack.c.b16 %v3091, %v3090
    %v3095 = vpack.c.b16 %v3093, %v3092
    %3098 = vmatprep.subr.bf16.mxu0 0
    %3099 = vmatpush1.bf16.msra.mxu0 %v3094
    %3100 = vmatprep.subr.bf16.mxu0 0
    %3101 = vmatpush1.bf16.msra.mxu0 %v3095
    %3102 = vmatprep.subr.bf16.mxu0 0
    %3103 = vmatpush1.bf16.msra.mxu0 0
    %3104 = vmatprep.subr.bf16.mxu0 0
    %3105 = vmatpush1.bf16.msra.mxu0 0
    %3106 = vmatprep.subr.bf16.mxu0 0
    %3107 = vmatpush1.bf16.msra.mxu0 0
    %3108 = vmatprep.subr.bf16.mxu0 0
    %3109 = vmatpush1.bf16.msra.mxu0 0
    %3110 = vmatprep.subr.bf16.mxu0 0
    %3111 = vmatpush1.bf16.msra.mxu0 0
    %3112 = vmatprep.subr.bf16.mxu0 0
    %3113 = vmatpush1.bf16.msra.mxu0 0
    %3114 = vmatprep.subr.bf16.mxu0 0
    %3115 = vmatpush1.bf16.msra.mxu0 0
    %3116 = vmatprep.subr.bf16.mxu0 0
    %3117 = vmatpush1.bf16.msra.mxu0 0
    %3118 = vmatprep.subr.bf16.mxu0 0
    %3119 = vmatpush1.bf16.msra.mxu0 0
    %3120 = vmatprep.subr.bf16.mxu0 0
    %3121 = vmatpush1.bf16.msra.mxu0 0
    %3122 = vmatprep.subr.bf16.mxu0 0
    %3123 = vmatpush1.bf16.msra.mxu0 0
    %3124 = vmatprep.subr.bf16.mxu0 0
    %3125 = vmatpush1.bf16.msra.mxu0 0
    %3126 = vmatprep.subr.bf16.mxu0 0
    %3127 = vmatpush1.bf16.msra.mxu0 0
    %3128 = vmatprep.subr.bf16.mxu0 0
    %3129 = vmatpush1.bf16.msra.mxu0 0
    %3130 = vmatprep.mubr.bf16.mxu0 0
    %3131 = vmatmul.mubr.bf16.gmra.mrb[0].mxu0 %v1164
    %v3132 = vpop.f32.mrb[0].mxu0
    %v3133 = vadd.f32 %v3081, %v3132
    %v3134 = vpop.f32.mrb[0].mxu0
    %v3135 = vpop.f32.mrb[0].mxu0
    %v3136 = vpop.f32.mrb[0].mxu0
    %3137 = vdwg.mxu0
    %v3138 = vld [vmem:[%s57 + $0x20] sm:$0xf]
    %v3139 = vld [vmem:[%s57 + $0x24] sm:$0xf]
    %v3140 = vld [vmem:[%s57 + $0x28] sm:$0xf]
    %v3141 = vld [vmem:[%s57 + $0x2c] sm:$0xf]
    %v3146 = vunpack.c.l.b16 %v3138
    %v3147 = vunpack.c.l.b16 %v3139
    %v3148 = vunpack.c.l.b16 %v3140
    %v3149 = vunpack.c.l.b16 %v3141
    %v3150 = vpack.c.b16 %v3147, %v3146
    %v3151 = vpack.c.b16 %v3149, %v3148
    %3154 = vmatprep.subr.bf16.mxu0 0
    %3155 = vmatpush1.bf16.msra.mxu0 %v3150
    %3156 = vmatprep.subr.bf16.mxu0 0
    %3157 = vmatpush1.bf16.msra.mxu0 %v3151
    %3158 = vmatprep.subr.bf16.mxu0 0
    %3159 = vmatpush1.bf16.msra.mxu0 0
    %3160 = vmatprep.subr.bf16.mxu0 0
    %3161 = vmatpush1.bf16.msra.mxu0 0
    %3162 = vmatprep.subr.bf16.mxu0 0
    %3163 = vmatpush1.bf16.msra.mxu0 0
    %3164 = vmatprep.subr.bf16.mxu0 0
    %3165 = vmatpush1.bf16.msra.mxu0 0
    %3166 = vmatprep.subr.bf16.mxu0 0
    %3167 = vmatpush1.bf16.msra.mxu0 0
    %3168 = vmatprep.subr.bf16.mxu0 0
    %3169 = vmatpush1.bf16.msra.mxu0 0
    %3170 = vmatprep.subr.bf16.mxu0 0
    %3171 = vmatpush1.bf16.msra.mxu0 0
    %3172 = vmatprep.subr.bf16.mxu0 0
    %3173 = vmatpush1.bf16.msra.mxu0 0
    %3174 = vmatprep.subr.bf16.mxu0 0
    %3175 = vmatpush1.bf16.msra.mxu0 0
    %3176 = vmatprep.subr.bf16.mxu0 0
    %3177 = vmatpush1.bf16.msra.mxu0 0
    %3178 = vmatprep.subr.bf16.mxu0 0
    %3179 = vmatpush1.bf16.msra.mxu0 0
    %3180 = vmatprep.subr.bf16.mxu0 0
    %3181 = vmatpush1.bf16.msra.mxu0 0
    %3182 = vmatprep.subr.bf16.mxu0 0
    %3183 = vmatpush1.bf16.msra.mxu0 0
    %3184 = vmatprep.subr.bf16.mxu0 0
    %3185 = vmatpush1.bf16.msra.mxu0 0
    %3186 = vmatprep.mubr.bf16.mxu0 0
    %3187 = vmatmul.mubr.bf16.gmra.mrb[0].mxu0 %v2979
    %v3188 = vpop.f32.mrb[0].mxu0
    %v3189 = vadd.f32 0.0, %v3188
    %v3190 = vpop.f32.mrb[0].mxu0
    %v3191 = vpop.f32.mrb[0].mxu0
    %v3192 = vpop.f32.mrb[0].mxu0
    %3193 = vdwg.mxu0
    %v3194 = vadd.f32 %v3133, %v3189
    %v3195 = vld [vmem:[#allocation22] sm:$0x1]
    %v3197 = vlaneseq
    %v3198 = vshrl.u32 %v3197, 7
    %v3199 = vsub.s32 0, %v3198
    %v3200 = vrot.slane %v3195, %v3199
    %v3202 = vadd.f32 %v3194, %v3200
    %v3203 = vmax.f32 %v3202, 0.0
    %v3204 = vpack.c.bf16 %v3203, %v3203
    %v3205 = vld [vmem:[%s61] sm:$0xf]
    %v3206 = vld [vmem:[%s61 + $0x4] sm:$0xf]
    %v3207 = vld [vmem:[%s61 + $0x8] sm:$0xf]
    %v3208 = vld [vmem:[%s61 + $0xc] sm:$0xf]
    %v3209 = vld [vmem:[%s61 + $0x10] sm:$0xf]
    %v3210 = vld [vmem:[%s61 + $0x14] sm:$0xf]
    %v3211 = vld [vmem:[%s61 + $0x18] sm:$0xf]
    %v3212 = vld [vmem:[%s61 + $0x1c] sm:$0xf]
    %v3213 = vld [vmem:[#allocation24] sm:$0x1]
    %v3215 = vlaneseq
    %v3216 = vshrl.u32 %v3215, 7
    %v3217 = vsub.s32 0, %v3216
    %v3218 = vrot.slane %v3213, %v3217
    %v3228 = vunpack.c.l.b16 %v3205
    %v3229 = vunpack.c.l.b16 %v3206
    %v3230 = vunpack.c.l.b16 %v3207
    %v3231 = vunpack.c.l.b16 %v3208
    %v3232 = vunpack.c.l.b16 %v3209
    %v3233 = vunpack.c.l.b16 %v3210
    %v3234 = vunpack.c.l.b16 %v3211
    %v3235 = vunpack.c.l.b16 %v3212
    %v3236 = vpack.c.b16 %v3229, %v3228
    %v3237 = vpack.c.b16 %v3231, %v3230
    %v3238 = vpack.c.b16 %v3233, %v3232
    %v3239 = vpack.c.b16 %v3235, %v3234
    %vm3244 = vcmask 523264
    %v3246 = vsel %vm3244, %v3204, 0
    %3248 = vmatprep.subr.bf16.mxu0 0
    %3249 = vmatpush1.bf16.msra.mxu0 %v3236
    %3250 = vmatprep.subr.bf16.mxu0 0
    %3251 = vmatpush1.bf16.msra.mxu0 %v3237
    %3252 = vmatprep.subr.bf16.mxu0 0
    %3253 = vmatpush1.bf16.msra.mxu0 %v3238
    %3254 = vmatprep.subr.bf16.mxu0 0
    %3255 = vmatpush1.bf16.msra.mxu0 %v3239
    %3256 = vmatprep.subr.bf16.mxu0 0
    %3257 = vmatpush1.bf16.msra.mxu0 0
    %3258 = vmatprep.subr.bf16.mxu0 0
    %3259 = vmatpush1.bf16.msra.mxu0 0
    %3260 = vmatprep.subr.bf16.mxu0 0
    %3261 = vmatpush1.bf16.msra.mxu0 0
    %3262 = vmatprep.subr.bf16.mxu0 0
    %3263 = vmatpush1.bf16.msra.mxu0 0
    %3264 = vmatprep.subr.bf16.mxu0 0
    %3265 = vmatpush1.bf16.msra.mxu0 0
    %3266 = vmatprep.subr.bf16.mxu0 0
    %3267 = vmatpush1.bf16.msra.mxu0 0
    %3268 = vmatprep.subr.bf16.mxu0 0
    %3269 = vmatpush1.bf16.msra.mxu0 0
    %3270 = vmatprep.subr.bf16.mxu0 0
    %3271 = vmatpush1.bf16.msra.mxu0 0
    %3272 = vmatprep.subr.bf16.mxu0 0
    %3273 = vmatpush1.bf16.msra.mxu0 0
    %3274 = vmatprep.subr.bf16.mxu0 0
    %3275 = vmatpush1.bf16.msra.mxu0 0
    %3276 = vmatprep.subr.bf16.mxu0 0
    %3277 = vmatpush1.bf16.msra.mxu0 0
    %3278 = vmatprep.subr.bf16.mxu0 0
    %3279 = vmatpush1.bf16.msra.mxu0 0
    %3280 = vmatprep.mubr.bf16.mxu0 0
    %3281 = vmatmul.mubr.bf16.gmra.mrb[0].mxu0 %v3246
    %v3282 = vpop.f32.mrb[0].mxu0
    %v3283 = vadd.f32 %v3218, %v3282
    %v3284 = vpop.f32.mrb[0].mxu0
    %v3285 = vpop.f32.mrb[0].mxu0
    %v3286 = vpop.f32.mrb[0].mxu0
    %3287 = vdwg.mxu0
    %v3288 = vsub.f32 0.0, %v3283
    %v3289 = vmul.f32 %v3288, 1.442695
    %v3290 = vpow.pop %v3289
    %v3291 = vadd.f32 %v3290, 1.0
    %v3292 = vrcp.pop %v3291
    %v3293 = vadd.f32 %v1210, %v2129
    %v3294 = vadd.f32 %v3293, %v3025
    %v3295 = vmul.f32 %v3294, 0.33333334
    %v3296 = vsub.f32 %v1210, %v3295
    %v3297 = vmul.f32 %v3296, %v3296
    %vm3298 = vcmask 31744
    %v3299 = vsel %vm3298, %v3297, -inf
    %3300 = vmax.xlane.f32.xlu0 %v3299
    %v3301 = vpop.xlane.xlu0 %3300
    %v3302 = vsub.f32 %v2129, %v3295
    %v3303 = vmul.f32 %v3302, %v3302
    %v3304 = vsel %vm3298, %v3303, -inf
    %3305 = vmax.xlane.f32.xlu0 %v3304
    %v3306 = vpop.xlane.xlu0 %3305
    %v3307 = vsub.f32 %v3025, %v3295
    %v3308 = vmul.f32 %v3307, %v3307
    %v3309 = vsel %vm3298, %v3308, -inf
    %3310 = vmax.xlane.f32.xlu0 %v3309
    %v3311 = vpop.xlane.xlu0 %3310
    %3312 = vst [vmem:[%s65] sm:$0xff] 0.0
    %3313 = vst.msk [vmem:[%s65] sm:$0xff] %vm3298, %v1210
    %3315 = vrot.lane.b32.xlu0 %v2129, 4
    %v3316 = vpop.permute.xlu0 %3315
    %vm3318 = vcmask 64544
    %3319 = vst.msk [vmem:[%s65] sm:$0xff] %vm3318, %v3316
    %3321 = vrot.lane.b32.xlu0 %v3025, 8
    %v3322 = vpop.permute.xlu0 %3321
    %vm3324 = vcmask 97344
    %3325 = vst.msk [vmem:[%s65] sm:$0xff] %vm3324, %v3322
    %3327 = vrot.lane.b32.xlu0 %v3292, 12
    %v3328 = vpop.permute.xlu0 %3327
    %vm3330 = vcmask 130144
    %3331 = vst.msk [vmem:[%s65] sm:$0xff] %vm3330, %v3328
    %vm3332 = vcmask 138368
    %3333 = vst.msk [vmem:[%s65] sm:$0xff] %vm3332, %v3301
    %vm3334 = vcmask 146568
    %3335 = vst.msk [vmem:[%s65] sm:$0xff] %vm3334, %v3306
    %vm3336 = vcmask 154768
    %3337 = vst.msk [vmem:[%s65] sm:$0xff] %vm3336, %v3311
    %v3338 = vsel %vm3298, %v1210, -inf
    %3339 = vmax.xlane.f32.xlu0 %v3338
    %v3340 = vpop.xlane.xlu0 %3339
    %v3341 = vsub.f32 %v1210, %v3340
    %v3342 = vmul.f32 %v3341, 1.442695
    %v3343 = vpow.pop %v3342
    %v3344 = vsel %vm3298, %v3343, 0.0
    %3345 = vadd.xlane.f32.xlu0 %v3344
    %v3346 = vpop.xlane.xlu0 %3345
    %v3347 = vlog2.pop %v3346
    %v3348 = vmul.f32 %v3347, 0.6931472
    %v3349 = vadd.f32 %v3340, %v3348
    %v3350 = vmul.f32 %v1210, %v315
    %v3351 = vsel %vm3298, %v3350, 0.0
    %3352 = vadd.xlane.f32.xlu0 %v3351
    %v3353 = vpop.xlane.xlu0 %3352
    %v3354 = vsub.f32 %v3349, %v3353
    %vm3355 = vcmask 7168
    %v3356 = vsel %vm3355, %v3354, 0.0
    %3357 = vadd.xlane.f32.xlu0 %v3356
    %v3358 = vpop.xlane.xlu0 %3357
    %v3359 = vrot.slane %v3358, 4
    %v3360 = vadd.f32 %v3358, %v3359
    %v3361 = vrot.slane %v3360, 2
    %v3362 = vadd.f32 %v3360, %v3361
    %v3363 = vrot.slane %v3362, 1
    %v3364 = vadd.f32 %v3362, %v3363
    %s3365 = vtos %v3364
    %v3366 = vrcp.pop 8.0
    %s3367 = vtos %v3366
    %s3368 = smul.f32 %s3365, %s3367
    %v3369 = vstv %s3368
    %3370 = vst [vmem:[%s67] sm:$0x1] %v3369
    %v3371 = vsel %vm3298, %v2129, -inf
    %3372 = vmax.xlane.f32.xlu0 %v3371
    %v3373 = vpop.xlane.xlu0 %3372
    %v3374 = vsub.f32 %v2129, %v3373
    %v3375 = vmul.f32 %v3374, 1.442695
    %v3376 = vpow.pop %v3375
    %v3377 = vsel %vm3298, %v3376, 0.0
    %3378 = vadd.xlane.f32.xlu0 %v3377
    %v3379 = vpop.xlane.xlu0 %3378
    %v3380 = vlog2.pop %v3379
    %v3381 = vmul.f32 %v3380, 0.6931472
    %v3382 = vadd.f32 %v3373, %v3381
    %v3383 = vmul.f32 %v2129, %v315
    %v3384 = vsel %vm3298, %v3383, 0.0
    %3385 = vadd.xlane.f32.xlu0 %v3384
    %v3386 = vpop.xlane.xlu0 %3385
    %v3387 = vsub.f32 %v3382, %v3386
    %v3388 = vsel %vm3355, %v3387, 0.0
    %3389 = vadd.xlane.f32.xlu0 %v3388
    %v3390 = vpop.xlane.xlu0 %3389
    %v3391 = vrot.slane %v3390, 4
    %v3392 = vadd.f32 %v3390, %v3391
    %v3393 = vrot.slane %v3392, 2
    %v3394 = vadd.f32 %v3392, %v3393
    %v3395 = vrot.slane %v3394, 1
    %v3396 = vadd.f32 %v3394, %v3395
    %s3397 = vtos %v3396
    %v3398 = vrcp.pop 8.0
    %s3399 = vtos %v3398
    %s3400 = smul.f32 %s3397, %s3399
    %v3401 = vstv %s3400
    %3402 = vst [vmem:[%s67 + $0x1] sm:$0x1] %v3401
    %v3403 = vsel %vm3298, %v3025, -inf
    %3404 = vmax.xlane.f32.xlu0 %v3403
    %v3405 = vpop.xlane.xlu0 %3404
    %v3406 = vsub.f32 %v3025, %v3405
    %v3407 = vmul.f32 %v3406, 1.442695
    %v3408 = vpow.pop %v3407
    %v3409 = vsel %vm3298, %v3408, 0.0
    %3410 = vadd.xlane.f32.xlu0 %v3409
    %v3411 = vpop.xlane.xlu0 %3410
    %v3412 = vlog2.pop %v3411
    %v3413 = vmul.f32 %v3412, 0.6931472
    %v3414 = vadd.f32 %v3405, %v3413
    %v3415 = vmul.f32 %v3025, %v315
    %v3416 = vsel %vm3298, %v3415, 0.0
    %3417 = vadd.xlane.f32.xlu0 %v3416
    %v3418 = vpop.xlane.xlu0 %3417
    %v3419 = vsub.f32 %v3414, %v3418
    %v3420 = vsel %vm3355, %v3419, 0.0
    %3421 = vadd.xlane.f32.xlu0 %v3420
    %v3422 = vpop.xlane.xlu0 %3421
    %v3423 = vrot.slane %v3422, 4
    %v3424 = vadd.f32 %v3422, %v3423
    %v3425 = vrot.slane %v3424, 2
    %v3426 = vadd.f32 %v3424, %v3425
    %v3427 = vrot.slane %v3426, 1
    %v3428 = vadd.f32 %v3426, %v3427
    %s3429 = vtos %v3428
    %v3430 = vrcp.pop 8.0
    %s3431 = vtos %v3430
    %s3432 = smul.f32 %s3429, %s3431
    %v3433 = vstv %s3432
    %3434 = vst [vmem:[%s67 + $0x2] sm:$0x1] %v3433
    %v3435 = vsel %vm3298, %v3292, -inf
    %3436 = vmax.xlane.f32.xlu0 %v3435
    %v3437 = vpop.xlane.xlu0 %3436
    %v3438 = vsub.f32 %v3292, %v3437
    %v3439 = vmul.f32 %v3438, 1.442695
    %v3440 = vpow.pop %v3439
    %v3441 = vsel %vm3298, %v3440, 0.0
    %3442 = vadd.xlane.f32.xlu0 %v3441
    %v3443 = vpop.xlane.xlu0 %3442
    %v3444 = vlog2.pop %v3443
    %v3445 = vmul.f32 %v3444, 0.6931472
    %v3446 = vadd.f32 %v3437, %v3445
    %v3447 = vmul.f32 %v3292, %v315
    %v3448 = vsel %vm3298, %v3447, 0.0
    %3449 = vadd.xlane.f32.xlu0 %v3448
    %v3450 = vpop.xlane.xlu0 %3449
    %v3451 = vsub.f32 %v3446, %v3450
    %v3452 = vsel %vm3355, %v3451, 0.0
    %3453 = vadd.xlane.f32.xlu0 %v3452
    %v3454 = vpop.xlane.xlu0 %3453
    %v3455 = vrot.slane %v3454, 4
    %v3456 = vadd.f32 %v3454, %v3455
    %v3457 = vrot.slane %v3456, 2
    %v3458 = vadd.f32 %v3456, %v3457
    %v3459 = vrot.slane %v3458, 1
    %v3460 = vadd.f32 %v3458, %v3459
    %s3461 = vtos %v3460
    %v3462 = vrcp.pop 8.0
    %s3463 = vtos %v3462
    %s3464 = smul.f32 %s3461, %s3463
    %v3465 = vstv %s3464
    %3466 = vst [vmem:[%s67 + $0x3] sm:$0x1] %v3465
    // Predicated region
    $region190: #{domfn_forward.1} parent=1 // pred_check
      _
    $region191: #{domfn_forward.1} parent=1 // pred_check_branch
      %3468 = sbr.rel (0) target = $region193
    $region192: #{domfn_forward.1} parent=1 // pred_region
      _
    $region193: #{domfn_forward.1} parent=1 // pred_fallthru
      _
    // Predicated region
    $region194: #{domfn_forward.1} parent=1 // pred_check
      _
    $region195: #{domfn_forward.1} parent=1 // pred_check_branch
      %3470 = sbr.rel (0) target = $region197
    $region196: #{domfn_forward.1} parent=1 // pred_region
      _
    $region197: #{domfn_forward.1} parent=1 // pred_fallthru
      _
    // Predicated region
    $region198: #{domfn_forward.1} parent=1 // pred_check
      _
    $region199: #{domfn_forward.1} parent=1 // pred_check_branch
      %3472 = sbr.rel (0) target = $region201
    $region200: #{domfn_forward.1} parent=1 // pred_region
      _
    $region201: #{domfn_forward.1} parent=1 // pred_fallthru
      _
    // Predicated region
    $region202: #{domfn_forward.1} parent=1 // pred_check
      _
    $region203: #{domfn_forward.1} parent=1 // pred_check_branch
      %3474 = sbr.rel (0) target = $region205
    $region204: #{domfn_forward.1} parent=1 // pred_region
      _
    $region205: #{domfn_forward.1} parent=1 // pred_fallthru
      _
    %3475 = vsyncpa [#allocation3], 1
    %3476 = vsyncpa [#allocation5], 1
    %3477 = vsyncpa [#allocation8], 1
    %3478 = vsyncpa [#allocation11], 1
    %3479 = vsyncpa [#allocation14], 1
    %3480 = vsyncpa [#allocation17], 1
    %3481 = vsyncpa [#allocation20], 1
    %3482 = vsyncpa [#allocation23], 1

</llo_original>
